<compile_context>
chip_gen: v7x
topology: tpu7x:2x2x1
jax: 0.10.0
libtpu: 0.0.40
codegen_flags: <defaults>
</compile_context>

<pallas_src>
import functools
import math

import numpy as np

import jax
import jax.numpy as jnp
from jax import lax
from jax.experimental import pallas as pl
from jax.experimental.pallas import tpu as pltpu


# ----------------------------------------------------------------------------
# Fused forward kernel
# ----------------------------------------------------------------------------
def _seq2seq_fused_kernel(x2_ref, d_ref, wih_enc_ref, b_enc_ref, wih_dec_ref,
                          b_dec_ref, whh_enc_ref, fcb_ref,
                          whh_dec_hbm, att_hbm, fcw_hbm,
                          out_ref,
                          enc_scr, dec_scr, whh_dec_buf, att_buf, fcw_buf,
                          dma_sems, *, H, S, T, B):
    G = 2 * H           # per-gate width; also the decoder hidden size (== 128)
    f32 = jnp.float32

    # --- kick off background DMAs for weights only needed after the encoder ---
    cp_whh_dec = pltpu.make_async_copy(whh_dec_hbm, whh_dec_buf, dma_sems.at[0])
    cp_att = pltpu.make_async_copy(att_hbm, att_buf, dma_sems.at[1])
    cp_fcw = pltpu.make_async_copy(fcw_hbm, fcw_buf, dma_sems.at[2])
    cp_whh_dec.start()
    cp_att.start()
    cp_fcw.start()

    def lstm_cell(gates, c):
        # gates: [B, 4G], gate order (i, f, o, g); 128-lane aligned slices.
        sig = jax.nn.sigmoid(gates[:, 0:3 * G])     # one EUP dispatch for i,f,o
        i = sig[:, 0:G]
        f = sig[:, G:2 * G]
        o = sig[:, 2 * G:3 * G]
        g = jnp.tanh(gates[:, 3 * G:4 * G])
        c_new = f * c + i * g
        h_new = o * jnp.tanh(c_new)
        return h_new, c_new

    # --- input projections hoisted out of the recurrences (in-kernel) ----------
    # x2[t*B+b] = [x[b,t] | x[b,S-1-t]]  -> interleaved fwd/bwd encoder gates.
    xg_enc = (jnp.dot(x2_ref[...], wih_enc_ref[...],
                      preferred_element_type=f32) + b_enc_ref[...])   # [S*B, 4G]
    xg_dec = (jnp.dot(d_ref[...], wih_dec_ref[...],
                      preferred_element_type=f32) + b_dec_ref[...])   # [T*B, 4G]

    # --- fused bidirectional encoder (fwd + time-reversed bwd advance together) -
    whh_enc = whh_enc_ref[...]                      # [2H, 8H], loaded once
    h = jnp.zeros((B, G), f32)
    c = jnp.zeros((B, G), f32)
    for t in range(S):                              # static unroll (S small)
        gates = xg_enc[t * B:(t + 1) * B, :] + jnp.dot(
            h, whh_enc, preferred_element_type=f32)
        h, c = lstm_cell(gates, c)
        # out_enc[b, s] = [h_fwd(s) | h_bwd(s)]; bwd half at step t is h_bwd(S-1-t)
        enc_scr[:, t, 0:H] = h[:, 0:H]
        enc_scr[:, S - 1 - t, H:2 * H] = h[:, H:2 * H]

    # --- decoder (hidden = 2H); initial state = concat(final fwd, final bwd) ----
    cp_whh_dec.wait()
    whh_dec = whh_dec_buf[...]                      # [2H, 8H], loaded once
    for t in range(T):
        gates = xg_dec[t * B:(t + 1) * B, :] + jnp.dot(
            h, whh_dec, preferred_element_type=f32)
        h, c = lstm_cell(gates, c)
        dec_scr[:, t, :] = h

    # --- attention + concat + final FC, batched over B and B*T ------------------
    cp_att.wait()
    cp_fcw.wait()
    dh3 = dec_scr[...]                              # [B, T, 2H]
    enc3 = enc_scr[...]                             # [B, S, 2H]
    dh = dh3.reshape(B * T, G)                      # [B*T, 2H]
    proj = jnp.dot(dh, att_buf[...],
                   preferred_element_type=f32).reshape(B, T, G)
    scores = jnp.einsum("btk,bsk->bts", proj, enc3,
                        preferred_element_type=f32)                 # [B, T, S]
    m = jnp.max(scores, axis=-1, keepdims=True)
    p = jnp.exp(scores - m)
    w = p / jnp.sum(p, axis=-1, keepdims=True)      # exact divide (non-critical)
    ctx = jnp.einsum("bts,bsk->btk", w, enc3,
                     preferred_element_type=f32)                    # [B, T, 2H]
    cat = jnp.concatenate([dh3, ctx], axis=-1).reshape(B * T, 2 * G)
    # single lane-dense [B*T, Vp] store (Vp = 128-padded vocab)
    out_ref[...] = (jnp.dot(cat, fcw_buf[...], preferred_element_type=f32)
                    + fcb_ref[...])


# ----------------------------------------------------------------------------
# Parameter init (natural PyTorch-like layout) + one-time packing for the kernel
# ----------------------------------------------------------------------------
def init_params(key, vocab_size, EMB=8, HID=64):
    V, H = vocab_size, HID
    keys = jax.random.split(key, 12)

    def uni(k, shape, scale):
        return jax.random.uniform(k, shape, jnp.float32, -scale, scale)

    s_enc = 1.0 / math.sqrt(H)
    s_dec = 1.0 / math.sqrt(2 * H)
    s_fc = 1.0 / math.sqrt(4 * H)
    return {
        "emb": jax.random.normal(keys[0], (V + 2, EMB), jnp.float32),
        # encoder forward direction (bias = b_ih + b_hh pre-summed); gates i,f,g,o
        "enc_f_wih": uni(keys[1], (EMB, 4 * H), s_enc),
        "enc_f_whh": uni(keys[2], (H, 4 * H), s_enc),
        "enc_f_b": uni(keys[3], (1, 4 * H), s_enc),
        # encoder backward direction
        "enc_b_wih": uni(keys[4], (EMB, 4 * H), s_enc),
        "enc_b_whh": uni(keys[5], (H, 4 * H), s_enc),
        "enc_b_b": uni(keys[6], (1, 4 * H), s_enc),
        # decoder (hidden = 2H)
        "dec_wih": uni(keys[7], (EMB, 8 * H), s_dec),
        "dec_whh": uni(keys[8], (2 * H, 8 * H), s_dec),
        "dec_b": uni(keys[9], (1, 8 * H), s_dec),
        # attention + output projection (fc weight stored transposed)
        "att": uni(keys[10], (2 * H, 2 * H), s_dec),
        "fc_w_t": uni(keys[11], (4 * H, vocab_size), s_fc),
        "fc_b": jnp.zeros((1, vocab_size), jnp.float32),
    }


def pack_params(p):
    """One-time rearrangement into the kernel layout (done at init, not per call).

    Gate order becomes (i, f, o, g); encoder gates are interleaved per gate as
    [fwd H | bwd H] (so every slice is 128-lane aligned and one matmul drives
    both directions); encoder W_hh is block-diagonal; fc weight/bias are padded
    to a 128-lane-dense vocab.
    """
    H = p["enc_f_whh"].shape[0]
    G = 2 * H
    perm = jnp.array([0, 1, 3, 2])     # torch (i,f,g,o) -> kernel (i,f,o,g)

    def expand_gates(w4h, half):       # [..., 4H] -> [..., 8H], one dir per half
        lead = w4h.shape[:-1]
        g = jnp.take(w4h.reshape(lead + (4, H)), perm, axis=-2)
        z = jnp.zeros_like(g)
        both = jnp.stack((g, z) if half == 0 else (z, g), axis=-2)  # [...,4,2,H]
        return both.reshape(lead + (8 * H,))

    def reorder(w8h):                  # decoder: reorder 2H-wide gate blocks
        lead = w8h.shape[:-1]
        g = jnp.take(w8h.reshape(lead + (4, G)), perm, axis=-2)
        return g.reshape(lead + (4 * G,))

    fcw = p["fc_w_t"]
    V = fcw.shape[1]
    Vp = max(128, ((V + 127) // 128) * 128)
    fcw_p = jnp.zeros((fcw.shape[0], Vp), jnp.float32).at[:, :V].set(fcw)
    fcb_p = jnp.zeros((1, Vp), jnp.float32).at[:, :V].set(p["fc_b"])

    return {
        "emb": p["emb"],
        "wih_enc2": jnp.concatenate([expand_gates(p["enc_f_wih"], 0),
                                     expand_gates(p["enc_b_wih"], 1)], axis=0),
        "b_enc": expand_gates(p["enc_f_b"], 0) + expand_gates(p["enc_b_b"], 1),
        "whh_enc": jnp.concatenate([expand_gates(p["enc_f_whh"], 0),
                                    expand_gates(p["enc_b_whh"], 1)], axis=0),
        "wih_dec": reorder(p["dec_wih"]),
        "whh_dec": reorder(p["dec_whh"]),
        "b_dec": reorder(p["dec_b"]),
        "att": p["att"],
        "fc_w": fcw_p,
        "fc_b": fcb_p,
    }


# ----------------------------------------------------------------------------
# Host wrapper
# ----------------------------------------------------------------------------
@functools.partial(jax.jit, static_argnames=("vocab_size",))
def seq2seq_forward(packed, inp, dec_inp, *, vocab_size):
    """Equivalent of Seq2seq_Model.forward(inp, dec_inp=dec_inp) (eval mode)."""
    emb = packed["emb"]
    E = emb.shape[1]
    G = packed["att"].shape[0]      # 2H
    H = G // 2
    B, S = inp.shape
    T = dec_inp.shape[1]
    Vp = packed["fc_w"].shape[1]

    # Minimal per-call prep: gathers + time-major layout + fold the backward
    # direction's time reversal into a feature concat.
    x = emb[inp]                                             # [B, S, E]
    d = emb[dec_inp]                                         # [B, T, E]
    x_tm = jnp.transpose(x, (1, 0, 2))                       # [S, B, E]
    x2 = jnp.concatenate([x_tm, x_tm[::-1]], axis=-1).reshape(S * B, 2 * E)
    d2 = jnp.transpose(d, (1, 0, 2)).reshape(T * B, E)       # [T*B, E]

    vmem = pltpu.MemorySpace.VMEM
    kernel = functools.partial(_seq2seq_fused_kernel, H=H, S=S, T=T, B=B)
    out = pl.pallas_call(
        kernel,
        out_shape=jax.ShapeDtypeStruct((B * T, Vp), jnp.float32),
        in_specs=([pl.BlockSpec(memory_space=vmem)] * 8
                  + [pl.BlockSpec(memory_space=pl.ANY)] * 3),
        out_specs=pl.BlockSpec(memory_space=vmem),
        scratch_shapes=[
            pltpu.VMEM((B, S, G), jnp.float32),      # out_enc scratch
            pltpu.VMEM((B, T, G), jnp.float32),      # out_dec scratch
            pltpu.VMEM((G, 4 * G), jnp.float32),     # decoder W_hh buffer
            pltpu.VMEM((G, G), jnp.float32),         # att buffer
            pltpu.VMEM((2 * G, Vp), jnp.float32),    # fc weight buffer
            pltpu.SemaphoreType.DMA((3,)),
        ],
    )(x2, d2, packed["wih_enc2"], packed["b_enc"], packed["wih_dec"],
      packed["b_dec"], packed["whh_enc"], packed["fc_b"],
      packed["whh_dec"], packed["att"], packed["fc_w"])

    return out.reshape(B, T, Vp)[:, :, :vocab_size]


# ----------------------------------------------------------------------------
# Pure-JAX reference (natural-layout params) for correctness check
# ----------------------------------------------------------------------------
def _lstm_cell_ref(x_t, h, c, wih, whh, b, hid):
    gates = x_t @ wih + h @ whh + b
    i = jax.nn.sigmoid(gates[:, 0 * hid:1 * hid])
    f = jax.nn.sigmoid(gates[:, 1 * hid:2 * hid])
    g = jnp.tanh(gates[:, 2 * hid:3 * hid])
    o = jax.nn.sigmoid(gates[:, 3 * hid:4 * hid])
    c = f * c + i * g
    return o * jnp.tanh(c), c


def seq2seq_ref(params, inp, dec_inp, HID=64):
    H = HID
    B, S = inp.shape
    T = dec_inp.shape[1]
    x = params["emb"][inp]
    d = params["emb"][dec_inp]
    h_f = c_f = jnp.zeros((B, H), jnp.float32)
    h_b = c_b = jnp.zeros((B, H), jnp.float32)
    outs_f, outs_b = [], [None] * S
    for t in range(S):
        h_f, c_f = _lstm_cell_ref(x[:, t], h_f, c_f, params["enc_f_wih"],
                                  params["enc_f_whh"], params["enc_f_b"], H)
        outs_f.append(h_f)
    for t in reversed(range(S)):
        h_b, c_b = _lstm_cell_ref(x[:, t], h_b, c_b, params["enc_b_wih"],
                                  params["enc_b_whh"], params["enc_b_b"], H)
        outs_b[t] = h_b
    out_enc = jnp.stack([jnp.concatenate([outs_f[t], outs_b[t]], axis=-1)
                         for t in range(S)], axis=1)                  # [B, S, 2H]
    hd = jnp.concatenate([h_f, h_b], axis=-1)
    cd = jnp.concatenate([c_f, c_b], axis=-1)
    outs_d = []
    for t in range(T):
        hd, cd = _lstm_cell_ref(d[:, t], hd, cd, params["dec_wih"],
                                params["dec_whh"], params["dec_b"], 2 * H)
        outs_d.append(hd)
    out_dec = jnp.stack(outs_d, axis=1)                               # [B, T, 2H]
    proj = out_dec @ params["att"]
    scores = jnp.einsum("btk,bsk->bts", proj, out_enc)
    w = jax.nn.softmax(scores, axis=-1)
    ctx = jnp.einsum("bts,bsk->btk", w, out_enc)
    cat = jnp.concatenate([out_dec, ctx], axis=-1)
    return cat @ params["fc_w_t"] + params["fc_b"]


if __name__ == "__main__":
    EMB, HID, VOCAB = 8, 64, 32
    B, S, T = 2, 8, 4

    key = jax.random.PRNGKey(0)
    k_params, k_inp, k_dec = jax.random.split(key, 3)

    params = init_params(k_params, VOCAB, EMB=EMB, HID=HID)
    packed = pack_params(params)
    inp = jax.random.randint(k_inp, (B, S), 0, VOCAB + 2, dtype=jnp.int32)
    dec_inp = jax.random.randint(k_dec, (B, T), 0, VOCAB + 2, dtype=jnp.int32)

    out = seq2seq_forward(packed, inp, dec_inp, vocab_size=VOCAB)
    jax.block_until_ready(out)
    assert out.shape == (B, T, VOCAB), out.shape
    assert bool(jnp.all(jnp.isfinite(out)))

    ref = seq2seq_ref(params, inp, dec_inp, HID=HID)
    np.testing.assert_allclose(np.asarray(out), np.asarray(ref),
                               rtol=5e-3, atol=5e-3)
    print("KERNEL_OK")
</pallas_src>

<mosaic_0001>
module attributes {stable_mosaic.version = 11 : i64} {
  func.func @_seq2seq_fused_kernel(%arg0: memref<16x16xf32, #tpu.memory_space<vmem>>, %arg1: memref<8x8xf32, #tpu.memory_space<vmem>>, %arg2: memref<16x512xf32, #tpu.memory_space<vmem>>, %arg3: memref<1x512xf32, #tpu.memory_space<vmem>>, %arg4: memref<8x512xf32, #tpu.memory_space<vmem>>, %arg5: memref<1x512xf32, #tpu.memory_space<vmem>>, %arg6: memref<128x512xf32, #tpu.memory_space<vmem>>, %arg7: memref<1x128xf32, #tpu.memory_space<vmem>>, %arg8: memref<128x512xf32, #tpu.memory_space<any>>, %arg9: memref<128x128xf32, #tpu.memory_space<any>>, %arg10: memref<256x128xf32, #tpu.memory_space<any>>, %arg11: memref<8x128xf32, #tpu.memory_space<vmem>>, %arg12: memref<2x8x128xf32, #tpu.memory_space<vmem>>, %arg13: memref<2x4x128xf32, #tpu.memory_space<vmem>>, %arg14: memref<128x512xf32, #tpu.memory_space<vmem>>, %arg15: memref<128x128xf32, #tpu.memory_space<vmem>>, %arg16: memref<256x128xf32, #tpu.memory_space<vmem>>, %arg17: memref<3x!tpu.dma_semaphore, #tpu.memory_space<semaphore_mem>>) attributes {dimension_semantics = [], scalar_prefetch = 0 : i64, scratch_operands = 6 : i64, tpu.core_type = #tpu.core_type<tc>} {
    %c0_i32 = arith.constant 0 : i32
    %0 = tpu.memref_slice %arg17[%c0_i32] : memref<3x!tpu.dma_semaphore, #tpu.memory_space<semaphore_mem>> -> memref<1x!tpu.dma_semaphore, #tpu.memory_space<semaphore_mem>>
    %1 = tpu.memref_squeeze %0 : memref<1x!tpu.dma_semaphore, #tpu.memory_space<semaphore_mem>> -> memref<!tpu.dma_semaphore, #tpu.memory_space<semaphore_mem>>
    tpu.enqueue_dma source(%arg8 : memref<128x512xf32, #tpu.memory_space<any>>) target(%arg14 : memref<128x512xf32, #tpu.memory_space<vmem>>) target_semaphore(%1 : memref<!tpu.dma_semaphore, #tpu.memory_space<semaphore_mem>>)
    %c1_i32 = arith.constant 1 : i32
    %2 = tpu.memref_slice %arg17[%c1_i32] : memref<3x!tpu.dma_semaphore, #tpu.memory_space<semaphore_mem>> -> memref<1x!tpu.dma_semaphore, #tpu.memory_space<semaphore_mem>>
    %3 = tpu.memref_squeeze %2 : memref<1x!tpu.dma_semaphore, #tpu.memory_space<semaphore_mem>> -> memref<!tpu.dma_semaphore, #tpu.memory_space<semaphore_mem>>
    tpu.enqueue_dma source(%arg9 : memref<128x128xf32, #tpu.memory_space<any>>) target(%arg15 : memref<128x128xf32, #tpu.memory_space<vmem>>) target_semaphore(%3 : memref<!tpu.dma_semaphore, #tpu.memory_space<semaphore_mem>>)
    %c2_i32 = arith.constant 2 : i32
    %4 = tpu.memref_slice %arg17[%c2_i32] : memref<3x!tpu.dma_semaphore, #tpu.memory_space<semaphore_mem>> -> memref<1x!tpu.dma_semaphore, #tpu.memory_space<semaphore_mem>>
    %5 = tpu.memref_squeeze %4 : memref<1x!tpu.dma_semaphore, #tpu.memory_space<semaphore_mem>> -> memref<!tpu.dma_semaphore, #tpu.memory_space<semaphore_mem>>
    tpu.enqueue_dma source(%arg10 : memref<256x128xf32, #tpu.memory_space<any>>) target(%arg16 : memref<256x128xf32, #tpu.memory_space<vmem>>) target_semaphore(%5 : memref<!tpu.dma_semaphore, #tpu.memory_space<semaphore_mem>>)
    %c0 = arith.constant 0 : index
    %c0_0 = arith.constant 0 : index
    %6 = vector.load %arg0[%c0, %c0_0] : memref<16x16xf32, #tpu.memory_space<vmem>>, vector<16x16xf32>
    %c0_1 = arith.constant 0 : index
    %c0_2 = arith.constant 0 : index
    %7 = vector.load %arg2[%c0_1, %c0_2] : memref<16x512xf32, #tpu.memory_space<vmem>>, vector<16x512xf32>
    %cst = arith.constant dense<0.000000e+00> : vector<16x512xf32>
    %8 = tpu.matmul %6, %7, %cst {dimension_numbers = #tpu.dot_dimension_numbers<[1], [0], [0], [1], [0, 0, 1, 1], [], []>} : vector<16x16xf32>, vector<16x512xf32>, vector<16x512xf32> -> vector<16x512xf32>
    %c0_3 = arith.constant 0 : index
    %c0_4 = arith.constant 0 : index
    %9 = vector.load %arg3[%c0_3, %c0_4] : memref<1x512xf32, #tpu.memory_space<vmem>>, vector<1x512xf32>
    %10 = vector.broadcast %9 : vector<1x512xf32> to vector<16x512xf32>
    %11 = arith.addf %8, %10 : vector<16x512xf32>
    %c0_5 = arith.constant 0 : index
    %c0_6 = arith.constant 0 : index
    %12 = vector.load %arg1[%c0_5, %c0_6] : memref<8x8xf32, #tpu.memory_space<vmem>>, vector<8x8xf32>
    %c0_7 = arith.constant 0 : index
    %c0_8 = arith.constant 0 : index
    %13 = vector.load %arg4[%c0_7, %c0_8] : memref<8x512xf32, #tpu.memory_space<vmem>>, vector<8x512xf32>
    %cst_9 = arith.constant dense<0.000000e+00> : vector<8x512xf32>
    %14 = tpu.matmul %12, %13, %cst_9 {dimension_numbers = #tpu.dot_dimension_numbers<[1], [0], [0], [1], [0, 0, 1, 1], [], []>} : vector<8x8xf32>, vector<8x512xf32>, vector<8x512xf32> -> vector<8x512xf32>
    %c0_10 = arith.constant 0 : index
    %c0_11 = arith.constant 0 : index
    %15 = vector.load %arg5[%c0_10, %c0_11] : memref<1x512xf32, #tpu.memory_space<vmem>>, vector<1x512xf32>
    %16 = vector.broadcast %15 : vector<1x512xf32> to vector<8x512xf32>
    %17 = arith.addf %14, %16 : vector<8x512xf32>
    %c0_12 = arith.constant 0 : index
    %c0_13 = arith.constant 0 : index
    %18 = vector.load %arg6[%c0_12, %c0_13] : memref<128x512xf32, #tpu.memory_space<vmem>>, vector<128x512xf32>
    %cst_14 = arith.constant 0.000000e+00 : f32
    %19 = vector.broadcast %cst_14 : f32 to vector<2x128xf32>
    %cst_15 = arith.constant 0.000000e+00 : f32
    %20 = vector.broadcast %cst_15 : f32 to vector<2x128xf32>
    %21 = vector.extract_strided_slice %11 {offsets = [0, 0], sizes = [2, 512], strides = [1, 1]} : vector<16x512xf32> to vector<2x512xf32>
    %cst_16 = arith.constant dense<0.000000e+00> : vector<2x512xf32>
    %22 = tpu.matmul %19, %18, %cst_16 {dimension_numbers = #tpu.dot_dimension_numbers<[1], [0], [0], [1], [0, 0, 1, 1], [], []>} : vector<2x128xf32>, vector<128x512xf32>, vector<2x512xf32> -> vector<2x512xf32>
    %23 = arith.addf %21, %22 : vector<2x512xf32>
    %24 = vector.extract_strided_slice %23 {offsets = [0, 0], sizes = [2, 384], strides = [1, 1]} : vector<2x512xf32> to vector<2x384xf32>
    %25 = arith.negf %24 : vector<2x384xf32>
    %26 = math.exp %25 : vector<2x384xf32>
    %cst_17 = arith.constant 1.000000e+00 : f32
    %27 = vector.broadcast %cst_17 : f32 to vector<2x384xf32>
    %28 = arith.addf %27, %26 : vector<2x384xf32>
    %29 = arith.divf %27, %28 : vector<2x384xf32>
    %30 = vector.extract_strided_slice %29 {offsets = [0, 0], sizes = [2, 128], strides = [1, 1]} : vector<2x384xf32> to vector<2x128xf32>
    %31 = vector.extract_strided_slice %29 {offsets = [0, 128], sizes = [2, 128], strides = [1, 1]} : vector<2x384xf32> to vector<2x128xf32>
    %32 = vector.extract_strided_slice %29 {offsets = [0, 256], sizes = [2, 128], strides = [1, 1]} : vector<2x384xf32> to vector<2x128xf32>
    %33 = vector.extract_strided_slice %23 {offsets = [0, 384], sizes = [2, 128], strides = [1, 1]} : vector<2x512xf32> to vector<2x128xf32>
    %34 = math.tanh %33 : vector<2x128xf32>
    %35 = arith.mulf %31, %20 : vector<2x128xf32>
    %36 = arith.mulf %30, %34 : vector<2x128xf32>
    %37 = arith.addf %35, %36 : vector<2x128xf32>
    %38 = math.tanh %37 : vector<2x128xf32>
    %39 = arith.mulf %32, %38 : vector<2x128xf32>
    %40 = vector.extract_strided_slice %39 {offsets = [0, 0], sizes = [2, 64], strides = [1, 1]} : vector<2x128xf32> to vector<2x64xf32>
    %c0_18 = arith.constant 0 : index
    %c0_19 = arith.constant 0 : index
    %c0_20 = arith.constant 0 : index
    %41 = vector.load %arg12[%c0_18, %c0_19, %c0_20] : memref<2x8x128xf32, #tpu.memory_space<vmem>>, vector<2x1x64xf32>
    %42 = vector.shape_cast %41 : vector<2x1x64xf32> to vector<2x64xf32>
    %43 = vector.shape_cast %40 : vector<2x64xf32> to vector<2x1x64xf32>
    tpu.vector_store %arg12[%c0_18, %c0_19, %c0_20], %43 {strides = array<i32>} : memref<2x8x128xf32, #tpu.memory_space<vmem>>, vector<2x1x64xf32>,
    %44 = vector.extract_strided_slice %39 {offsets = [0, 64], sizes = [2, 64], strides = [1, 1]} : vector<2x128xf32> to vector<2x64xf32>
    %c0_21 = arith.constant 0 : index
    %c7 = arith.constant 7 : index
    %c64 = arith.constant 64 : index
    %45 = vector.load %arg12[%c0_21, %c7, %c64] : memref<2x8x128xf32, #tpu.memory_space<vmem>>, vector<2x1x64xf32>
    %46 = vector.shape_cast %45 : vector<2x1x64xf32> to vector<2x64xf32>
    %47 = vector.shape_cast %44 : vector<2x64xf32> to vector<2x1x64xf32>
    tpu.vector_store %arg12[%c0_21, %c7, %c64], %47 {strides = array<i32>} : memref<2x8x128xf32, #tpu.memory_space<vmem>>, vector<2x1x64xf32>,
    %48 = vector.extract_strided_slice %11 {offsets = [2, 0], sizes = [2, 512], strides = [1, 1]} : vector<16x512xf32> to vector<2x512xf32>
    %cst_22 = arith.constant dense<0.000000e+00> : vector<2x512xf32>
    %49 = tpu.matmul %39, %18, %cst_22 {dimension_numbers = #tpu.dot_dimension_numbers<[1], [0], [0], [1], [0, 0, 1, 1], [], []>} : vector<2x128xf32>, vector<128x512xf32>, vector<2x512xf32> -> vector<2x512xf32>
    %50 = arith.addf %48, %49 : vector<2x512xf32>
    %51 = vector.extract_strided_slice %50 {offsets = [0, 0], sizes = [2, 384], strides = [1, 1]} : vector<2x512xf32> to vector<2x384xf32>
    %52 = arith.negf %51 : vector<2x384xf32>
    %53 = math.exp %52 : vector<2x384xf32>
    %cst_23 = arith.constant 1.000000e+00 : f32
    %54 = vector.broadcast %cst_23 : f32 to vector<2x384xf32>
    %55 = arith.addf %54, %53 : vector<2x384xf32>
    %56 = arith.divf %54, %55 : vector<2x384xf32>
    %57 = vector.extract_strided_slice %56 {offsets = [0, 0], sizes = [2, 128], strides = [1, 1]} : vector<2x384xf32> to vector<2x128xf32>
    %58 = vector.extract_strided_slice %56 {offsets = [0, 128], sizes = [2, 128], strides = [1, 1]} : vector<2x384xf32> to vector<2x128xf32>
    %59 = vector.extract_strided_slice %56 {offsets = [0, 256], sizes = [2, 128], strides = [1, 1]} : vector<2x384xf32> to vector<2x128xf32>
    %60 = vector.extract_strided_slice %50 {offsets = [0, 384], sizes = [2, 128], strides = [1, 1]} : vector<2x512xf32> to vector<2x128xf32>
    %61 = math.tanh %60 : vector<2x128xf32>
    %62 = arith.mulf %58, %37 : vector<2x128xf32>
    %63 = arith.mulf %57, %61 : vector<2x128xf32>
    %64 = arith.addf %62, %63 : vector<2x128xf32>
    %65 = math.tanh %64 : vector<2x128xf32>
    %66 = arith.mulf %59, %65 : vector<2x128xf32>
    %67 = vector.extract_strided_slice %66 {offsets = [0, 0], sizes = [2, 64], strides = [1, 1]} : vector<2x128xf32> to vector<2x64xf32>
    %c0_24 = arith.constant 0 : index
    %c1 = arith.constant 1 : index
    %c0_25 = arith.constant 0 : index
    %68 = vector.load %arg12[%c0_24, %c1, %c0_25] : memref<2x8x128xf32, #tpu.memory_space<vmem>>, vector<2x1x64xf32>
    %69 = vector.shape_cast %68 : vector<2x1x64xf32> to vector<2x64xf32>
    %70 = vector.shape_cast %67 : vector<2x64xf32> to vector<2x1x64xf32>
    tpu.vector_store %arg12[%c0_24, %c1, %c0_25], %70 {strides = array<i32>} : memref<2x8x128xf32, #tpu.memory_space<vmem>>, vector<2x1x64xf32>,
    %71 = vector.extract_strided_slice %66 {offsets = [0, 64], sizes = [2, 64], strides = [1, 1]} : vector<2x128xf32> to vector<2x64xf32>
    %c0_26 = arith.constant 0 : index
    %c6 = arith.constant 6 : index
    %c64_27 = arith.constant 64 : index
    %72 = vector.load %arg12[%c0_26, %c6, %c64_27] : memref<2x8x128xf32, #tpu.memory_space<vmem>>, vector<2x1x64xf32>
    %73 = vector.shape_cast %72 : vector<2x1x64xf32> to vector<2x64xf32>
    %74 = vector.shape_cast %71 : vector<2x64xf32> to vector<2x1x64xf32>
    tpu.vector_store %arg12[%c0_26, %c6, %c64_27], %74 {strides = array<i32>} : memref<2x8x128xf32, #tpu.memory_space<vmem>>, vector<2x1x64xf32>,
    %75 = vector.extract_strided_slice %11 {offsets = [4, 0], sizes = [2, 512], strides = [1, 1]} : vector<16x512xf32> to vector<2x512xf32>
    %cst_28 = arith.constant dense<0.000000e+00> : vector<2x512xf32>
    %76 = tpu.matmul %66, %18, %cst_28 {dimension_numbers = #tpu.dot_dimension_numbers<[1], [0], [0], [1], [0, 0, 1, 1], [], []>} : vector<2x128xf32>, vector<128x512xf32>, vector<2x512xf32> -> vector<2x512xf32>
    %77 = arith.addf %75, %76 : vector<2x512xf32>
    %78 = vector.extract_strided_slice %77 {offsets = [0, 0], sizes = [2, 384], strides = [1, 1]} : vector<2x512xf32> to vector<2x384xf32>
    %79 = arith.negf %78 : vector<2x384xf32>
    %80 = math.exp %79 : vector<2x384xf32>
    %cst_29 = arith.constant 1.000000e+00 : f32
    %81 = vector.broadcast %cst_29 : f32 to vector<2x384xf32>
    %82 = arith.addf %81, %80 : vector<2x384xf32>
    %83 = arith.divf %81, %82 : vector<2x384xf32>
    %84 = vector.extract_strided_slice %83 {offsets = [0, 0], sizes = [2, 128], strides = [1, 1]} : vector<2x384xf32> to vector<2x128xf32>
    %85 = vector.extract_strided_slice %83 {offsets = [0, 128], sizes = [2, 128], strides = [1, 1]} : vector<2x384xf32> to vector<2x128xf32>
    %86 = vector.extract_strided_slice %83 {offsets = [0, 256], sizes = [2, 128], strides = [1, 1]} : vector<2x384xf32> to vector<2x128xf32>
    %87 = vector.extract_strided_slice %77 {offsets = [0, 384], sizes = [2, 128], strides = [1, 1]} : vector<2x512xf32> to vector<2x128xf32>
    %88 = math.tanh %87 : vector<2x128xf32>
    %89 = arith.mulf %85, %64 : vector<2x128xf32>
    %90 = arith.mulf %84, %88 : vector<2x128xf32>
    %91 = arith.addf %89, %90 : vector<2x128xf32>
    %92 = math.tanh %91 : vector<2x128xf32>
    %93 = arith.mulf %86, %92 : vector<2x128xf32>
    %94 = vector.extract_strided_slice %93 {offsets = [0, 0], sizes = [2, 64], strides = [1, 1]} : vector<2x128xf32> to vector<2x64xf32>
    %c0_30 = arith.constant 0 : index
    %c2 = arith.constant 2 : index
    %c0_31 = arith.constant 0 : index
    %95 = vector.load %arg12[%c0_30, %c2, %c0_31] : memref<2x8x128xf32, #tpu.memory_space<vmem>>, vector<2x1x64xf32>
    %96 = vector.shape_cast %95 : vector<2x1x64xf32> to vector<2x64xf32>
    %97 = vector.shape_cast %94 : vector<2x64xf32> to vector<2x1x64xf32>
    tpu.vector_store %arg12[%c0_30, %c2, %c0_31], %97 {strides = array<i32>} : memref<2x8x128xf32, #tpu.memory_space<vmem>>, vector<2x1x64xf32>,
    %98 = vector.extract_strided_slice %93 {offsets = [0, 64], sizes = [2, 64], strides = [1, 1]} : vector<2x128xf32> to vector<2x64xf32>
    %c0_32 = arith.constant 0 : index
    %c5 = arith.constant 5 : index
    %c64_33 = arith.constant 64 : index
    %99 = vector.load %arg12[%c0_32, %c5, %c64_33] : memref<2x8x128xf32, #tpu.memory_space<vmem>>, vector<2x1x64xf32>
    %100 = vector.shape_cast %99 : vector<2x1x64xf32> to vector<2x64xf32>
    %101 = vector.shape_cast %98 : vector<2x64xf32> to vector<2x1x64xf32>
    tpu.vector_store %arg12[%c0_32, %c5, %c64_33], %101 {strides = array<i32>} : memref<2x8x128xf32, #tpu.memory_space<vmem>>, vector<2x1x64xf32>,
    %102 = vector.extract_strided_slice %11 {offsets = [6, 0], sizes = [2, 512], strides = [1, 1]} : vector<16x512xf32> to vector<2x512xf32>
    %cst_34 = arith.constant dense<0.000000e+00> : vector<2x512xf32>
    %103 = tpu.matmul %93, %18, %cst_34 {dimension_numbers = #tpu.dot_dimension_numbers<[1], [0], [0], [1], [0, 0, 1, 1], [], []>} : vector<2x128xf32>, vector<128x512xf32>, vector<2x512xf32> -> vector<2x512xf32>
    %104 = arith.addf %102, %103 : vector<2x512xf32>
    %105 = vector.extract_strided_slice %104 {offsets = [0, 0], sizes = [2, 384], strides = [1, 1]} : vector<2x512xf32> to vector<2x384xf32>
    %106 = arith.negf %105 : vector<2x384xf32>
    %107 = math.exp %106 : vector<2x384xf32>
    %cst_35 = arith.constant 1.000000e+00 : f32
    %108 = vector.broadcast %cst_35 : f32 to vector<2x384xf32>
    %109 = arith.addf %108, %107 : vector<2x384xf32>
    %110 = arith.divf %108, %109 : vector<2x384xf32>
    %111 = vector.extract_strided_slice %110 {offsets = [0, 0], sizes = [2, 128], strides = [1, 1]} : vector<2x384xf32> to vector<2x128xf32>
    %112 = vector.extract_strided_slice %110 {offsets = [0, 128], sizes = [2, 128], strides = [1, 1]} : vector<2x384xf32> to vector<2x128xf32>
    %113 = vector.extract_strided_slice %110 {offsets = [0, 256], sizes = [2, 128], strides = [1, 1]} : vector<2x384xf32> to vector<2x128xf32>
    %114 = vector.extract_strided_slice %104 {offsets = [0, 384], sizes = [2, 128], strides = [1, 1]} : vector<2x512xf32> to vector<2x128xf32>
    %115 = math.tanh %114 : vector<2x128xf32>
    %116 = arith.mulf %112, %91 : vector<2x128xf32>
    %117 = arith.mulf %111, %115 : vector<2x128xf32>
    %118 = arith.addf %116, %117 : vector<2x128xf32>
    %119 = math.tanh %118 : vector<2x128xf32>
    %120 = arith.mulf %113, %119 : vector<2x128xf32>
    %121 = vector.extract_strided_slice %120 {offsets = [0, 0], sizes = [2, 64], strides = [1, 1]} : vector<2x128xf32> to vector<2x64xf32>
    %c0_36 = arith.constant 0 : index
    %c3 = arith.constant 3 : index
    %c0_37 = arith.constant 0 : index
    %122 = vector.load %arg12[%c0_36, %c3, %c0_37] : memref<2x8x128xf32, #tpu.memory_space<vmem>>, vector<2x1x64xf32>
    %123 = vector.shape_cast %122 : vector<2x1x64xf32> to vector<2x64xf32>
    %124 = vector.shape_cast %121 : vector<2x64xf32> to vector<2x1x64xf32>
    tpu.vector_store %arg12[%c0_36, %c3, %c0_37], %124 {strides = array<i32>} : memref<2x8x128xf32, #tpu.memory_space<vmem>>, vector<2x1x64xf32>,
    %125 = vector.extract_strided_slice %120 {offsets = [0, 64], sizes = [2, 64], strides = [1, 1]} : vector<2x128xf32> to vector<2x64xf32>
    %c0_38 = arith.constant 0 : index
    %c4 = arith.constant 4 : index
    %c64_39 = arith.constant 64 : index
    %126 = vector.load %arg12[%c0_38, %c4, %c64_39] : memref<2x8x128xf32, #tpu.memory_space<vmem>>, vector<2x1x64xf32>
    %127 = vector.shape_cast %126 : vector<2x1x64xf32> to vector<2x64xf32>
    %128 = vector.shape_cast %125 : vector<2x64xf32> to vector<2x1x64xf32>
    tpu.vector_store %arg12[%c0_38, %c4, %c64_39], %128 {strides = array<i32>} : memref<2x8x128xf32, #tpu.memory_space<vmem>>, vector<2x1x64xf32>,
    %129 = vector.extract_strided_slice %11 {offsets = [8, 0], sizes = [2, 512], strides = [1, 1]} : vector<16x512xf32> to vector<2x512xf32>
    %cst_40 = arith.constant dense<0.000000e+00> : vector<2x512xf32>
    %130 = tpu.matmul %120, %18, %cst_40 {dimension_numbers = #tpu.dot_dimension_numbers<[1], [0], [0], [1], [0, 0, 1, 1], [], []>} : vector<2x128xf32>, vector<128x512xf32>, vector<2x512xf32> -> vector<2x512xf32>
    %131 = arith.addf %129, %130 : vector<2x512xf32>
    %132 = vector.extract_strided_slice %131 {offsets = [0, 0], sizes = [2, 384], strides = [1, 1]} : vector<2x512xf32> to vector<2x384xf32>
    %133 = arith.negf %132 : vector<2x384xf32>
    %134 = math.exp %133 : vector<2x384xf32>
    %cst_41 = arith.constant 1.000000e+00 : f32
    %135 = vector.broadcast %cst_41 : f32 to vector<2x384xf32>
    %136 = arith.addf %135, %134 : vector<2x384xf32>
    %137 = arith.divf %135, %136 : vector<2x384xf32>
    %138 = vector.extract_strided_slice %137 {offsets = [0, 0], sizes = [2, 128], strides = [1, 1]} : vector<2x384xf32> to vector<2x128xf32>
    %139 = vector.extract_strided_slice %137 {offsets = [0, 128], sizes = [2, 128], strides = [1, 1]} : vector<2x384xf32> to vector<2x128xf32>
    %140 = vector.extract_strided_slice %137 {offsets = [0, 256], sizes = [2, 128], strides = [1, 1]} : vector<2x384xf32> to vector<2x128xf32>
    %141 = vector.extract_strided_slice %131 {offsets = [0, 384], sizes = [2, 128], strides = [1, 1]} : vector<2x512xf32> to vector<2x128xf32>
    %142 = math.tanh %141 : vector<2x128xf32>
    %143 = arith.mulf %139, %118 : vector<2x128xf32>
    %144 = arith.mulf %138, %142 : vector<2x128xf32>
    %145 = arith.addf %143, %144 : vector<2x128xf32>
    %146 = math.tanh %145 : vector<2x128xf32>
    %147 = arith.mulf %140, %146 : vector<2x128xf32>
    %148 = vector.extract_strided_slice %147 {offsets = [0, 0], sizes = [2, 64], strides = [1, 1]} : vector<2x128xf32> to vector<2x64xf32>
    %c0_42 = arith.constant 0 : index
    %c4_43 = arith.constant 4 : index
    %c0_44 = arith.constant 0 : index
    %149 = vector.load %arg12[%c0_42, %c4_43, %c0_44] : memref<2x8x128xf32, #tpu.memory_space<vmem>>, vector<2x1x64xf32>
    %150 = vector.shape_cast %149 : vector<2x1x64xf32> to vector<2x64xf32>
    %151 = vector.shape_cast %148 : vector<2x64xf32> to vector<2x1x64xf32>
    tpu.vector_store %arg12[%c0_42, %c4_43, %c0_44], %151 {strides = array<i32>} : memref<2x8x128xf32, #tpu.memory_space<vmem>>, vector<2x1x64xf32>,
    %152 = vector.extract_strided_slice %147 {offsets = [0, 64], sizes = [2, 64], strides = [1, 1]} : vector<2x128xf32> to vector<2x64xf32>
    %c0_45 = arith.constant 0 : index
    %c3_46 = arith.constant 3 : index
    %c64_47 = arith.constant 64 : index
    %153 = vector.load %arg12[%c0_45, %c3_46, %c64_47] : memref<2x8x128xf32, #tpu.memory_space<vmem>>, vector<2x1x64xf32>
    %154 = vector.shape_cast %153 : vector<2x1x64xf32> to vector<2x64xf32>
    %155 = vector.shape_cast %152 : vector<2x64xf32> to vector<2x1x64xf32>
    tpu.vector_store %arg12[%c0_45, %c3_46, %c64_47], %155 {strides = array<i32>} : memref<2x8x128xf32, #tpu.memory_space<vmem>>, vector<2x1x64xf32>,
    %156 = vector.extract_strided_slice %11 {offsets = [10, 0], sizes = [2, 512], strides = [1, 1]} : vector<16x512xf32> to vector<2x512xf32>
    %cst_48 = arith.constant dense<0.000000e+00> : vector<2x512xf32>
    %157 = tpu.matmul %147, %18, %cst_48 {dimension_numbers = #tpu.dot_dimension_numbers<[1], [0], [0], [1], [0, 0, 1, 1], [], []>} : vector<2x128xf32>, vector<128x512xf32>, vector<2x512xf32> -> vector<2x512xf32>
    %158 = arith.addf %156, %157 : vector<2x512xf32>
    %159 = vector.extract_strided_slice %158 {offsets = [0, 0], sizes = [2, 384], strides = [1, 1]} : vector<2x512xf32> to vector<2x384xf32>
    %160 = arith.negf %159 : vector<2x384xf32>
    %161 = math.exp %160 : vector<2x384xf32>
    %cst_49 = arith.constant 1.000000e+00 : f32
    %162 = vector.broadcast %cst_49 : f32 to vector<2x384xf32>
    %163 = arith.addf %162, %161 : vector<2x384xf32>
    %164 = arith.divf %162, %163 : vector<2x384xf32>
    %165 = vector.extract_strided_slice %164 {offsets = [0, 0], sizes = [2, 128], strides = [1, 1]} : vector<2x384xf32> to vector<2x128xf32>
    %166 = vector.extract_strided_slice %164 {offsets = [0, 128], sizes = [2, 128], strides = [1, 1]} : vector<2x384xf32> to vector<2x128xf32>
    %167 = vector.extract_strided_slice %164 {offsets = [0, 256], sizes = [2, 128], strides = [1, 1]} : vector<2x384xf32> to vector<2x128xf32>
    %168 = vector.extract_strided_slice %158 {offsets = [0, 384], sizes = [2, 128], strides = [1, 1]} : vector<2x512xf32> to vector<2x128xf32>
    %169 = math.tanh %168 : vector<2x128xf32>
    %170 = arith.mulf %166, %145 : vector<2x128xf32>
    %171 = arith.mulf %165, %169 : vector<2x128xf32>
    %172 = arith.addf %170, %171 : vector<2x128xf32>
    %173 = math.tanh %172 : vector<2x128xf32>
    %174 = arith.mulf %167, %173 : vector<2x128xf32>
    %175 = vector.extract_strided_slice %174 {offsets = [0, 0], sizes = [2, 64], strides = [1, 1]} : vector<2x128xf32> to vector<2x64xf32>
    %c0_50 = arith.constant 0 : index
    %c5_51 = arith.constant 5 : index
    %c0_52 = arith.constant 0 : index
    %176 = vector.load %arg12[%c0_50, %c5_51, %c0_52] : memref<2x8x128xf32, #tpu.memory_space<vmem>>, vector<2x1x64xf32>
    %177 = vector.shape_cast %176 : vector<2x1x64xf32> to vector<2x64xf32>
    %178 = vector.shape_cast %175 : vector<2x64xf32> to vector<2x1x64xf32>
    tpu.vector_store %arg12[%c0_50, %c5_51, %c0_52], %178 {strides = array<i32>} : memref<2x8x128xf32, #tpu.memory_space<vmem>>, vector<2x1x64xf32>,
    %179 = vector.extract_strided_slice %174 {offsets = [0, 64], sizes = [2, 64], strides = [1, 1]} : vector<2x128xf32> to vector<2x64xf32>
    %c0_53 = arith.constant 0 : index
    %c2_54 = arith.constant 2 : index
    %c64_55 = arith.constant 64 : index
    %180 = vector.load %arg12[%c0_53, %c2_54, %c64_55] : memref<2x8x128xf32, #tpu.memory_space<vmem>>, vector<2x1x64xf32>
    %181 = vector.shape_cast %180 : vector<2x1x64xf32> to vector<2x64xf32>
    %182 = vector.shape_cast %179 : vector<2x64xf32> to vector<2x1x64xf32>
    tpu.vector_store %arg12[%c0_53, %c2_54, %c64_55], %182 {strides = array<i32>} : memref<2x8x128xf32, #tpu.memory_space<vmem>>, vector<2x1x64xf32>,
    %183 = vector.extract_strided_slice %11 {offsets = [12, 0], sizes = [2, 512], strides = [1, 1]} : vector<16x512xf32> to vector<2x512xf32>
    %cst_56 = arith.constant dense<0.000000e+00> : vector<2x512xf32>
    %184 = tpu.matmul %174, %18, %cst_56 {dimension_numbers = #tpu.dot_dimension_numbers<[1], [0], [0], [1], [0, 0, 1, 1], [], []>} : vector<2x128xf32>, vector<128x512xf32>, vector<2x512xf32> -> vector<2x512xf32>
    %185 = arith.addf %183, %184 : vector<2x512xf32>
    %186 = vector.extract_strided_slice %185 {offsets = [0, 0], sizes = [2, 384], strides = [1, 1]} : vector<2x512xf32> to vector<2x384xf32>
    %187 = arith.negf %186 : vector<2x384xf32>
    %188 = math.exp %187 : vector<2x384xf32>
    %cst_57 = arith.constant 1.000000e+00 : f32
    %189 = vector.broadcast %cst_57 : f32 to vector<2x384xf32>
    %190 = arith.addf %189, %188 : vector<2x384xf32>
    %191 = arith.divf %189, %190 : vector<2x384xf32>
    %192 = vector.extract_strided_slice %191 {offsets = [0, 0], sizes = [2, 128], strides = [1, 1]} : vector<2x384xf32> to vector<2x128xf32>
    %193 = vector.extract_strided_slice %191 {offsets = [0, 128], sizes = [2, 128], strides = [1, 1]} : vector<2x384xf32> to vector<2x128xf32>
    %194 = vector.extract_strided_slice %191 {offsets = [0, 256], sizes = [2, 128], strides = [1, 1]} : vector<2x384xf32> to vector<2x128xf32>
    %195 = vector.extract_strided_slice %185 {offsets = [0, 384], sizes = [2, 128], strides = [1, 1]} : vector<2x512xf32> to vector<2x128xf32>
    %196 = math.tanh %195 : vector<2x128xf32>
    %197 = arith.mulf %193, %172 : vector<2x128xf32>
    %198 = arith.mulf %192, %196 : vector<2x128xf32>
    %199 = arith.addf %197, %198 : vector<2x128xf32>
    %200 = math.tanh %199 : vector<2x128xf32>
    %201 = arith.mulf %194, %200 : vector<2x128xf32>
    %202 = vector.extract_strided_slice %201 {offsets = [0, 0], sizes = [2, 64], strides = [1, 1]} : vector<2x128xf32> to vector<2x64xf32>
    %c0_58 = arith.constant 0 : index
    %c6_59 = arith.constant 6 : index
    %c0_60 = arith.constant 0 : index
    %203 = vector.load %arg12[%c0_58, %c6_59, %c0_60] : memref<2x8x128xf32, #tpu.memory_space<vmem>>, vector<2x1x64xf32>
    %204 = vector.shape_cast %203 : vector<2x1x64xf32> to vector<2x64xf32>
    %205 = vector.shape_cast %202 : vector<2x64xf32> to vector<2x1x64xf32>
    tpu.vector_store %arg12[%c0_58, %c6_59, %c0_60], %205 {strides = array<i32>} : memref<2x8x128xf32, #tpu.memory_space<vmem>>, vector<2x1x64xf32>,
    %206 = vector.extract_strided_slice %201 {offsets = [0, 64], sizes = [2, 64], strides = [1, 1]} : vector<2x128xf32> to vector<2x64xf32>
    %c0_61 = arith.constant 0 : index
    %c1_62 = arith.constant 1 : index
    %c64_63 = arith.constant 64 : index
    %207 = vector.load %arg12[%c0_61, %c1_62, %c64_63] : memref<2x8x128xf32, #tpu.memory_space<vmem>>, vector<2x1x64xf32>
    %208 = vector.shape_cast %207 : vector<2x1x64xf32> to vector<2x64xf32>
    %209 = vector.shape_cast %206 : vector<2x64xf32> to vector<2x1x64xf32>
    tpu.vector_store %arg12[%c0_61, %c1_62, %c64_63], %209 {strides = array<i32>} : memref<2x8x128xf32, #tpu.memory_space<vmem>>, vector<2x1x64xf32>,
    %210 = vector.extract_strided_slice %11 {offsets = [14, 0], sizes = [2, 512], strides = [1, 1]} : vector<16x512xf32> to vector<2x512xf32>
    %cst_64 = arith.constant dense<0.000000e+00> : vector<2x512xf32>
    %211 = tpu.matmul %201, %18, %cst_64 {dimension_numbers = #tpu.dot_dimension_numbers<[1], [0], [0], [1], [0, 0, 1, 1], [], []>} : vector<2x128xf32>, vector<128x512xf32>, vector<2x512xf32> -> vector<2x512xf32>
    %212 = arith.addf %210, %211 : vector<2x512xf32>
    %213 = vector.extract_strided_slice %212 {offsets = [0, 0], sizes = [2, 384], strides = [1, 1]} : vector<2x512xf32> to vector<2x384xf32>
    %214 = arith.negf %213 : vector<2x384xf32>
    %215 = math.exp %214 : vector<2x384xf32>
    %cst_65 = arith.constant 1.000000e+00 : f32
    %216 = vector.broadcast %cst_65 : f32 to vector<2x384xf32>
    %217 = arith.addf %216, %215 : vector<2x384xf32>
    %218 = arith.divf %216, %217 : vector<2x384xf32>
    %219 = vector.extract_strided_slice %218 {offsets = [0, 0], sizes = [2, 128], strides = [1, 1]} : vector<2x384xf32> to vector<2x128xf32>
    %220 = vector.extract_strided_slice %218 {offsets = [0, 128], sizes = [2, 128], strides = [1, 1]} : vector<2x384xf32> to vector<2x128xf32>
    %221 = vector.extract_strided_slice %218 {offsets = [0, 256], sizes = [2, 128], strides = [1, 1]} : vector<2x384xf32> to vector<2x128xf32>
    %222 = vector.extract_strided_slice %212 {offsets = [0, 384], sizes = [2, 128], strides = [1, 1]} : vector<2x512xf32> to vector<2x128xf32>
    %223 = math.tanh %222 : vector<2x128xf32>
    %224 = arith.mulf %220, %199 : vector<2x128xf32>
    %225 = arith.mulf %219, %223 : vector<2x128xf32>
    %226 = arith.addf %224, %225 : vector<2x128xf32>
    %227 = math.tanh %226 : vector<2x128xf32>
    %228 = arith.mulf %221, %227 : vector<2x128xf32>
    %229 = vector.extract_strided_slice %228 {offsets = [0, 0], sizes = [2, 64], strides = [1, 1]} : vector<2x128xf32> to vector<2x64xf32>
    %c0_66 = arith.constant 0 : index
    %c7_67 = arith.constant 7 : index
    %c0_68 = arith.constant 0 : index
    %230 = vector.load %arg12[%c0_66, %c7_67, %c0_68] : memref<2x8x128xf32, #tpu.memory_space<vmem>>, vector<2x1x64xf32>
    %231 = vector.shape_cast %230 : vector<2x1x64xf32> to vector<2x64xf32>
    %232 = vector.shape_cast %229 : vector<2x64xf32> to vector<2x1x64xf32>
    tpu.vector_store %arg12[%c0_66, %c7_67, %c0_68], %232 {strides = array<i32>} : memref<2x8x128xf32, #tpu.memory_space<vmem>>, vector<2x1x64xf32>,
    %233 = vector.extract_strided_slice %228 {offsets = [0, 64], sizes = [2, 64], strides = [1, 1]} : vector<2x128xf32> to vector<2x64xf32>
    %c0_69 = arith.constant 0 : index
    %c0_70 = arith.constant 0 : index
    %c64_71 = arith.constant 64 : index
    %234 = vector.load %arg12[%c0_69, %c0_70, %c64_71] : memref<2x8x128xf32, #tpu.memory_space<vmem>>, vector<2x1x64xf32>
    %235 = vector.shape_cast %234 : vector<2x1x64xf32> to vector<2x64xf32>
    %236 = vector.shape_cast %233 : vector<2x64xf32> to vector<2x1x64xf32>
    tpu.vector_store %arg12[%c0_69, %c0_70, %c64_71], %236 {strides = array<i32>} : memref<2x8x128xf32, #tpu.memory_space<vmem>>, vector<2x1x64xf32>,
    %c0_i32_72 = arith.constant 0 : i32
    %237 = tpu.memref_slice %arg17[%c0_i32_72] : memref<3x!tpu.dma_semaphore, #tpu.memory_space<semaphore_mem>> -> memref<1x!tpu.dma_semaphore, #tpu.memory_space<semaphore_mem>>
    %238 = tpu.memref_squeeze %237 : memref<1x!tpu.dma_semaphore, #tpu.memory_space<semaphore_mem>> -> memref<!tpu.dma_semaphore, #tpu.memory_space<semaphore_mem>>
    tpu.wait_dma2 semaphore(%238 : memref<!tpu.dma_semaphore, #tpu.memory_space<semaphore_mem>>) src(%arg8 : memref<128x512xf32, #tpu.memory_space<any>>) dst(%arg14 : memref<128x512xf32, #tpu.memory_space<vmem>>)
    %c0_73 = arith.constant 0 : index
    %c0_74 = arith.constant 0 : index
    %239 = vector.load %arg14[%c0_73, %c0_74] : memref<128x512xf32, #tpu.memory_space<vmem>>, vector<128x512xf32>
    %240 = vector.extract_strided_slice %17 {offsets = [0, 0], sizes = [2, 512], strides = [1, 1]} : vector<8x512xf32> to vector<2x512xf32>
    %cst_75 = arith.constant dense<0.000000e+00> : vector<2x512xf32>
    %241 = tpu.matmul %228, %239, %cst_75 {dimension_numbers = #tpu.dot_dimension_numbers<[1], [0], [0], [1], [0, 0, 1, 1], [], []>} : vector<2x128xf32>, vector<128x512xf32>, vector<2x512xf32> -> vector<2x512xf32>
    %242 = arith.addf %240, %241 : vector<2x512xf32>
    %243 = vector.extract_strided_slice %242 {offsets = [0, 0], sizes = [2, 384], strides = [1, 1]} : vector<2x512xf32> to vector<2x384xf32>
    %244 = arith.negf %243 : vector<2x384xf32>
    %245 = math.exp %244 : vector<2x384xf32>
    %cst_76 = arith.constant 1.000000e+00 : f32
    %246 = vector.broadcast %cst_76 : f32 to vector<2x384xf32>
    %247 = arith.addf %246, %245 : vector<2x384xf32>
    %248 = arith.divf %246, %247 : vector<2x384xf32>
    %249 = vector.extract_strided_slice %248 {offsets = [0, 0], sizes = [2, 128], strides = [1, 1]} : vector<2x384xf32> to vector<2x128xf32>
    %250 = vector.extract_strided_slice %248 {offsets = [0, 128], sizes = [2, 128], strides = [1, 1]} : vector<2x384xf32> to vector<2x128xf32>
    %251 = vector.extract_strided_slice %248 {offsets = [0, 256], sizes = [2, 128], strides = [1, 1]} : vector<2x384xf32> to vector<2x128xf32>
    %252 = vector.extract_strided_slice %242 {offsets = [0, 384], sizes = [2, 128], strides = [1, 1]} : vector<2x512xf32> to vector<2x128xf32>
    %253 = math.tanh %252 : vector<2x128xf32>
    %254 = arith.mulf %250, %226 : vector<2x128xf32>
    %255 = arith.mulf %249, %253 : vector<2x128xf32>
    %256 = arith.addf %254, %255 : vector<2x128xf32>
    %257 = math.tanh %256 : vector<2x128xf32>
    %258 = arith.mulf %251, %257 : vector<2x128xf32>
    %c0_77 = arith.constant 0 : index
    %c0_78 = arith.constant 0 : index
    %c0_79 = arith.constant 0 : index
    %259 = vector.load %arg13[%c0_77, %c0_78, %c0_79] : memref<2x4x128xf32, #tpu.memory_space<vmem>>, vector<2x1x128xf32>
    %260 = vector.shape_cast %259 : vector<2x1x128xf32> to vector<2x128xf32>
    %261 = vector.shape_cast %258 : vector<2x128xf32> to vector<2x1x128xf32>
    tpu.vector_store %arg13[%c0_77, %c0_78, %c0_79], %261 {strides = array<i32>} : memref<2x4x128xf32, #tpu.memory_space<vmem>>, vector<2x1x128xf32>,
    %262 = vector.extract_strided_slice %17 {offsets = [2, 0], sizes = [2, 512], strides = [1, 1]} : vector<8x512xf32> to vector<2x512xf32>
    %cst_80 = arith.constant dense<0.000000e+00> : vector<2x512xf32>
    %263 = tpu.matmul %258, %239, %cst_80 {dimension_numbers = #tpu.dot_dimension_numbers<[1], [0], [0], [1], [0, 0, 1, 1], [], []>} : vector<2x128xf32>, vector<128x512xf32>, vector<2x512xf32> -> vector<2x512xf32>
    %264 = arith.addf %262, %263 : vector<2x512xf32>
    %265 = vector.extract_strided_slice %264 {offsets = [0, 0], sizes = [2, 384], strides = [1, 1]} : vector<2x512xf32> to vector<2x384xf32>
    %266 = arith.negf %265 : vector<2x384xf32>
    %267 = math.exp %266 : vector<2x384xf32>
    %cst_81 = arith.constant 1.000000e+00 : f32
    %268 = vector.broadcast %cst_81 : f32 to vector<2x384xf32>
    %269 = arith.addf %268, %267 : vector<2x384xf32>
    %270 = arith.divf %268, %269 : vector<2x384xf32>
    %271 = vector.extract_strided_slice %270 {offsets = [0, 0], sizes = [2, 128], strides = [1, 1]} : vector<2x384xf32> to vector<2x128xf32>
    %272 = vector.extract_strided_slice %270 {offsets = [0, 128], sizes = [2, 128], strides = [1, 1]} : vector<2x384xf32> to vector<2x128xf32>
    %273 = vector.extract_strided_slice %270 {offsets = [0, 256], sizes = [2, 128], strides = [1, 1]} : vector<2x384xf32> to vector<2x128xf32>
    %274 = vector.extract_strided_slice %264 {offsets = [0, 384], sizes = [2, 128], strides = [1, 1]} : vector<2x512xf32> to vector<2x128xf32>
    %275 = math.tanh %274 : vector<2x128xf32>
    %276 = arith.mulf %272, %256 : vector<2x128xf32>
    %277 = arith.mulf %271, %275 : vector<2x128xf32>
    %278 = arith.addf %276, %277 : vector<2x128xf32>
    %279 = math.tanh %278 : vector<2x128xf32>
    %280 = arith.mulf %273, %279 : vector<2x128xf32>
    %c0_82 = arith.constant 0 : index
    %c1_83 = arith.constant 1 : index
    %c0_84 = arith.constant 0 : index
    %281 = vector.load %arg13[%c0_82, %c1_83, %c0_84] : memref<2x4x128xf32, #tpu.memory_space<vmem>>, vector<2x1x128xf32>
    %282 = vector.shape_cast %281 : vector<2x1x128xf32> to vector<2x128xf32>
    %283 = vector.shape_cast %280 : vector<2x128xf32> to vector<2x1x128xf32>
    tpu.vector_store %arg13[%c0_82, %c1_83, %c0_84], %283 {strides = array<i32>} : memref<2x4x128xf32, #tpu.memory_space<vmem>>, vector<2x1x128xf32>,
    %284 = vector.extract_strided_slice %17 {offsets = [4, 0], sizes = [2, 512], strides = [1, 1]} : vector<8x512xf32> to vector<2x512xf32>
    %cst_85 = arith.constant dense<0.000000e+00> : vector<2x512xf32>
    %285 = tpu.matmul %280, %239, %cst_85 {dimension_numbers = #tpu.dot_dimension_numbers<[1], [0], [0], [1], [0, 0, 1, 1], [], []>} : vector<2x128xf32>, vector<128x512xf32>, vector<2x512xf32> -> vector<2x512xf32>
    %286 = arith.addf %284, %285 : vector<2x512xf32>
    %287 = vector.extract_strided_slice %286 {offsets = [0, 0], sizes = [2, 384], strides = [1, 1]} : vector<2x512xf32> to vector<2x384xf32>
    %288 = arith.negf %287 : vector<2x384xf32>
    %289 = math.exp %288 : vector<2x384xf32>
    %cst_86 = arith.constant 1.000000e+00 : f32
    %290 = vector.broadcast %cst_86 : f32 to vector<2x384xf32>
    %291 = arith.addf %290, %289 : vector<2x384xf32>
    %292 = arith.divf %290, %291 : vector<2x384xf32>
    %293 = vector.extract_strided_slice %292 {offsets = [0, 0], sizes = [2, 128], strides = [1, 1]} : vector<2x384xf32> to vector<2x128xf32>
    %294 = vector.extract_strided_slice %292 {offsets = [0, 128], sizes = [2, 128], strides = [1, 1]} : vector<2x384xf32> to vector<2x128xf32>
    %295 = vector.extract_strided_slice %292 {offsets = [0, 256], sizes = [2, 128], strides = [1, 1]} : vector<2x384xf32> to vector<2x128xf32>
    %296 = vector.extract_strided_slice %286 {offsets = [0, 384], sizes = [2, 128], strides = [1, 1]} : vector<2x512xf32> to vector<2x128xf32>
    %297 = math.tanh %296 : vector<2x128xf32>
    %298 = arith.mulf %294, %278 : vector<2x128xf32>
    %299 = arith.mulf %293, %297 : vector<2x128xf32>
    %300 = arith.addf %298, %299 : vector<2x128xf32>
    %301 = math.tanh %300 : vector<2x128xf32>
    %302 = arith.mulf %295, %301 : vector<2x128xf32>
    %c0_87 = arith.constant 0 : index
    %c2_88 = arith.constant 2 : index
    %c0_89 = arith.constant 0 : index
    %303 = vector.load %arg13[%c0_87, %c2_88, %c0_89] : memref<2x4x128xf32, #tpu.memory_space<vmem>>, vector<2x1x128xf32>
    %304 = vector.shape_cast %303 : vector<2x1x128xf32> to vector<2x128xf32>
    %305 = vector.shape_cast %302 : vector<2x128xf32> to vector<2x1x128xf32>
    tpu.vector_store %arg13[%c0_87, %c2_88, %c0_89], %305 {strides = array<i32>} : memref<2x4x128xf32, #tpu.memory_space<vmem>>, vector<2x1x128xf32>,
    %306 = vector.extract_strided_slice %17 {offsets = [6, 0], sizes = [2, 512], strides = [1, 1]} : vector<8x512xf32> to vector<2x512xf32>
    %cst_90 = arith.constant dense<0.000000e+00> : vector<2x512xf32>
    %307 = tpu.matmul %302, %239, %cst_90 {dimension_numbers = #tpu.dot_dimension_numbers<[1], [0], [0], [1], [0, 0, 1, 1], [], []>} : vector<2x128xf32>, vector<128x512xf32>, vector<2x512xf32> -> vector<2x512xf32>
    %308 = arith.addf %306, %307 : vector<2x512xf32>
    %309 = vector.extract_strided_slice %308 {offsets = [0, 0], sizes = [2, 384], strides = [1, 1]} : vector<2x512xf32> to vector<2x384xf32>
    %310 = arith.negf %309 : vector<2x384xf32>
    %311 = math.exp %310 : vector<2x384xf32>
    %cst_91 = arith.constant 1.000000e+00 : f32
    %312 = vector.broadcast %cst_91 : f32 to vector<2x384xf32>
    %313 = arith.addf %312, %311 : vector<2x384xf32>
    %314 = arith.divf %312, %313 : vector<2x384xf32>
    %315 = vector.extract_strided_slice %314 {offsets = [0, 0], sizes = [2, 128], strides = [1, 1]} : vector<2x384xf32> to vector<2x128xf32>
    %316 = vector.extract_strided_slice %314 {offsets = [0, 128], sizes = [2, 128], strides = [1, 1]} : vector<2x384xf32> to vector<2x128xf32>
    %317 = vector.extract_strided_slice %314 {offsets = [0, 256], sizes = [2, 128], strides = [1, 1]} : vector<2x384xf32> to vector<2x128xf32>
    %318 = vector.extract_strided_slice %308 {offsets = [0, 384], sizes = [2, 128], strides = [1, 1]} : vector<2x512xf32> to vector<2x128xf32>
    %319 = math.tanh %318 : vector<2x128xf32>
    %320 = arith.mulf %316, %300 : vector<2x128xf32>
    %321 = arith.mulf %315, %319 : vector<2x128xf32>
    %322 = arith.addf %320, %321 : vector<2x128xf32>
    %323 = math.tanh %322 : vector<2x128xf32>
    %324 = arith.mulf %317, %323 : vector<2x128xf32>
    %c0_92 = arith.constant 0 : index
    %c3_93 = arith.constant 3 : index
    %c0_94 = arith.constant 0 : index
    %325 = vector.load %arg13[%c0_92, %c3_93, %c0_94] : memref<2x4x128xf32, #tpu.memory_space<vmem>>, vector<2x1x128xf32>
    %326 = vector.shape_cast %325 : vector<2x1x128xf32> to vector<2x128xf32>
    %327 = vector.shape_cast %324 : vector<2x128xf32> to vector<2x1x128xf32>
    tpu.vector_store %arg13[%c0_92, %c3_93, %c0_94], %327 {strides = array<i32>} : memref<2x4x128xf32, #tpu.memory_space<vmem>>, vector<2x1x128xf32>,
    %c1_i32_95 = arith.constant 1 : i32
    %328 = tpu.memref_slice %arg17[%c1_i32_95] : memref<3x!tpu.dma_semaphore, #tpu.memory_space<semaphore_mem>> -> memref<1x!tpu.dma_semaphore, #tpu.memory_space<semaphore_mem>>
    %329 = tpu.memref_squeeze %328 : memref<1x!tpu.dma_semaphore, #tpu.memory_space<semaphore_mem>> -> memref<!tpu.dma_semaphore, #tpu.memory_space<semaphore_mem>>
    tpu.wait_dma2 semaphore(%329 : memref<!tpu.dma_semaphore, #tpu.memory_space<semaphore_mem>>) src(%arg9 : memref<128x128xf32, #tpu.memory_space<any>>) dst(%arg15 : memref<128x128xf32, #tpu.memory_space<vmem>>)
    %c2_i32_96 = arith.constant 2 : i32
    %330 = tpu.memref_slice %arg17[%c2_i32_96] : memref<3x!tpu.dma_semaphore, #tpu.memory_space<semaphore_mem>> -> memref<1x!tpu.dma_semaphore, #tpu.memory_space<semaphore_mem>>
    %331 = tpu.memref_squeeze %330 : memref<1x!tpu.dma_semaphore, #tpu.memory_space<semaphore_mem>> -> memref<!tpu.dma_semaphore, #tpu.memory_space<semaphore_mem>>
    tpu.wait_dma2 semaphore(%331 : memref<!tpu.dma_semaphore, #tpu.memory_space<semaphore_mem>>) src(%arg10 : memref<256x128xf32, #tpu.memory_space<any>>) dst(%arg16 : memref<256x128xf32, #tpu.memory_space<vmem>>)
    %c0_97 = arith.constant 0 : index
    %c0_98 = arith.constant 0 : index
    %c0_99 = arith.constant 0 : index
    %332 = vector.load %arg13[%c0_97, %c0_98, %c0_99] : memref<2x4x128xf32, #tpu.memory_space<vmem>>, vector<2x4x128xf32>
    %c0_100 = arith.constant 0 : index
    %c0_101 = arith.constant 0 : index
    %c0_102 = arith.constant 0 : index
    %333 = vector.load %arg12[%c0_100, %c0_101, %c0_102] : memref<2x8x128xf32, #tpu.memory_space<vmem>>, vector<2x8x128xf32>
    %334 = vector.shape_cast %332 : vector<2x4x128xf32> to vector<8x128xf32>
    %c0_103 = arith.constant 0 : index
    %c0_104 = arith.constant 0 : index
    %335 = vector.load %arg15[%c0_103, %c0_104] : memref<128x128xf32, #tpu.memory_space<vmem>>, vector<128x128xf32>
    %cst_105 = arith.constant dense<0.000000e+00> : vector<8x128xf32>
    %336 = tpu.matmul %334, %335, %cst_105 {dimension_numbers = #tpu.dot_dimension_numbers<[1], [0], [0], [1], [0, 0, 1, 1], [], []>} : vector<8x128xf32>, vector<128x128xf32>, vector<8x128xf32> -> vector<8x128xf32>
    %337 = vector.shape_cast %336 : vector<8x128xf32> to vector<2x4x128xf32>
    "tpu.trace_start"() <{level = 10 : i32, message = "btk,bsk->bts"}> : () -> ()
    %cst_106 = arith.constant dense<0.000000e+00> : vector<2x4x8xf32>
    %338 = tpu.matmul %337, %333, %cst_106 {dimension_numbers = #tpu.dot_dimension_numbers<[2], [2], [1], [1], [0, 0, 0, 1, 1, 1], [0], [0]>} : vector<2x4x128xf32>, vector<2x8x128xf32>, vector<2x4x8xf32> -> vector<2x4x8xf32>
    "tpu.trace_stop"() : () -> ()
    %cst_107 = arith.constant dense<0xFF800000> : vector<2x4xf32>
    %339 = vector.multi_reduction <maximumf>, %338, %cst_107 [2] : vector<2x4x8xf32> to vector<2x4xf32>
    %340 = vector.shape_cast %339 : vector<2x4xf32> to vector<2x4x1xf32>
    %341 = vector.broadcast %340 : vector<2x4x1xf32> to vector<2x4x8xf32>
    %342 = arith.subf %338, %341 : vector<2x4x8xf32>
    %343 = math.exp %342 : vector<2x4x8xf32>
    %cst_108 = arith.constant dense<0.000000e+00> : vector<2x4xf32>
    %344 = vector.multi_reduction <add>, %343, %cst_108 [2] : vector<2x4x8xf32> to vector<2x4xf32>
    %345 = vector.shape_cast %344 : vector<2x4xf32> to vector<2x4x1xf32>
    %346 = vector.broadcast %345 : vector<2x4x1xf32> to vector<2x4x8xf32>
    %347 = arith.divf %343, %346 : vector<2x4x8xf32>
    "tpu.trace_start"() <{level = 10 : i32, message = "bts,bsk->btk"}> : () -> ()
    %cst_109 = arith.constant dense<0.000000e+00> : vector<2x4x128xf32>
    %348 = tpu.matmul %347, %333, %cst_109 {dimension_numbers = #tpu.dot_dimension_numbers<[2], [1], [1], [2], [0, 0, 0, 1, 1, 2], [0], [0]>} : vector<2x4x8xf32>, vector<2x8x128xf32>, vector<2x4x128xf32> -> vector<2x4x128xf32>
    "tpu.trace_stop"() : () -> ()
    %349 = tpu.concatenate %332, %348 in 2 : vector<2x4x128xf32>, vector<2x4x128xf32> -> vector<2x4x256xf32>
    %350 = vector.shape_cast %349 : vector<2x4x256xf32> to vector<8x256xf32>
    %c0_110 = arith.constant 0 : index
    %c0_111 = arith.constant 0 : index
    %351 = vector.load %arg16[%c0_110, %c0_111] : memref<256x128xf32, #tpu.memory_space<vmem>>, vector<256x128xf32>
    %cst_112 = arith.constant dense<0.000000e+00> : vector<8x128xf32>
    %352 = tpu.matmul %350, %351, %cst_112 {dimension_numbers = #tpu.dot_dimension_numbers<[1], [0], [0], [1], [0, 0, 1, 1], [], []>} : vector<8x256xf32>, vector<256x128xf32>, vector<8x128xf32> -> vector<8x128xf32>
    %c0_113 = arith.constant 0 : index
    %c0_114 = arith.constant 0 : index
    %353 = vector.load %arg7[%c0_113, %c0_114] : memref<1x128xf32, #tpu.memory_space<vmem>>, vector<1x128xf32>
    %354 = vector.broadcast %353 : vector<1x128xf32> to vector<8x128xf32>
    %355 = arith.addf %352, %354 : vector<8x128xf32>
    %c0_115 = arith.constant 0 : index
    %c0_116 = arith.constant 0 : index
    %356 = vector.load %arg11[%c0_115, %c0_116] : memref<8x128xf32, #tpu.memory_space<vmem>>, vector<8x128xf32>
    tpu.vector_store %arg11[%c0_115, %c0_116], %355 {strides = array<i32>} : memref<8x128xf32, #tpu.memory_space<vmem>>, vector<8x128xf32>,
    return
  }
}

</mosaic_0001>

<llo_original>
// kernel: seq2seq_forward.1
$region0: #{seq2seq_forward.1}
  #allocation0 [shape = 'u32[]', space=smem, size = 0x4, offset = 0x4, fixed_abs, tag = 'smem constant byte address 0x4 - core index']
  #allocation1 [shape = 'u32[144,128]{1,0:T(1,128)}', space=vmem, size = 0x12000, scoped, tag = 'internal scratch']
  #allocation2 [shape = 'f32[2,8,128]{2,1,0:T(8,128)}', space=vmem, size = 0x2000, scoped, tag = 'scratch operand']
  #allocation3 [shape = 'f32[2,4,128]{2,1,0:T(4,128)}', space=vmem, size = 0x1000, scoped, tag = 'scratch operand']
  #allocation4 [shape = 'f32[128,512]{1,0:T(8,128)}', space=vmem, size = 0x40000, scoped, tag = 'scratch operand']
  #allocation5 [shape = 'f32[128,128]{1,0:T(8,128)}', space=vmem, size = 0x10000, scoped, tag = 'scratch operand']
  #allocation6 [shape = 'f32[256,128]{1,0:T(8,128)}', space=vmem, size = 0x20000, scoped, tag = 'scratch operand']
  #allocation7 [shape = 's32[3]{0}', space=sflag, size = 0xc, scoped, tag = 'scratch operand']
  #allocation14 [shape = 's32[]', space=sflag, size = 0x4, offset = 0, fixed_abs, tag = 'sflag constant byte address 0x0 - dummy sync flag']
  #allocation15 [shape = 's32[]', space=sflag, size = 0x4, offset = 0, fixed_abs, tag = 'sflag constant byte address 0x0 - dummy sync flag']
  #allocation16 [shape = 'u32[]', space=smem, size = 0x4, offset = 0x44, fixed_abs, tag = 'smem constant byte address 0x44 - assertion arg 0']
  #allocation17 [shape = 'u32[]', space=smem, size = 0x4, offset = 0x48, fixed_abs, tag = 'smem constant byte address 0x48 - assertion arg 1']
  #allocation18 [shape = 's32[]', space=sflag, size = 0x4, offset = 0, fixed_abs, tag = 'sflag constant byte address 0x0 - dummy sync flag']
  #allocation19 [shape = 's32[]', space=sflag, size = 0x4, offset = 0, fixed_abs, tag = 'sflag constant byte address 0x0 - dummy sync flag']
  #allocation20 [shape = 's32[]', space=sflag, size = 0x4, offset = 0, fixed_abs, tag = 'sflag constant byte address 0x0 - dummy sync flag']
  #allocation21 [shape = 's32[]', space=sflag, size = 0x4, offset = 0, fixed_abs, tag = 'sflag constant byte address 0x0 - dummy sync flag']
  %s0 = inlined_call_operand.vmem [shape: f32[16,16], index: 0, kind: input, shape index: {}]
  %s1 = inlined_call_operand.vmem [shape: f32[8,8], index: 1, kind: input, shape index: {}]
  %s2 = inlined_call_operand.hbm [shape: f32[16,512], index: 2, kind: input, shape index: {}]
  %s3 = inlined_call_operand.vmem [shape: f32[1,512], index: 3, kind: input, shape index: {}]
  %s4 = inlined_call_operand.hbm [shape: f32[8,512], index: 4, kind: input, shape index: {}]
  %s5 = inlined_call_operand.vmem [shape: f32[1,512], index: 5, kind: input, shape index: {}]
  %s6 = inlined_call_operand.vmem [shape: f32[128,512], index: 6, kind: input, shape index: {}]
  %s7 = inlined_call_operand.vmem [shape: f32[1,128], index: 7, kind: input, shape index: {}]
  %s8 = inlined_call_operand.hbm [shape: f32[128,512], index: 8, kind: input, shape index: {}]
  %s9 = inlined_call_operand.hbm [shape: f32[128,128], index: 9, kind: input, shape index: {}]
  %s10 = inlined_call_operand.hbm [shape: f32[256,128], index: 10, kind: input, shape index: {}]
  %s11 = inlined_call_operand.hbm [shape: f32[8,128], index: 11, kind: output, shape index: {}]
  %s12 = sld [smem:[#allocation0]]
  $region62: #{seq2seq_forward.1} parent=0
    _
  %s14 = ssub.s32 1, %s12
  %s15 = scalar_select 0, %s14, %s12
  $region1: #{seq2seq_forward.1} parent=0
    #allocation8 [shape = 'u8[32768]{0}', space=vmem, size = 0x8000, scoped, tag = 'input window, operand 2, single buffered']
    #allocation9 [shape = 's32[1]{0}', space=sflag, size = 0x4, scoped, tag = 'scoped memory for seq2seq_forward.1']
    #allocation10 [shape = 's32[1]{0}', space=sflag, size = 0x4, scoped, tag = 'scoped memory for seq2seq_forward.1']
    #allocation11 [shape = 'u8[16384]{0}', space=vmem, size = 0x4000, scoped, tag = 'input window, operand 4, single buffered']
    #allocation12 [shape = 's32[1]{0}', space=sflag, size = 0x4, scoped, tag = 'scoped memory for seq2seq_forward.1']
    #allocation13 [shape = 'u8[4096]{0}', space=vmem, size = 0x1000, scoped, tag = 'output window, operand 0, single buffered']
    %16 = vsyncpa [#allocation9], 0
    %17 = vsyncpa [#allocation12], 0
    %18 = vsyncpa [#allocation10], 0
    // Predicated region
    $region2: #{seq2seq_forward.1} parent=1 // pred_check
      _
    $region3: #{seq2seq_forward.1} parent=1 // pred_check_branch
      %20 = sbr.rel (0) target = $region5
    $region4: #{seq2seq_forward.1} parent=1 // pred_region
      _
    $region5: #{seq2seq_forward.1} parent=1 // pred_fallthru
      _
    // Predicated region
    $region6: #{seq2seq_forward.1} parent=1 // pred_check
      _
    $region7: #{seq2seq_forward.1} parent=1 // pred_check_branch
      %22 = sbr.rel (0) target = $region9
    $region8: #{seq2seq_forward.1} parent=1 // pred_region
      _
    $region9: #{seq2seq_forward.1} parent=1 // pred_fallthru
      _
    // Predicated region
    $region10: #{seq2seq_forward.1} parent=1 // pred_check
      _
    $region11: #{seq2seq_forward.1} parent=1 // pred_check_branch
      %24 = sbr.rel (0) target = $region13
    $region12: #{seq2seq_forward.1} parent=1 // pred_region
      %s26 = ssub.s32 1024, 1024
      %27 = vsyncadd [#allocation9], %s26
      %s28 = sshll.u32 [#allocation8], 4
      %s29 = int_to_ptr.vmem [resolvable:$true] %s28
      %34 = dma.hbm_to_vmem [thread:$0]  %s2, 1024, %s29, [#allocation9], 512, 512, 32
    $region13: #{seq2seq_forward.1} parent=1 // pred_fallthru
      _
    // Predicated region
    $region14: #{seq2seq_forward.1} parent=1 // pred_check
      _
    $region15: #{seq2seq_forward.1} parent=1 // pred_check_branch
      %36 = sbr.rel (0) target = $region17
    $region16: #{seq2seq_forward.1} parent=1 // pred_region
      _
    $region17: #{seq2seq_forward.1} parent=1 // pred_fallthru
      _
    // Predicated region
    $region18: #{seq2seq_forward.1} parent=1 // pred_check
      _
    $region19: #{seq2seq_forward.1} parent=1 // pred_check_branch
      %38 = sbr.rel (0) target = $region21
    $region20: #{seq2seq_forward.1} parent=1 // pred_region
      %s40 = ssub.s32 512, 512
      %41 = vsyncadd [#allocation12], %s40
      %s43 = sshll.u32 [#allocation11], 4
      %s44 = int_to_ptr.vmem [resolvable:$true] %s43
      %46 = dma.hbm_to_vmem [thread:$0]  %s4, 512, %s44, [#allocation12]
    $region21: #{seq2seq_forward.1} parent=1 // pred_fallthru
      _
    // Predicated region
    $region22: #{seq2seq_forward.1} parent=1 // pred_check
      _
    $region23: #{seq2seq_forward.1} parent=1 // pred_check_branch
      %48 = sbr.rel (0) target = $region25
    $region24: #{seq2seq_forward.1} parent=1 // pred_region
      _
    $region25: #{seq2seq_forward.1} parent=1 // pred_fallthru
      _
    // Predicated region
    $region26: #{seq2seq_forward.1} parent=1 // pred_check
      _
    $region27: #{seq2seq_forward.1} parent=1 // pred_check_branch
      %50 = sbr.rel (0) target = $region29
    $region28: #{seq2seq_forward.1} parent=1 // pred_region
      _
    $region29: #{seq2seq_forward.1} parent=1 // pred_fallthru
      _
    // Predicated region
    $region30: #{seq2seq_forward.1} parent=1 // pred_check
      _
    $region31: #{seq2seq_forward.1} parent=1 // pred_check_branch
      %52 = sbr.rel (0) target = $region33
    $region32: #{seq2seq_forward.1} parent=1 // pred_region
      _
    $region33: #{seq2seq_forward.1} parent=1 // pred_fallthru
      _
    // Predicated region
    $region34: #{seq2seq_forward.1} parent=1 // pred_check
      _
    $region35: #{seq2seq_forward.1} parent=1 // pred_check_branch
      %54 = sbr.rel (0) target = $region37
    $region36: #{seq2seq_forward.1} parent=1 // pred_region
      %55 = dma.done [#allocation9], 1024
    $region37: #{seq2seq_forward.1} parent=1 // pred_fallthru
      _
    // Predicated region
    $region38: #{seq2seq_forward.1} parent=1 // pred_check
      _
    $region39: #{seq2seq_forward.1} parent=1 // pred_check_branch
      %57 = sbr.rel (0) target = $region41
    $region40: #{seq2seq_forward.1} parent=1 // pred_region
      %58 = dma.done [#allocation12], 512
    $region41: #{seq2seq_forward.1} parent=1 // pred_fallthru
      _
    // Predicated region
    $region42: #{seq2seq_forward.1} parent=1 // pred_check
      _
    $region43: #{seq2seq_forward.1} parent=1 // pred_check_branch
      %60 = sbr.rel target = $region45
    $region44: #{seq2seq_forward.1} parent=1 // pred_region
      %61 = sst [smem:[#allocation16]] [#allocation15]
      %62 = sst [smem:[#allocation17]] [#allocation14]
    $region45: #{seq2seq_forward.1} parent=1 // pred_fallthru
      _
    %64 = shalt.err (0)
    %s66 = sshll.u32 [#allocation4], 4
    %s67 = int_to_ptr.vmem [resolvable:$true] %s66
    %69 = dma.hbm_to_vmem [thread:$0]  %s8, 8192, %s67, [#allocation7]
    %s70 = scalar_lea.sflag [#allocation7], 1
    // Predicated region
    $region46: #{seq2seq_forward.1} parent=1 // pred_check
      _
    $region47: #{seq2seq_forward.1} parent=1 // pred_check_branch
      %72 = sbr.rel target = $region49
    $region48: #{seq2seq_forward.1} parent=1 // pred_region
      %73 = sst [smem:[#allocation16]] [#allocation19]
      %74 = sst [smem:[#allocation17]] [#allocation18]
    $region49: #{seq2seq_forward.1} parent=1 // pred_fallthru
      _
    %76 = shalt.err (0)
    %s78 = sshll.u32 [#allocation5], 4
    %s79 = int_to_ptr.vmem [resolvable:$true] %s78
    %81 = dma.hbm_to_vmem [thread:$0]  %s9, 2048, %s79, %s70
    %s82 = scalar_lea.sflag [#allocation7], 2
    // Predicated region
    $region50: #{seq2seq_forward.1} parent=1 // pred_check
      _
    $region51: #{seq2seq_forward.1} parent=1 // pred_check_branch
      %84 = sbr.rel target = $region53
    $region52: #{seq2seq_forward.1} parent=1 // pred_region
      %85 = sst [smem:[#allocation16]] [#allocation21]
      %86 = sst [smem:[#allocation17]] [#allocation20]
    $region53: #{seq2seq_forward.1} parent=1 // pred_fallthru
      _
    %88 = shalt.err (0)
    %s90 = sshll.u32 [#allocation6], 4
    %s91 = int_to_ptr.vmem [resolvable:$true] %s90
    %93 = dma.hbm_to_vmem [thread:$0]  %s10, 4096, %s91, %s82
    %v94 = vld [vmem:[%s0] sm:$0xff]
    %v95 = vld [vmem:[%s0 + $0x8] sm:$0xff]
    %v96 = vld [vmem:[#allocation8] sm:$0xff]
    %v97 = vld [vmem:[#allocation8 + $0x8] sm:$0xff]
    %v98 = vld [vmem:[#allocation8 + $0x10] sm:$0xff]
    %v99 = vld [vmem:[#allocation8 + $0x18] sm:$0xff]
    %v100 = vld [vmem:[#allocation8 + $0x20] sm:$0xff]
    %v101 = vld [vmem:[#allocation8 + $0x28] sm:$0xff]
    %v102 = vld [vmem:[#allocation8 + $0x30] sm:$0xff]
    %v103 = vld [vmem:[#allocation8 + $0x38] sm:$0xff]
    %v104 = vld [vmem:[%s3] sm:$0xf]
    %v106 = vlaneseq
    %v107 = vshrl.u32 %v106, 7
    %v108 = vsub.s32 0, %v107
    %v109 = vrot.slane %v104, %v108
    %v110 = vlaneseq
    %v111 = vshrl.u32 %v110, 7
    %v112 = vsub.s32 1, %v111
    %v113 = vrot.slane %v104, %v112
    %v114 = vlaneseq
    %v115 = vshrl.u32 %v114, 7
    %v116 = vsub.s32 2, %v115
    %v117 = vrot.slane %v104, %v116
    %v118 = vlaneseq
    %v119 = vshrl.u32 %v118, 7
    %v120 = vsub.s32 3, %v119
    %v121 = vrot.slane %v104, %v120
    %vm126 = vcmask 130048
    %v128 = vsel %vm126, %v94, 0
    %v131 = vsel %vm126, %v95, 0
    %133 = vmatprep.subr.mxu0 %v97
    %134 = vmatpush1.msra.mxu0 %v96
    %135 = vmatprep.subr.mxu0 %v101
    %136 = vmatpush1.msra.mxu0 %v100
    %137 = vmatprep.subr.mxu0 0.0
    %138 = vmatpush1.msra.mxu0 0.0
    %139 = vmatprep.subr.mxu0 0.0
    %140 = vmatpush1.msra.mxu0 0.0
    %141 = vmatprep.subr.mxu0 0.0
    %142 = vmatpush1.msra.mxu0 0.0
    %143 = vmatprep.subr.mxu0 0.0
    %144 = vmatpush1.msra.mxu0 0.0
    %145 = vmatprep.subr.mxu0 0.0
    %146 = vmatpush1.msra.mxu0 0.0
    %147 = vmatprep.subr.mxu0 0.0
    %148 = vmatpush1.msra.mxu0 0.0
    %149 = vmatprep.subr.mxu0 0.0
    %150 = vmatpush1.msra.mxu0 0.0
    %151 = vmatprep.subr.mxu0 0.0
    %152 = vmatpush1.msra.mxu0 0.0
    %153 = vmatprep.subr.mxu0 0.0
    %154 = vmatpush1.msra.mxu0 0.0
    %155 = vmatprep.subr.mxu0 0.0
    %156 = vmatpush1.msra.mxu0 0.0
    %157 = vmatprep.subr.mxu0 0.0
    %158 = vmatpush1.msra.mxu0 0.0
    %159 = vmatprep.subr.mxu0 0.0
    %160 = vmatpush1.msra.mxu0 0.0
    %161 = vmatprep.subr.mxu0 0.0
    %162 = vmatpush1.msra.mxu0 0.0
    %163 = vmatprep.subr.mxu0 0.0
    %164 = vmatpush1.msra.mxu0 0.0
    %165 = vmatprep.subr.mxu0 0.0
    %166 = vmatpush1.msra.mxu0 0.0
    %167 = vmatprep.subr.mxu0 0.0
    %168 = vmatpush1.msra.mxu0 0.0
    %169 = vmatprep.subr.mxu0 0.0
    %170 = vmatpush1.msra.mxu0 0.0
    %171 = vmatprep.subr.mxu0 0.0
    %172 = vmatpush1.msra.mxu0 0.0
    %173 = vmatprep.subr.mxu0 0.0
    %174 = vmatpush1.msra.mxu0 0.0
    %175 = vmatprep.subr.mxu0 0.0
    %176 = vmatpush1.msra.mxu0 0.0
    %177 = vmatprep.subr.mxu0 0.0
    %178 = vmatpush1.msra.mxu0 0.0
    %179 = vmatprep.subr.mxu0 0.0
    %180 = vmatpush1.msra.mxu0 0.0
    %181 = vmatprep.subr.mxu0 0.0
    %182 = vmatpush1.msra.mxu0 0.0
    %183 = vmatprep.subr.mxu0 0.0
    %184 = vmatpush1.msra.mxu0 0.0
    %185 = vmatprep.subr.mxu0 0.0
    %186 = vmatpush1.msra.mxu0 0.0
    %187 = vmatprep.subr.mxu0 0.0
    %188 = vmatpush1.msra.mxu0 0.0
    %189 = vmatprep.subr.mxu0 0.0
    %190 = vmatpush1.msra.mxu0 0.0
    %191 = vmatprep.subr.mxu0 0.0
    %192 = vmatpush1.msra.mxu0 0.0
    %193 = vmatprep.subr.mxu0 0.0
    %194 = vmatpush1.msra.mxu0 0.0
    %195 = vmatprep.subr.mxu0 0.0
    %196 = vmatpush1.msra.mxu0 0.0
    %197 = vmatprep.mubr.f32.mxu0 0.0
    %198 = vmatmul.mubr.f32.gmra.mrb[0].mxu0 %v128
    %v199 = vpop.f32.mrb[0].mxu0
    %v200 = vadd.f32 %v109, %v199
    %v201 = vpop.f32.mrb[0].mxu0
    %v202 = vadd.f32 %v113, %v201
    %203 = vmatprep.mubr.f32.mxu0 0.0
    %204 = vmatmul.mubr.f32.gmra.mrb[0].mxu0 %v131
    %v205 = vpop.f32.mrb[0].mxu0
    %v206 = vadd.f32 %v109, %v205
    %v207 = vpop.f32.mrb[0].mxu0
    %v208 = vadd.f32 %v113, %v207
    %209 = vdwg.mxu0
    %210 = vmatprep.subr.mxu0 %v99
    %211 = vmatpush1.msra.mxu0 %v98
    %212 = vmatprep.subr.mxu0 %v103
    %213 = vmatpush1.msra.mxu0 %v102
    %214 = vmatprep.subr.mxu0 0.0
    %215 = vmatpush1.msra.mxu0 0.0
    %216 = vmatprep.subr.mxu0 0.0
    %217 = vmatpush1.msra.mxu0 0.0
    %218 = vmatprep.subr.mxu0 0.0
    %219 = vmatpush1.msra.mxu0 0.0
    %220 = vmatprep.subr.mxu0 0.0
    %221 = vmatpush1.msra.mxu0 0.0
    %222 = vmatprep.subr.mxu0 0.0
    %223 = vmatpush1.msra.mxu0 0.0
    %224 = vmatprep.subr.mxu0 0.0
    %225 = vmatpush1.msra.mxu0 0.0
    %226 = vmatprep.subr.mxu0 0.0
    %227 = vmatpush1.msra.mxu0 0.0
    %228 = vmatprep.subr.mxu0 0.0
    %229 = vmatpush1.msra.mxu0 0.0
    %230 = vmatprep.subr.mxu0 0.0
    %231 = vmatpush1.msra.mxu0 0.0
    %232 = vmatprep.subr.mxu0 0.0
    %233 = vmatpush1.msra.mxu0 0.0
    %234 = vmatprep.subr.mxu0 0.0
    %235 = vmatpush1.msra.mxu0 0.0
    %236 = vmatprep.subr.mxu0 0.0
    %237 = vmatpush1.msra.mxu0 0.0
    %238 = vmatprep.subr.mxu0 0.0
    %239 = vmatpush1.msra.mxu0 0.0
    %240 = vmatprep.subr.mxu0 0.0
    %241 = vmatpush1.msra.mxu0 0.0
    %242 = vmatprep.subr.mxu0 0.0
    %243 = vmatpush1.msra.mxu0 0.0
    %244 = vmatprep.subr.mxu0 0.0
    %245 = vmatpush1.msra.mxu0 0.0
    %246 = vmatprep.subr.mxu0 0.0
    %247 = vmatpush1.msra.mxu0 0.0
    %248 = vmatprep.subr.mxu0 0.0
    %249 = vmatpush1.msra.mxu0 0.0
    %250 = vmatprep.subr.mxu0 0.0
    %251 = vmatpush1.msra.mxu0 0.0
    %252 = vmatprep.subr.mxu0 0.0
    %253 = vmatpush1.msra.mxu0 0.0
    %254 = vmatprep.subr.mxu0 0.0
    %255 = vmatpush1.msra.mxu0 0.0
    %256 = vmatprep.subr.mxu0 0.0
    %257 = vmatpush1.msra.mxu0 0.0
    %258 = vmatprep.subr.mxu0 0.0
    %259 = vmatpush1.msra.mxu0 0.0
    %260 = vmatprep.subr.mxu0 0.0
    %261 = vmatpush1.msra.mxu0 0.0
    %262 = vmatprep.subr.mxu0 0.0
    %263 = vmatpush1.msra.mxu0 0.0
    %264 = vmatprep.subr.mxu0 0.0
    %265 = vmatpush1.msra.mxu0 0.0
    %266 = vmatprep.subr.mxu0 0.0
    %267 = vmatpush1.msra.mxu0 0.0
    %268 = vmatprep.subr.mxu0 0.0
    %269 = vmatpush1.msra.mxu0 0.0
    %270 = vmatprep.subr.mxu0 0.0
    %271 = vmatpush1.msra.mxu0 0.0
    %272 = vmatprep.subr.mxu0 0.0
    %273 = vmatpush1.msra.mxu0 0.0
    %274 = vmatprep.mubr.f32.mxu0 0.0
    %275 = vmatmul.mubr.f32.gmra.mrb[0].mxu0 %v128
    %v276 = vpop.f32.mrb[0].mxu0
    %v277 = vadd.f32 %v117, %v276
    %v278 = vpop.f32.mrb[0].mxu0
    %v279 = vadd.f32 %v121, %v278
    %280 = vmatprep.mubr.f32.mxu0 0.0
    %281 = vmatmul.mubr.f32.gmra.mrb[0].mxu0 %v131
    %v282 = vpop.f32.mrb[0].mxu0
    %v283 = vadd.f32 %v117, %v282
    %v284 = vpop.f32.mrb[0].mxu0
    %v285 = vadd.f32 %v121, %v284
    %286 = vdwg.mxu0
    %v287 = vld [vmem:[%s1] sm:$0xff]
    %v288 = vld [vmem:[#allocation11] sm:$0xff]
    %v289 = vld [vmem:[#allocation11 + $0x8] sm:$0xff]
    %v290 = vld [vmem:[#allocation11 + $0x10] sm:$0xff]
    %v291 = vld [vmem:[#allocation11 + $0x18] sm:$0xff]
    %v292 = vld [vmem:[%s5] sm:$0xf]
    %v294 = vlaneseq
    %v295 = vshrl.u32 %v294, 7
    %v296 = vsub.s32 0, %v295
    %v297 = vrot.slane %v292, %v296
    %v298 = vlaneseq
    %v299 = vshrl.u32 %v298, 7
    %v300 = vsub.s32 1, %v299
    %v301 = vrot.slane %v292, %v300
    %v302 = vlaneseq
    %v303 = vshrl.u32 %v302, 7
    %v304 = vsub.s32 2, %v303
    %v305 = vrot.slane %v292, %v304
    %v306 = vlaneseq
    %v307 = vshrl.u32 %v306, 7
    %v308 = vsub.s32 3, %v307
    %v309 = vrot.slane %v292, %v308
    %vm314 = vcmask 64512
    %v316 = vsel %vm314, %v287, 0
    %318 = vmatprep.subr.mxu0 %v289
    %319 = vmatpush1.msra.mxu0 %v288
    %320 = vmatprep.subr.mxu0 0.0
    %321 = vmatpush1.msra.mxu0 0.0
    %322 = vmatprep.subr.mxu0 0.0
    %323 = vmatpush1.msra.mxu0 0.0
    %324 = vmatprep.subr.mxu0 0.0
    %325 = vmatpush1.msra.mxu0 0.0
    %326 = vmatprep.subr.mxu0 0.0
    %327 = vmatpush1.msra.mxu0 0.0
    %328 = vmatprep.subr.mxu0 0.0
    %329 = vmatpush1.msra.mxu0 0.0
    %330 = vmatprep.subr.mxu0 0.0
    %331 = vmatpush1.msra.mxu0 0.0
    %332 = vmatprep.subr.mxu0 0.0
    %333 = vmatpush1.msra.mxu0 0.0
    %334 = vmatprep.subr.mxu0 0.0
    %335 = vmatpush1.msra.mxu0 0.0
    %336 = vmatprep.subr.mxu0 0.0
    %337 = vmatpush1.msra.mxu0 0.0
    %338 = vmatprep.subr.mxu0 0.0
    %339 = vmatpush1.msra.mxu0 0.0
    %340 = vmatprep.subr.mxu0 0.0
    %341 = vmatpush1.msra.mxu0 0.0
    %342 = vmatprep.subr.mxu0 0.0
    %343 = vmatpush1.msra.mxu0 0.0
    %344 = vmatprep.subr.mxu0 0.0
    %345 = vmatpush1.msra.mxu0 0.0
    %346 = vmatprep.subr.mxu0 0.0
    %347 = vmatpush1.msra.mxu0 0.0
    %348 = vmatprep.subr.mxu0 0.0
    %349 = vmatpush1.msra.mxu0 0.0
    %350 = vmatprep.subr.mxu0 0.0
    %351 = vmatpush1.msra.mxu0 0.0
    %352 = vmatprep.subr.mxu0 0.0
    %353 = vmatpush1.msra.mxu0 0.0
    %354 = vmatprep.subr.mxu0 0.0
    %355 = vmatpush1.msra.mxu0 0.0
    %356 = vmatprep.subr.mxu0 0.0
    %357 = vmatpush1.msra.mxu0 0.0
    %358 = vmatprep.subr.mxu0 0.0
    %359 = vmatpush1.msra.mxu0 0.0
    %360 = vmatprep.subr.mxu0 0.0
    %361 = vmatpush1.msra.mxu0 0.0
    %362 = vmatprep.subr.mxu0 0.0
    %363 = vmatpush1.msra.mxu0 0.0
    %364 = vmatprep.subr.mxu0 0.0
    %365 = vmatpush1.msra.mxu0 0.0
    %366 = vmatprep.subr.mxu0 0.0
    %367 = vmatpush1.msra.mxu0 0.0
    %368 = vmatprep.subr.mxu0 0.0
    %369 = vmatpush1.msra.mxu0 0.0
    %370 = vmatprep.subr.mxu0 0.0
    %371 = vmatpush1.msra.mxu0 0.0
    %372 = vmatprep.subr.mxu0 0.0
    %373 = vmatpush1.msra.mxu0 0.0
    %374 = vmatprep.subr.mxu0 0.0
    %375 = vmatpush1.msra.mxu0 0.0
    %376 = vmatprep.subr.mxu0 0.0
    %377 = vmatpush1.msra.mxu0 0.0
    %378 = vmatprep.subr.mxu0 0.0
    %379 = vmatpush1.msra.mxu0 0.0
    %380 = vmatprep.subr.mxu0 0.0
    %381 = vmatpush1.msra.mxu0 0.0
    %382 = vmatprep.mubr.f32.mxu0 0.0
    %383 = vmatmul.mubr.f32.gmra.mrb[0].mxu0 %v316
    %v384 = vpop.f32.mrb[0].mxu0
    %v385 = vadd.f32 %v297, %v384
    %v386 = vpop.f32.mrb[0].mxu0
    %v387 = vadd.f32 %v301, %v386
    %388 = vdwg.mxu0
    %389 = vmatprep.subr.mxu0 %v291
    %390 = vmatpush1.msra.mxu0 %v290
    %391 = vmatprep.subr.mxu0 0.0
    %392 = vmatpush1.msra.mxu0 0.0
    %393 = vmatprep.subr.mxu0 0.0
    %394 = vmatpush1.msra.mxu0 0.0
    %395 = vmatprep.subr.mxu0 0.0
    %396 = vmatpush1.msra.mxu0 0.0
    %397 = vmatprep.subr.mxu0 0.0
    %398 = vmatpush1.msra.mxu0 0.0
    %399 = vmatprep.subr.mxu0 0.0
    %400 = vmatpush1.msra.mxu0 0.0
    %401 = vmatprep.subr.mxu0 0.0
    %402 = vmatpush1.msra.mxu0 0.0
    %403 = vmatprep.subr.mxu0 0.0
    %404 = vmatpush1.msra.mxu0 0.0
    %405 = vmatprep.subr.mxu0 0.0
    %406 = vmatpush1.msra.mxu0 0.0
    %407 = vmatprep.subr.mxu0 0.0
    %408 = vmatpush1.msra.mxu0 0.0
    %409 = vmatprep.subr.mxu0 0.0
    %410 = vmatpush1.msra.mxu0 0.0
    %411 = vmatprep.subr.mxu0 0.0
    %412 = vmatpush1.msra.mxu0 0.0
    %413 = vmatprep.subr.mxu0 0.0
    %414 = vmatpush1.msra.mxu0 0.0
    %415 = vmatprep.subr.mxu0 0.0
    %416 = vmatpush1.msra.mxu0 0.0
    %417 = vmatprep.subr.mxu0 0.0
    %418 = vmatpush1.msra.mxu0 0.0
    %419 = vmatprep.subr.mxu0 0.0
    %420 = vmatpush1.msra.mxu0 0.0
    %421 = vmatprep.subr.mxu0 0.0
    %422 = vmatpush1.msra.mxu0 0.0
    %423 = vmatprep.subr.mxu0 0.0
    %424 = vmatpush1.msra.mxu0 0.0
    %425 = vmatprep.subr.mxu0 0.0
    %426 = vmatpush1.msra.mxu0 0.0
    %427 = vmatprep.subr.mxu0 0.0
    %428 = vmatpush1.msra.mxu0 0.0
    %429 = vmatprep.subr.mxu0 0.0
    %430 = vmatpush1.msra.mxu0 0.0
    %431 = vmatprep.subr.mxu0 0.0
    %432 = vmatpush1.msra.mxu0 0.0
    %433 = vmatprep.subr.mxu0 0.0
    %434 = vmatpush1.msra.mxu0 0.0
    %435 = vmatprep.subr.mxu0 0.0
    %436 = vmatpush1.msra.mxu0 0.0
    %437 = vmatprep.subr.mxu0 0.0
    %438 = vmatpush1.msra.mxu0 0.0
    %439 = vmatprep.subr.mxu0 0.0
    %440 = vmatpush1.msra.mxu0 0.0
    %441 = vmatprep.subr.mxu0 0.0
    %442 = vmatpush1.msra.mxu0 0.0
    %443 = vmatprep.subr.mxu0 0.0
    %444 = vmatpush1.msra.mxu0 0.0
    %445 = vmatprep.subr.mxu0 0.0
    %446 = vmatpush1.msra.mxu0 0.0
    %447 = vmatprep.subr.mxu0 0.0
    %448 = vmatpush1.msra.mxu0 0.0
    %449 = vmatprep.subr.mxu0 0.0
    %450 = vmatpush1.msra.mxu0 0.0
    %451 = vmatprep.subr.mxu0 0.0
    %452 = vmatpush1.msra.mxu0 0.0
    %453 = vmatprep.mubr.f32.mxu0 0.0
    %454 = vmatmul.mubr.f32.gmra.mrb[0].mxu0 %v316
    %v455 = vpop.f32.mrb[0].mxu0
    %v456 = vadd.f32 %v305, %v455
    %v457 = vpop.f32.mrb[0].mxu0
    %v458 = vadd.f32 %v309, %v457
    %459 = vdwg.mxu0
    %v460 = vld [vmem:[%s6] sm:$0xff]
    %v461 = vld [vmem:[%s6 + $0x8] sm:$0xff]
    %v462 = vld [vmem:[%s6 + $0x10] sm:$0xff]
    %v463 = vld [vmem:[%s6 + $0x18] sm:$0xff]
    %v464 = vld [vmem:[%s6 + $0x20] sm:$0xff]
    %v465 = vld [vmem:[%s6 + $0x28] sm:$0xff]
    %v466 = vld [vmem:[%s6 + $0x30] sm:$0xff]
    %v467 = vld [vmem:[%s6 + $0x38] sm:$0xff]
    %v468 = vld [vmem:[%s6 + $0x40] sm:$0xff]
    %v469 = vld [vmem:[%s6 + $0x48] sm:$0xff]
    %v470 = vld [vmem:[%s6 + $0x50] sm:$0xff]
    %v471 = vld [vmem:[%s6 + $0x58] sm:$0xff]
    %v472 = vld [vmem:[%s6 + $0x60] sm:$0xff]
    %v473 = vld [vmem:[%s6 + $0x68] sm:$0xff]
    %v474 = vld [vmem:[%s6 + $0x70] sm:$0xff]
    %v475 = vld [vmem:[%s6 + $0x78] sm:$0xff]
    %v476 = vld [vmem:[%s6 + $0x80] sm:$0xff]
    %v477 = vld [vmem:[%s6 + $0x88] sm:$0xff]
    %v478 = vld [vmem:[%s6 + $0x90] sm:$0xff]
    %v479 = vld [vmem:[%s6 + $0x98] sm:$0xff]
    %v480 = vld [vmem:[%s6 + $0xa0] sm:$0xff]
    %v481 = vld [vmem:[%s6 + $0xa8] sm:$0xff]
    %v482 = vld [vmem:[%s6 + $0xb0] sm:$0xff]
    %v483 = vld [vmem:[%s6 + $0xb8] sm:$0xff]
    %v484 = vld [vmem:[%s6 + $0xc0] sm:$0xff]
    %v485 = vld [vmem:[%s6 + $0xc8] sm:$0xff]
    %v486 = vld [vmem:[%s6 + $0xd0] sm:$0xff]
    %v487 = vld [vmem:[%s6 + $0xd8] sm:$0xff]
    %v488 = vld [vmem:[%s6 + $0xe0] sm:$0xff]
    %v489 = vld [vmem:[%s6 + $0xe8] sm:$0xff]
    %v490 = vld [vmem:[%s6 + $0xf0] sm:$0xff]
    %v491 = vld [vmem:[%s6 + $0xf8] sm:$0xff]
    %v492 = vld [vmem:[%s6 + $0x100] sm:$0xff]
    %v493 = vld [vmem:[%s6 + $0x108] sm:$0xff]
    %v494 = vld [vmem:[%s6 + $0x110] sm:$0xff]
    %v495 = vld [vmem:[%s6 + $0x118] sm:$0xff]
    %v496 = vld [vmem:[%s6 + $0x120] sm:$0xff]
    %v497 = vld [vmem:[%s6 + $0x128] sm:$0xff]
    %v498 = vld [vmem:[%s6 + $0x130] sm:$0xff]
    %v499 = vld [vmem:[%s6 + $0x138] sm:$0xff]
    %v500 = vld [vmem:[%s6 + $0x140] sm:$0xff]
    %v501 = vld [vmem:[%s6 + $0x148] sm:$0xff]
    %v502 = vld [vmem:[%s6 + $0x150] sm:$0xff]
    %v503 = vld [vmem:[%s6 + $0x158] sm:$0xff]
    %v504 = vld [vmem:[%s6 + $0x160] sm:$0xff]
    %v505 = vld [vmem:[%s6 + $0x168] sm:$0xff]
    %v506 = vld [vmem:[%s6 + $0x170] sm:$0xff]
    %v507 = vld [vmem:[%s6 + $0x178] sm:$0xff]
    %v508 = vld [vmem:[%s6 + $0x180] sm:$0xff]
    %v509 = vld [vmem:[%s6 + $0x188] sm:$0xff]
    %v510 = vld [vmem:[%s6 + $0x190] sm:$0xff]
    %v511 = vld [vmem:[%s6 + $0x198] sm:$0xff]
    %v512 = vld [vmem:[%s6 + $0x1a0] sm:$0xff]
    %v513 = vld [vmem:[%s6 + $0x1a8] sm:$0xff]
    %v514 = vld [vmem:[%s6 + $0x1b0] sm:$0xff]
    %v515 = vld [vmem:[%s6 + $0x1b8] sm:$0xff]
    %v516 = vld [vmem:[%s6 + $0x1c0] sm:$0xff]
    %v517 = vld [vmem:[%s6 + $0x1c8] sm:$0xff]
    %v518 = vld [vmem:[%s6 + $0x1d0] sm:$0xff]
    %v519 = vld [vmem:[%s6 + $0x1d8] sm:$0xff]
    %v520 = vld [vmem:[%s6 + $0x1e0] sm:$0xff]
    %v521 = vld [vmem:[%s6 + $0x1e8] sm:$0xff]
    %v522 = vld [vmem:[%s6 + $0x1f0] sm:$0xff]
    %v523 = vld [vmem:[%s6 + $0x1f8] sm:$0xff]
    %524 = vmatprep.subr.mxu0 %v461
    %525 = vmatpush1.msra.mxu0 %v460
    %526 = vmatprep.subr.mxu0 %v465
    %527 = vmatpush1.msra.mxu0 %v464
    %528 = vmatprep.subr.mxu0 %v469
    %529 = vmatpush1.msra.mxu0 %v468
    %530 = vmatprep.subr.mxu0 %v473
    %531 = vmatpush1.msra.mxu0 %v472
    %532 = vmatprep.subr.mxu0 %v477
    %533 = vmatpush1.msra.mxu0 %v476
    %534 = vmatprep.subr.mxu0 %v481
    %535 = vmatpush1.msra.mxu0 %v480
    %536 = vmatprep.subr.mxu0 %v485
    %537 = vmatpush1.msra.mxu0 %v484
    %538 = vmatprep.subr.mxu0 %v489
    %539 = vmatpush1.msra.mxu0 %v488
    %540 = vmatprep.subr.mxu0 %v493
    %541 = vmatpush1.msra.mxu0 %v492
    %542 = vmatprep.subr.mxu0 %v497
    %543 = vmatpush1.msra.mxu0 %v496
    %544 = vmatprep.subr.mxu0 %v501
    %545 = vmatpush1.msra.mxu0 %v500
    %546 = vmatprep.subr.mxu0 %v505
    %547 = vmatpush1.msra.mxu0 %v504
    %548 = vmatprep.subr.mxu0 %v509
    %549 = vmatpush1.msra.mxu0 %v508
    %550 = vmatprep.subr.mxu0 %v513
    %551 = vmatpush1.msra.mxu0 %v512
    %552 = vmatprep.subr.mxu0 %v517
    %553 = vmatpush1.msra.mxu0 %v516
    %554 = vmatprep.subr.mxu0 %v521
    %555 = vmatpush1.msra.mxu0 %v520
    %556 = vmatprep.subr.mxu0 0.0
    %557 = vmatpush1.msra.mxu0 0.0
    %558 = vmatprep.subr.mxu0 0.0
    %559 = vmatpush1.msra.mxu0 0.0
    %560 = vmatprep.subr.mxu0 0.0
    %561 = vmatpush1.msra.mxu0 0.0
    %562 = vmatprep.subr.mxu0 0.0
    %563 = vmatpush1.msra.mxu0 0.0
    %564 = vmatprep.subr.mxu0 0.0
    %565 = vmatpush1.msra.mxu0 0.0
    %566 = vmatprep.subr.mxu0 0.0
    %567 = vmatpush1.msra.mxu0 0.0
    %568 = vmatprep.subr.mxu0 0.0
    %569 = vmatpush1.msra.mxu0 0.0
    %570 = vmatprep.subr.mxu0 0.0
    %571 = vmatpush1.msra.mxu0 0.0
    %572 = vmatprep.subr.mxu0 0.0
    %573 = vmatpush1.msra.mxu0 0.0
    %574 = vmatprep.subr.mxu0 0.0
    %575 = vmatpush1.msra.mxu0 0.0
    %576 = vmatprep.subr.mxu0 0.0
    %577 = vmatpush1.msra.mxu0 0.0
    %578 = vmatprep.subr.mxu0 0.0
    %579 = vmatpush1.msra.mxu0 0.0
    %580 = vmatprep.subr.mxu0 0.0
    %581 = vmatpush1.msra.mxu0 0.0
    %582 = vmatprep.subr.mxu0 0.0
    %583 = vmatpush1.msra.mxu0 0.0
    %584 = vmatprep.subr.mxu0 0.0
    %585 = vmatpush1.msra.mxu0 0.0
    %586 = vmatprep.subr.mxu0 0.0
    %587 = vmatpush1.msra.mxu0 0.0
    %588 = vmatprep.mubr.f32.mxu0 0.0
    %589 = vmatmul.mubr.f32.gmra.mrb[0].mxu0 0.0
    %v590 = vpop.f32.mrb[0].mxu0
    %v591 = vadd.f32 0.0, %v590
    %v592 = vpop.f32.mrb[0].mxu0
    %v593 = vadd.f32 0.0, %v592
    %594 = vdwg.mxu0
    %595 = vmatprep.subr.mxu0 %v463
    %596 = vmatpush1.msra.mxu0 %v462
    %597 = vmatprep.subr.mxu0 %v467
    %598 = vmatpush1.msra.mxu0 %v466
    %599 = vmatprep.subr.mxu0 %v471
    %600 = vmatpush1.msra.mxu0 %v470
    %601 = vmatprep.subr.mxu0 %v475
    %602 = vmatpush1.msra.mxu0 %v474
    %603 = vmatprep.subr.mxu0 %v479
    %604 = vmatpush1.msra.mxu0 %v478
    %605 = vmatprep.subr.mxu0 %v483
    %606 = vmatpush1.msra.mxu0 %v482
    %607 = vmatprep.subr.mxu0 %v487
    %608 = vmatpush1.msra.mxu0 %v486
    %609 = vmatprep.subr.mxu0 %v491
    %610 = vmatpush1.msra.mxu0 %v490
    %611 = vmatprep.subr.mxu0 %v495
    %612 = vmatpush1.msra.mxu0 %v494
    %613 = vmatprep.subr.mxu0 %v499
    %614 = vmatpush1.msra.mxu0 %v498
    %615 = vmatprep.subr.mxu0 %v503
    %616 = vmatpush1.msra.mxu0 %v502
    %617 = vmatprep.subr.mxu0 %v507
    %618 = vmatpush1.msra.mxu0 %v506
    %619 = vmatprep.subr.mxu0 %v511
    %620 = vmatpush1.msra.mxu0 %v510
    %621 = vmatprep.subr.mxu0 %v515
    %622 = vmatpush1.msra.mxu0 %v514
    %623 = vmatprep.subr.mxu0 %v519
    %624 = vmatpush1.msra.mxu0 %v518
    %625 = vmatprep.subr.mxu0 %v523
    %626 = vmatpush1.msra.mxu0 %v522
    %627 = vmatprep.subr.mxu0 0.0
    %628 = vmatpush1.msra.mxu0 0.0
    %629 = vmatprep.subr.mxu0 0.0
    %630 = vmatpush1.msra.mxu0 0.0
    %631 = vmatprep.subr.mxu0 0.0
    %632 = vmatpush1.msra.mxu0 0.0
    %633 = vmatprep.subr.mxu0 0.0
    %634 = vmatpush1.msra.mxu0 0.0
    %635 = vmatprep.subr.mxu0 0.0
    %636 = vmatpush1.msra.mxu0 0.0
    %637 = vmatprep.subr.mxu0 0.0
    %638 = vmatpush1.msra.mxu0 0.0
    %639 = vmatprep.subr.mxu0 0.0
    %640 = vmatpush1.msra.mxu0 0.0
    %641 = vmatprep.subr.mxu0 0.0
    %642 = vmatpush1.msra.mxu0 0.0
    %643 = vmatprep.subr.mxu0 0.0
    %644 = vmatpush1.msra.mxu0 0.0
    %645 = vmatprep.subr.mxu0 0.0
    %646 = vmatpush1.msra.mxu0 0.0
    %647 = vmatprep.subr.mxu0 0.0
    %648 = vmatpush1.msra.mxu0 0.0
    %649 = vmatprep.subr.mxu0 0.0
    %650 = vmatpush1.msra.mxu0 0.0
    %651 = vmatprep.subr.mxu0 0.0
    %652 = vmatpush1.msra.mxu0 0.0
    %653 = vmatprep.subr.mxu0 0.0
    %654 = vmatpush1.msra.mxu0 0.0
    %655 = vmatprep.subr.mxu0 0.0
    %656 = vmatpush1.msra.mxu0 0.0
    %657 = vmatprep.subr.mxu0 0.0
    %658 = vmatpush1.msra.mxu0 0.0
    %659 = vmatprep.mubr.f32.mxu0 0.0
    %660 = vmatmul.mubr.f32.gmra.mrb[0].mxu0 0.0
    %v661 = vpop.f32.mrb[0].mxu0
    %v662 = vadd.f32 0.0, %v661
    %v663 = vpop.f32.mrb[0].mxu0
    %v664 = vadd.f32 0.0, %v663
    %665 = vdwg.mxu0
    %v666 = vadd.f32 %v200, %v591
    %v667 = vadd.f32 %v202, %v593
    %v668 = vadd.f32 %v277, %v662
    %v669 = vadd.f32 %v279, %v664
    %v670 = vxor.u32 %v666, 2147483648
    %v671 = vxor.u32 %v667, 2147483648
    %v672 = vxor.u32 %v668, 2147483648
    %v673 = vmul.f32 %v670, 1.442695
    %v674 = vpow.pop %v673
    %v675 = vmul.f32 %v671, 1.442695
    %v676 = vpow.pop %v675
    %v677 = vmul.f32 %v672, 1.442695
    %v678 = vpow.pop %v677
    %v679 = vadd.f32 %v674, 1.0
    %v680 = vadd.f32 %v676, 1.0
    %v681 = vadd.f32 %v678, 1.0
    %v682 = vrcp.pop %v679
    %v683 = vmul.f32 1.0, %v682
    %v684 = vrcp.pop %v680
    %v685 = vmul.f32 1.0, %v684
    %v686 = vrcp.pop %v681
    %v687 = vmul.f32 1.0, %v686
    %v688 = vtanh.pop %v669
    %v689 = vmul.f32 %v685, 0.0
    %v690 = vmul.f32 %v683, %v688
    %v691 = vadd.f32 %v689, %v690
    %v692 = vtanh.pop %v691
    %v693 = vmul.f32 %v687, %v692
    %v696 = vunpack.c.l.s4 1966171168
    %v697 = vunpack.c.0.s8 %v696
    %v698 = vlaneseq
    %v699 = vshrl.u32 %v698, 7
    %v700 = vsub.s32 %v697, %v699
    %v701 = vrot.slane %v693, %v700
    %v702 = vcombine.high %v701, %v701
    %v704 = vunpack.c.l.s4 1966171168
    %v705 = vunpack.c.0.s8 %v704
    %v706 = vlaneseq
    %v707 = vshrl.u32 %v706, 7
    %v708 = vsub.s32 %v705, %v707
    %v709 = vrot.slane %v701, %v708
    %v711 = vunpack.c.l.s4 1966171168
    %v712 = vunpack.c.0.s8 %v711
    %v713 = vlaneseq
    %v714 = vshrl.u32 %v713, 7
    %v715 = vsub.s32 %v712, %v714
    %v716 = vrot.slane %v702, %v715
    %vm719 = vcmask 516096
    %720 = vst.msk [vmem:[#allocation2] sm:$0x1] %vm719, %v709
    %721 = vst.msk [vmem:[#allocation2 + $0x8] sm:$0x1] %vm719, %v716
    %vm722 = vcmask 1040896
    %723 = vst.msk [vmem:[#allocation2 + $0x7] sm:$0x1] %vm722, %v709
    %724 = vst.msk [vmem:[#allocation2 + $0xf] sm:$0x1] %vm722, %v716
    %725 = vmatprep.subr.mxu0 %v461
    %726 = vmatpush1.msra.mxu0 %v460
    %727 = vmatprep.subr.mxu0 %v465
    %728 = vmatpush1.msra.mxu0 %v464
    %729 = vmatprep.subr.mxu0 %v469
    %730 = vmatpush1.msra.mxu0 %v468
    %731 = vmatprep.subr.mxu0 %v473
    %732 = vmatpush1.msra.mxu0 %v472
    %733 = vmatprep.subr.mxu0 %v477
    %734 = vmatpush1.msra.mxu0 %v476
    %735 = vmatprep.subr.mxu0 %v481
    %736 = vmatpush1.msra.mxu0 %v480
    %737 = vmatprep.subr.mxu0 %v485
    %738 = vmatpush1.msra.mxu0 %v484
    %739 = vmatprep.subr.mxu0 %v489
    %740 = vmatpush1.msra.mxu0 %v488
    %741 = vmatprep.subr.mxu0 %v493
    %742 = vmatpush1.msra.mxu0 %v492
    %743 = vmatprep.subr.mxu0 %v497
    %744 = vmatpush1.msra.mxu0 %v496
    %745 = vmatprep.subr.mxu0 %v501
    %746 = vmatpush1.msra.mxu0 %v500
    %747 = vmatprep.subr.mxu0 %v505
    %748 = vmatpush1.msra.mxu0 %v504
    %749 = vmatprep.subr.mxu0 %v509
    %750 = vmatpush1.msra.mxu0 %v508
    %751 = vmatprep.subr.mxu0 %v513
    %752 = vmatpush1.msra.mxu0 %v512
    %753 = vmatprep.subr.mxu0 %v517
    %754 = vmatpush1.msra.mxu0 %v516
    %755 = vmatprep.subr.mxu0 %v521
    %756 = vmatpush1.msra.mxu0 %v520
    %757 = vmatprep.subr.mxu0 0.0
    %758 = vmatpush1.msra.mxu0 0.0
    %759 = vmatprep.subr.mxu0 0.0
    %760 = vmatpush1.msra.mxu0 0.0
    %761 = vmatprep.subr.mxu0 0.0
    %762 = vmatpush1.msra.mxu0 0.0
    %763 = vmatprep.subr.mxu0 0.0
    %764 = vmatpush1.msra.mxu0 0.0
    %765 = vmatprep.subr.mxu0 0.0
    %766 = vmatpush1.msra.mxu0 0.0
    %767 = vmatprep.subr.mxu0 0.0
    %768 = vmatpush1.msra.mxu0 0.0
    %769 = vmatprep.subr.mxu0 0.0
    %770 = vmatpush1.msra.mxu0 0.0
    %771 = vmatprep.subr.mxu0 0.0
    %772 = vmatpush1.msra.mxu0 0.0
    %773 = vmatprep.subr.mxu0 0.0
    %774 = vmatpush1.msra.mxu0 0.0
    %775 = vmatprep.subr.mxu0 0.0
    %776 = vmatpush1.msra.mxu0 0.0
    %777 = vmatprep.subr.mxu0 0.0
    %778 = vmatpush1.msra.mxu0 0.0
    %779 = vmatprep.subr.mxu0 0.0
    %780 = vmatpush1.msra.mxu0 0.0
    %781 = vmatprep.subr.mxu0 0.0
    %782 = vmatpush1.msra.mxu0 0.0
    %783 = vmatprep.subr.mxu0 0.0
    %784 = vmatpush1.msra.mxu0 0.0
    %785 = vmatprep.subr.mxu0 0.0
    %786 = vmatpush1.msra.mxu0 0.0
    %787 = vmatprep.subr.mxu0 0.0
    %788 = vmatpush1.msra.mxu0 0.0
    %789 = vmatprep.mubr.f32.mxu0 0.0
    %790 = vmatmul.mubr.f32.gmra.mrb[0].mxu0 %v693
    %v791 = vpop.f32.mrb[0].mxu0
    %v792 = vadd.f32 0.0, %v791
    %v793 = vpop.f32.mrb[0].mxu0
    %v794 = vadd.f32 0.0, %v793
    %795 = vdwg.mxu0
    %796 = vmatprep.subr.mxu0 %v463
    %797 = vmatpush1.msra.mxu0 %v462
    %798 = vmatprep.subr.mxu0 %v467
    %799 = vmatpush1.msra.mxu0 %v466
    %800 = vmatprep.subr.mxu0 %v471
    %801 = vmatpush1.msra.mxu0 %v470
    %802 = vmatprep.subr.mxu0 %v475
    %803 = vmatpush1.msra.mxu0 %v474
    %804 = vmatprep.subr.mxu0 %v479
    %805 = vmatpush1.msra.mxu0 %v478
    %806 = vmatprep.subr.mxu0 %v483
    %807 = vmatpush1.msra.mxu0 %v482
    %808 = vmatprep.subr.mxu0 %v487
    %809 = vmatpush1.msra.mxu0 %v486
    %810 = vmatprep.subr.mxu0 %v491
    %811 = vmatpush1.msra.mxu0 %v490
    %812 = vmatprep.subr.mxu0 %v495
    %813 = vmatpush1.msra.mxu0 %v494
    %814 = vmatprep.subr.mxu0 %v499
    %815 = vmatpush1.msra.mxu0 %v498
    %816 = vmatprep.subr.mxu0 %v503
    %817 = vmatpush1.msra.mxu0 %v502
    %818 = vmatprep.subr.mxu0 %v507
    %819 = vmatpush1.msra.mxu0 %v506
    %820 = vmatprep.subr.mxu0 %v511
    %821 = vmatpush1.msra.mxu0 %v510
    %822 = vmatprep.subr.mxu0 %v515
    %823 = vmatpush1.msra.mxu0 %v514
    %824 = vmatprep.subr.mxu0 %v519
    %825 = vmatpush1.msra.mxu0 %v518
    %826 = vmatprep.subr.mxu0 %v523
    %827 = vmatpush1.msra.mxu0 %v522
    %828 = vmatprep.subr.mxu0 0.0
    %829 = vmatpush1.msra.mxu0 0.0
    %830 = vmatprep.subr.mxu0 0.0
    %831 = vmatpush1.msra.mxu0 0.0
    %832 = vmatprep.subr.mxu0 0.0
    %833 = vmatpush1.msra.mxu0 0.0
    %834 = vmatprep.subr.mxu0 0.0
    %835 = vmatpush1.msra.mxu0 0.0
    %836 = vmatprep.subr.mxu0 0.0
    %837 = vmatpush1.msra.mxu0 0.0
    %838 = vmatprep.subr.mxu0 0.0
    %839 = vmatpush1.msra.mxu0 0.0
    %840 = vmatprep.subr.mxu0 0.0
    %841 = vmatpush1.msra.mxu0 0.0
    %842 = vmatprep.subr.mxu0 0.0
    %843 = vmatpush1.msra.mxu0 0.0
    %844 = vmatprep.subr.mxu0 0.0
    %845 = vmatpush1.msra.mxu0 0.0
    %846 = vmatprep.subr.mxu0 0.0
    %847 = vmatpush1.msra.mxu0 0.0
    %848 = vmatprep.subr.mxu0 0.0
    %849 = vmatpush1.msra.mxu0 0.0
    %850 = vmatprep.subr.mxu0 0.0
    %851 = vmatpush1.msra.mxu0 0.0
    %852 = vmatprep.subr.mxu0 0.0
    %853 = vmatpush1.msra.mxu0 0.0
    %854 = vmatprep.subr.mxu0 0.0
    %855 = vmatpush1.msra.mxu0 0.0
    %856 = vmatprep.subr.mxu0 0.0
    %857 = vmatpush1.msra.mxu0 0.0
    %858 = vmatprep.subr.mxu0 0.0
    %859 = vmatpush1.msra.mxu0 0.0
    %860 = vmatprep.mubr.f32.mxu0 0.0
    %861 = vmatmul.mubr.f32.gmra.mrb[0].mxu0 %v693
    %v862 = vpop.f32.mrb[0].mxu0
    %v863 = vadd.f32 0.0, %v862
    %v864 = vpop.f32.mrb[0].mxu0
    %v865 = vadd.f32 0.0, %v864
    %866 = vdwg.mxu0
    %v871 = vrot.slane %v792, 6
    %v872 = vrot.slane %v794, 6
    %v873 = vrot.slane %v863, 6
    %v874 = vrot.slane %v865, 6
    %v879 = vadd.f32 %v200, %v871
    %v880 = vadd.f32 %v202, %v872
    %v881 = vadd.f32 %v277, %v873
    %v882 = vadd.f32 %v279, %v874
    %v883 = vxor.u32 %v879, 2147483648
    %v884 = vxor.u32 %v880, 2147483648
    %v885 = vxor.u32 %v881, 2147483648
    %v886 = vmul.f32 %v883, 1.442695
    %v887 = vpow.pop %v886
    %v888 = vmul.f32 %v884, 1.442695
    %v889 = vpow.pop %v888
    %v890 = vmul.f32 %v885, 1.442695
    %v891 = vpow.pop %v890
    %v892 = vadd.f32 %v887, 1.0
    %v893 = vadd.f32 %v889, 1.0
    %v894 = vadd.f32 %v891, 1.0
    %v895 = vrcp.pop %v892
    %v896 = vmul.f32 1.0, %v895
    %v897 = vrcp.pop %v893
    %v898 = vmul.f32 1.0, %v897
    %v899 = vrcp.pop %v894
    %v900 = vmul.f32 1.0, %v899
    %v901 = vtanh.pop %v882
    %v903 = vrot.slane %v691, 6
    %v905 = vmul.f32 %v898, %v903
    %v906 = vmul.f32 %v896, %v901
    %v907 = vadd.f32 %v905, %v906
    %v908 = vtanh.pop %v907
    %v909 = vmul.f32 %v900, %v908
    %v912 = vunpack.c.l.s4 1966171168
    %v913 = vunpack.c.0.s8 %v912
    %v914 = vlaneseq
    %v915 = vshrl.u32 %v914, 7
    %v916 = vsub.s32 %v913, %v915
    %v917 = vrot.slane %v909, %v916
    %v918 = vcombine.high %v917, %v917
    %v920 = vunpack.c.l.s4 1966171168
    %v921 = vunpack.c.0.s8 %v920
    %v922 = vlaneseq
    %v923 = vshrl.u32 %v922, 7
    %v924 = vsub.s32 %v921, %v923
    %v925 = vrot.slane %v917, %v924
    %v927 = vunpack.c.l.s4 1966171168
    %v928 = vunpack.c.0.s8 %v927
    %v929 = vlaneseq
    %v930 = vshrl.u32 %v929, 7
    %v931 = vsub.s32 %v928, %v930
    %v932 = vrot.slane %v918, %v931
    %v933 = vcombine.high %v925, %v925
    %v934 = vcombine.high %v932, %v932
    %937 = vst.msk [vmem:[#allocation2 + $0x1] sm:$0x1] %vm719, %v933
    %938 = vst.msk [vmem:[#allocation2 + $0x9] sm:$0x1] %vm719, %v934
    %939 = vst.msk [vmem:[#allocation2 + $0x6] sm:$0x1] %vm722, %v933
    %940 = vst.msk [vmem:[#allocation2 + $0xe] sm:$0x1] %vm722, %v934
    %v941 = vrot.slane %v909, 2
    %943 = vmatprep.subr.mxu0 %v461
    %944 = vmatpush1.msra.mxu0 %v460
    %945 = vmatprep.subr.mxu0 %v465
    %946 = vmatpush1.msra.mxu0 %v464
    %947 = vmatprep.subr.mxu0 %v469
    %948 = vmatpush1.msra.mxu0 %v468
    %949 = vmatprep.subr.mxu0 %v473
    %950 = vmatpush1.msra.mxu0 %v472
    %951 = vmatprep.subr.mxu0 %v477
    %952 = vmatpush1.msra.mxu0 %v476
    %953 = vmatprep.subr.mxu0 %v481
    %954 = vmatpush1.msra.mxu0 %v480
    %955 = vmatprep.subr.mxu0 %v485
    %956 = vmatpush1.msra.mxu0 %v484
    %957 = vmatprep.subr.mxu0 %v489
    %958 = vmatpush1.msra.mxu0 %v488
    %959 = vmatprep.subr.mxu0 %v493
    %960 = vmatpush1.msra.mxu0 %v492
    %961 = vmatprep.subr.mxu0 %v497
    %962 = vmatpush1.msra.mxu0 %v496
    %963 = vmatprep.subr.mxu0 %v501
    %964 = vmatpush1.msra.mxu0 %v500
    %965 = vmatprep.subr.mxu0 %v505
    %966 = vmatpush1.msra.mxu0 %v504
    %967 = vmatprep.subr.mxu0 %v509
    %968 = vmatpush1.msra.mxu0 %v508
    %969 = vmatprep.subr.mxu0 %v513
    %970 = vmatpush1.msra.mxu0 %v512
    %971 = vmatprep.subr.mxu0 %v517
    %972 = vmatpush1.msra.mxu0 %v516
    %973 = vmatprep.subr.mxu0 %v521
    %974 = vmatpush1.msra.mxu0 %v520
    %975 = vmatprep.subr.mxu0 0.0
    %976 = vmatpush1.msra.mxu0 0.0
    %977 = vmatprep.subr.mxu0 0.0
    %978 = vmatpush1.msra.mxu0 0.0
    %979 = vmatprep.subr.mxu0 0.0
    %980 = vmatpush1.msra.mxu0 0.0
    %981 = vmatprep.subr.mxu0 0.0
    %982 = vmatpush1.msra.mxu0 0.0
    %983 = vmatprep.subr.mxu0 0.0
    %984 = vmatpush1.msra.mxu0 0.0
    %985 = vmatprep.subr.mxu0 0.0
    %986 = vmatpush1.msra.mxu0 0.0
    %987 = vmatprep.subr.mxu0 0.0
    %988 = vmatpush1.msra.mxu0 0.0
    %989 = vmatprep.subr.mxu0 0.0
    %990 = vmatpush1.msra.mxu0 0.0
    %991 = vmatprep.subr.mxu0 0.0
    %992 = vmatpush1.msra.mxu0 0.0
    %993 = vmatprep.subr.mxu0 0.0
    %994 = vmatpush1.msra.mxu0 0.0
    %995 = vmatprep.subr.mxu0 0.0
    %996 = vmatpush1.msra.mxu0 0.0
    %997 = vmatprep.subr.mxu0 0.0
    %998 = vmatpush1.msra.mxu0 0.0
    %999 = vmatprep.subr.mxu0 0.0
    %1000 = vmatpush1.msra.mxu0 0.0
    %1001 = vmatprep.subr.mxu0 0.0
    %1002 = vmatpush1.msra.mxu0 0.0
    %1003 = vmatprep.subr.mxu0 0.0
    %1004 = vmatpush1.msra.mxu0 0.0
    %1005 = vmatprep.subr.mxu0 0.0
    %1006 = vmatpush1.msra.mxu0 0.0
    %1007 = vmatprep.mubr.f32.mxu0 0.0
    %1008 = vmatmul.mubr.f32.gmra.mrb[0].mxu0 %v941
    %v1009 = vpop.f32.mrb[0].mxu0
    %v1010 = vadd.f32 0.0, %v1009
    %v1011 = vpop.f32.mrb[0].mxu0
    %v1012 = vadd.f32 0.0, %v1011
    %1013 = vdwg.mxu0
    %1014 = vmatprep.subr.mxu0 %v463
    %1015 = vmatpush1.msra.mxu0 %v462
    %1016 = vmatprep.subr.mxu0 %v467
    %1017 = vmatpush1.msra.mxu0 %v466
    %1018 = vmatprep.subr.mxu0 %v471
    %1019 = vmatpush1.msra.mxu0 %v470
    %1020 = vmatprep.subr.mxu0 %v475
    %1021 = vmatpush1.msra.mxu0 %v474
    %1022 = vmatprep.subr.mxu0 %v479
    %1023 = vmatpush1.msra.mxu0 %v478
    %1024 = vmatprep.subr.mxu0 %v483
    %1025 = vmatpush1.msra.mxu0 %v482
    %1026 = vmatprep.subr.mxu0 %v487
    %1027 = vmatpush1.msra.mxu0 %v486
    %1028 = vmatprep.subr.mxu0 %v491
    %1029 = vmatpush1.msra.mxu0 %v490
    %1030 = vmatprep.subr.mxu0 %v495
    %1031 = vmatpush1.msra.mxu0 %v494
    %1032 = vmatprep.subr.mxu0 %v499
    %1033 = vmatpush1.msra.mxu0 %v498
    %1034 = vmatprep.subr.mxu0 %v503
    %1035 = vmatpush1.msra.mxu0 %v502
    %1036 = vmatprep.subr.mxu0 %v507
    %1037 = vmatpush1.msra.mxu0 %v506
    %1038 = vmatprep.subr.mxu0 %v511
    %1039 = vmatpush1.msra.mxu0 %v510
    %1040 = vmatprep.subr.mxu0 %v515
    %1041 = vmatpush1.msra.mxu0 %v514
    %1042 = vmatprep.subr.mxu0 %v519
    %1043 = vmatpush1.msra.mxu0 %v518
    %1044 = vmatprep.subr.mxu0 %v523
    %1045 = vmatpush1.msra.mxu0 %v522
    %1046 = vmatprep.subr.mxu0 0.0
    %1047 = vmatpush1.msra.mxu0 0.0
    %1048 = vmatprep.subr.mxu0 0.0
    %1049 = vmatpush1.msra.mxu0 0.0
    %1050 = vmatprep.subr.mxu0 0.0
    %1051 = vmatpush1.msra.mxu0 0.0
    %1052 = vmatprep.subr.mxu0 0.0
    %1053 = vmatpush1.msra.mxu0 0.0
    %1054 = vmatprep.subr.mxu0 0.0
    %1055 = vmatpush1.msra.mxu0 0.0
    %1056 = vmatprep.subr.mxu0 0.0
    %1057 = vmatpush1.msra.mxu0 0.0
    %1058 = vmatprep.subr.mxu0 0.0
    %1059 = vmatpush1.msra.mxu0 0.0
    %1060 = vmatprep.subr.mxu0 0.0
    %1061 = vmatpush1.msra.mxu0 0.0
    %1062 = vmatprep.subr.mxu0 0.0
    %1063 = vmatpush1.msra.mxu0 0.0
    %1064 = vmatprep.subr.mxu0 0.0
    %1065 = vmatpush1.msra.mxu0 0.0
    %1066 = vmatprep.subr.mxu0 0.0
    %1067 = vmatpush1.msra.mxu0 0.0
    %1068 = vmatprep.subr.mxu0 0.0
    %1069 = vmatpush1.msra.mxu0 0.0
    %1070 = vmatprep.subr.mxu0 0.0
    %1071 = vmatpush1.msra.mxu0 0.0
    %1072 = vmatprep.subr.mxu0 0.0
    %1073 = vmatpush1.msra.mxu0 0.0
    %1074 = vmatprep.subr.mxu0 0.0
    %1075 = vmatpush1.msra.mxu0 0.0
    %1076 = vmatprep.subr.mxu0 0.0
    %1077 = vmatpush1.msra.mxu0 0.0
    %1078 = vmatprep.mubr.f32.mxu0 0.0
    %1079 = vmatmul.mubr.f32.gmra.mrb[0].mxu0 %v941
    %v1080 = vpop.f32.mrb[0].mxu0
    %v1081 = vadd.f32 0.0, %v1080
    %v1082 = vpop.f32.mrb[0].mxu0
    %v1083 = vadd.f32 0.0, %v1082
    %1084 = vdwg.mxu0
    %v1089 = vrot.slane %v1010, 4
    %v1090 = vrot.slane %v1012, 4
    %v1091 = vrot.slane %v1081, 4
    %v1092 = vrot.slane %v1083, 4
    %v1097 = vadd.f32 %v200, %v1089
    %v1098 = vadd.f32 %v202, %v1090
    %v1099 = vadd.f32 %v277, %v1091
    %v1100 = vadd.f32 %v279, %v1092
    %v1101 = vxor.u32 %v1097, 2147483648
    %v1102 = vxor.u32 %v1098, 2147483648
    %v1103 = vxor.u32 %v1099, 2147483648
    %v1104 = vmul.f32 %v1101, 1.442695
    %v1105 = vpow.pop %v1104
    %v1106 = vmul.f32 %v1102, 1.442695
    %v1107 = vpow.pop %v1106
    %v1108 = vmul.f32 %v1103, 1.442695
    %v1109 = vpow.pop %v1108
    %v1110 = vadd.f32 %v1105, 1.0
    %v1111 = vadd.f32 %v1107, 1.0
    %v1112 = vadd.f32 %v1109, 1.0
    %v1113 = vrcp.pop %v1110
    %v1114 = vmul.f32 1.0, %v1113
    %v1115 = vrcp.pop %v1111
    %v1116 = vmul.f32 1.0, %v1115
    %v1117 = vrcp.pop %v1112
    %v1118 = vmul.f32 1.0, %v1117
    %v1119 = vtanh.pop %v1100
    %v1121 = vrot.slane %v907, 6
    %v1123 = vmul.f32 %v1116, %v1121
    %v1124 = vmul.f32 %v1114, %v1119
    %v1125 = vadd.f32 %v1123, %v1124
    %v1126 = vtanh.pop %v1125
    %v1127 = vmul.f32 %v1118, %v1126
    %v1129 = vcombine.high %v1127, %v1127
    %v1131 = vunpack.c.l.s4 1966171168
    %v1132 = vunpack.c.0.s8 %v1131
    %v1133 = vlaneseq
    %v1134 = vshrl.u32 %v1133, 7
    %v1135 = vsub.s32 %v1132, %v1134
    %v1136 = vrot.slane %v1129, %v1135
    %v1137 = vcombine.high %v1136, %v1136
    %v1139 = vunpack.c.l.s4 1966171168
    %v1140 = vunpack.c.0.s8 %v1139
    %v1141 = vlaneseq
    %v1142 = vshrl.u32 %v1141, 7
    %v1143 = vsub.s32 %v1140, %v1142
    %v1144 = vrot.slane %v1136, %v1143
    %v1146 = vunpack.c.l.s4 1966171168
    %v1147 = vunpack.c.0.s8 %v1146
    %v1148 = vlaneseq
    %v1149 = vshrl.u32 %v1148, 7
    %v1150 = vsub.s32 %v1147, %v1149
    %v1151 = vrot.slane %v1137, %v1150
    %1154 = vst.msk [vmem:[#allocation2 + $0x2] sm:$0x1] %vm719, %v1144
    %1155 = vst.msk [vmem:[#allocation2 + $0xa] sm:$0x1] %vm719, %v1151
    %1156 = vst.msk [vmem:[#allocation2 + $0x5] sm:$0x1] %vm722, %v1144
    %1157 = vst.msk [vmem:[#allocation2 + $0xd] sm:$0x1] %vm722, %v1151
    %v1158 = vrot.slane %v1127, 4
    %1160 = vmatprep.subr.mxu0 %v461
    %1161 = vmatpush1.msra.mxu0 %v460
    %1162 = vmatprep.subr.mxu0 %v465
    %1163 = vmatpush1.msra.mxu0 %v464
    %1164 = vmatprep.subr.mxu0 %v469
    %1165 = vmatpush1.msra.mxu0 %v468
    %1166 = vmatprep.subr.mxu0 %v473
    %1167 = vmatpush1.msra.mxu0 %v472
    %1168 = vmatprep.subr.mxu0 %v477
    %1169 = vmatpush1.msra.mxu0 %v476
    %1170 = vmatprep.subr.mxu0 %v481
    %1171 = vmatpush1.msra.mxu0 %v480
    %1172 = vmatprep.subr.mxu0 %v485
    %1173 = vmatpush1.msra.mxu0 %v484
    %1174 = vmatprep.subr.mxu0 %v489
    %1175 = vmatpush1.msra.mxu0 %v488
    %1176 = vmatprep.subr.mxu0 %v493
    %1177 = vmatpush1.msra.mxu0 %v492
    %1178 = vmatprep.subr.mxu0 %v497
    %1179 = vmatpush1.msra.mxu0 %v496
    %1180 = vmatprep.subr.mxu0 %v501
    %1181 = vmatpush1.msra.mxu0 %v500
    %1182 = vmatprep.subr.mxu0 %v505
    %1183 = vmatpush1.msra.mxu0 %v504
    %1184 = vmatprep.subr.mxu0 %v509
    %1185 = vmatpush1.msra.mxu0 %v508
    %1186 = vmatprep.subr.mxu0 %v513
    %1187 = vmatpush1.msra.mxu0 %v512
    %1188 = vmatprep.subr.mxu0 %v517
    %1189 = vmatpush1.msra.mxu0 %v516
    %1190 = vmatprep.subr.mxu0 %v521
    %1191 = vmatpush1.msra.mxu0 %v520
    %1192 = vmatprep.subr.mxu0 0.0
    %1193 = vmatpush1.msra.mxu0 0.0
    %1194 = vmatprep.subr.mxu0 0.0
    %1195 = vmatpush1.msra.mxu0 0.0
    %1196 = vmatprep.subr.mxu0 0.0
    %1197 = vmatpush1.msra.mxu0 0.0
    %1198 = vmatprep.subr.mxu0 0.0
    %1199 = vmatpush1.msra.mxu0 0.0
    %1200 = vmatprep.subr.mxu0 0.0
    %1201 = vmatpush1.msra.mxu0 0.0
    %1202 = vmatprep.subr.mxu0 0.0
    %1203 = vmatpush1.msra.mxu0 0.0
    %1204 = vmatprep.subr.mxu0 0.0
    %1205 = vmatpush1.msra.mxu0 0.0
    %1206 = vmatprep.subr.mxu0 0.0
    %1207 = vmatpush1.msra.mxu0 0.0
    %1208 = vmatprep.subr.mxu0 0.0
    %1209 = vmatpush1.msra.mxu0 0.0
    %1210 = vmatprep.subr.mxu0 0.0
    %1211 = vmatpush1.msra.mxu0 0.0
    %1212 = vmatprep.subr.mxu0 0.0
    %1213 = vmatpush1.msra.mxu0 0.0
    %1214 = vmatprep.subr.mxu0 0.0
    %1215 = vmatpush1.msra.mxu0 0.0
    %1216 = vmatprep.subr.mxu0 0.0
    %1217 = vmatpush1.msra.mxu0 0.0
    %1218 = vmatprep.subr.mxu0 0.0
    %1219 = vmatpush1.msra.mxu0 0.0
    %1220 = vmatprep.subr.mxu0 0.0
    %1221 = vmatpush1.msra.mxu0 0.0
    %1222 = vmatprep.subr.mxu0 0.0
    %1223 = vmatpush1.msra.mxu0 0.0
    %1224 = vmatprep.mubr.f32.mxu0 0.0
    %1225 = vmatmul.mubr.f32.gmra.mrb[0].mxu0 %v1158
    %v1226 = vpop.f32.mrb[0].mxu0
    %v1227 = vadd.f32 0.0, %v1226
    %v1228 = vpop.f32.mrb[0].mxu0
    %v1229 = vadd.f32 0.0, %v1228
    %1230 = vdwg.mxu0
    %1231 = vmatprep.subr.mxu0 %v463
    %1232 = vmatpush1.msra.mxu0 %v462
    %1233 = vmatprep.subr.mxu0 %v467
    %1234 = vmatpush1.msra.mxu0 %v466
    %1235 = vmatprep.subr.mxu0 %v471
    %1236 = vmatpush1.msra.mxu0 %v470
    %1237 = vmatprep.subr.mxu0 %v475
    %1238 = vmatpush1.msra.mxu0 %v474
    %1239 = vmatprep.subr.mxu0 %v479
    %1240 = vmatpush1.msra.mxu0 %v478
    %1241 = vmatprep.subr.mxu0 %v483
    %1242 = vmatpush1.msra.mxu0 %v482
    %1243 = vmatprep.subr.mxu0 %v487
    %1244 = vmatpush1.msra.mxu0 %v486
    %1245 = vmatprep.subr.mxu0 %v491
    %1246 = vmatpush1.msra.mxu0 %v490
    %1247 = vmatprep.subr.mxu0 %v495
    %1248 = vmatpush1.msra.mxu0 %v494
    %1249 = vmatprep.subr.mxu0 %v499
    %1250 = vmatpush1.msra.mxu0 %v498
    %1251 = vmatprep.subr.mxu0 %v503
    %1252 = vmatpush1.msra.mxu0 %v502
    %1253 = vmatprep.subr.mxu0 %v507
    %1254 = vmatpush1.msra.mxu0 %v506
    %1255 = vmatprep.subr.mxu0 %v511
    %1256 = vmatpush1.msra.mxu0 %v510
    %1257 = vmatprep.subr.mxu0 %v515
    %1258 = vmatpush1.msra.mxu0 %v514
    %1259 = vmatprep.subr.mxu0 %v519
    %1260 = vmatpush1.msra.mxu0 %v518
    %1261 = vmatprep.subr.mxu0 %v523
    %1262 = vmatpush1.msra.mxu0 %v522
    %1263 = vmatprep.subr.mxu0 0.0
    %1264 = vmatpush1.msra.mxu0 0.0
    %1265 = vmatprep.subr.mxu0 0.0
    %1266 = vmatpush1.msra.mxu0 0.0
    %1267 = vmatprep.subr.mxu0 0.0
    %1268 = vmatpush1.msra.mxu0 0.0
    %1269 = vmatprep.subr.mxu0 0.0
    %1270 = vmatpush1.msra.mxu0 0.0
    %1271 = vmatprep.subr.mxu0 0.0
    %1272 = vmatpush1.msra.mxu0 0.0
    %1273 = vmatprep.subr.mxu0 0.0
    %1274 = vmatpush1.msra.mxu0 0.0
    %1275 = vmatprep.subr.mxu0 0.0
    %1276 = vmatpush1.msra.mxu0 0.0
    %1277 = vmatprep.subr.mxu0 0.0
    %1278 = vmatpush1.msra.mxu0 0.0
    %1279 = vmatprep.subr.mxu0 0.0
    %1280 = vmatpush1.msra.mxu0 0.0
    %1281 = vmatprep.subr.mxu0 0.0
    %1282 = vmatpush1.msra.mxu0 0.0
    %1283 = vmatprep.subr.mxu0 0.0
    %1284 = vmatpush1.msra.mxu0 0.0
    %1285 = vmatprep.subr.mxu0 0.0
    %1286 = vmatpush1.msra.mxu0 0.0
    %1287 = vmatprep.subr.mxu0 0.0
    %1288 = vmatpush1.msra.mxu0 0.0
    %1289 = vmatprep.subr.mxu0 0.0
    %1290 = vmatpush1.msra.mxu0 0.0
    %1291 = vmatprep.subr.mxu0 0.0
    %1292 = vmatpush1.msra.mxu0 0.0
    %1293 = vmatprep.subr.mxu0 0.0
    %1294 = vmatpush1.msra.mxu0 0.0
    %1295 = vmatprep.mubr.f32.mxu0 0.0
    %1296 = vmatmul.mubr.f32.gmra.mrb[0].mxu0 %v1158
    %v1297 = vpop.f32.mrb[0].mxu0
    %v1298 = vadd.f32 0.0, %v1297
    %v1299 = vpop.f32.mrb[0].mxu0
    %v1300 = vadd.f32 0.0, %v1299
    %1301 = vdwg.mxu0
    %v1306 = vrot.slane %v1227, 2
    %v1307 = vrot.slane %v1229, 2
    %v1308 = vrot.slane %v1298, 2
    %v1309 = vrot.slane %v1300, 2
    %v1314 = vadd.f32 %v200, %v1306
    %v1315 = vadd.f32 %v202, %v1307
    %v1316 = vadd.f32 %v277, %v1308
    %v1317 = vadd.f32 %v279, %v1309
    %v1318 = vxor.u32 %v1314, 2147483648
    %v1319 = vxor.u32 %v1315, 2147483648
    %v1320 = vxor.u32 %v1316, 2147483648
    %v1321 = vmul.f32 %v1318, 1.442695
    %v1322 = vpow.pop %v1321
    %v1323 = vmul.f32 %v1319, 1.442695
    %v1324 = vpow.pop %v1323
    %v1325 = vmul.f32 %v1320, 1.442695
    %v1326 = vpow.pop %v1325
    %v1327 = vadd.f32 %v1322, 1.0
    %v1328 = vadd.f32 %v1324, 1.0
    %v1329 = vadd.f32 %v1326, 1.0
    %v1330 = vrcp.pop %v1327
    %v1331 = vmul.f32 1.0, %v1330
    %v1332 = vrcp.pop %v1328
    %v1333 = vmul.f32 1.0, %v1332
    %v1334 = vrcp.pop %v1329
    %v1335 = vmul.f32 1.0, %v1334
    %v1336 = vtanh.pop %v1317
    %v1338 = vrot.slane %v1125, 6
    %v1340 = vmul.f32 %v1333, %v1338
    %v1341 = vmul.f32 %v1331, %v1336
    %v1342 = vadd.f32 %v1340, %v1341
    %v1343 = vtanh.pop %v1342
    %v1344 = vmul.f32 %v1335, %v1343
    %v1346 = vcombine.high %v1344, %v1344
    %v1348 = vunpack.c.l.s4 1966171168
    %v1349 = vunpack.c.0.s8 %v1348
    %v1350 = vlaneseq
    %v1351 = vshrl.u32 %v1350, 7
    %v1352 = vsub.s32 %v1349, %v1351
    %v1353 = vrot.slane %v1346, %v1352
    %v1354 = vcombine.high %v1353, %v1353
    %v1356 = vunpack.c.l.s4 1966171168
    %v1357 = vunpack.c.0.s8 %v1356
    %v1358 = vlaneseq
    %v1359 = vshrl.u32 %v1358, 7
    %v1360 = vsub.s32 %v1357, %v1359
    %v1361 = vrot.slane %v1353, %v1360
    %v1363 = vunpack.c.l.s4 1966171168
    %v1364 = vunpack.c.0.s8 %v1363
    %v1365 = vlaneseq
    %v1366 = vshrl.u32 %v1365, 7
    %v1367 = vsub.s32 %v1364, %v1366
    %v1368 = vrot.slane %v1354, %v1367
    %v1369 = vcombine.high %v1361, %v1361
    %v1370 = vcombine.high %v1368, %v1368
    %1373 = vst.msk [vmem:[#allocation2 + $0x3] sm:$0x1] %vm719, %v1369
    %1374 = vst.msk [vmem:[#allocation2 + $0xb] sm:$0x1] %vm719, %v1370
    %1375 = vst.msk [vmem:[#allocation2 + $0x4] sm:$0x1] %vm722, %v1369
    %1376 = vst.msk [vmem:[#allocation2 + $0xc] sm:$0x1] %vm722, %v1370
    %v1377 = vrot.slane %v1344, 6
    %1379 = vmatprep.subr.mxu0 %v461
    %1380 = vmatpush1.msra.mxu0 %v460
    %1381 = vmatprep.subr.mxu0 %v465
    %1382 = vmatpush1.msra.mxu0 %v464
    %1383 = vmatprep.subr.mxu0 %v469
    %1384 = vmatpush1.msra.mxu0 %v468
    %1385 = vmatprep.subr.mxu0 %v473
    %1386 = vmatpush1.msra.mxu0 %v472
    %1387 = vmatprep.subr.mxu0 %v477
    %1388 = vmatpush1.msra.mxu0 %v476
    %1389 = vmatprep.subr.mxu0 %v481
    %1390 = vmatpush1.msra.mxu0 %v480
    %1391 = vmatprep.subr.mxu0 %v485
    %1392 = vmatpush1.msra.mxu0 %v484
    %1393 = vmatprep.subr.mxu0 %v489
    %1394 = vmatpush1.msra.mxu0 %v488
    %1395 = vmatprep.subr.mxu0 %v493
    %1396 = vmatpush1.msra.mxu0 %v492
    %1397 = vmatprep.subr.mxu0 %v497
    %1398 = vmatpush1.msra.mxu0 %v496
    %1399 = vmatprep.subr.mxu0 %v501
    %1400 = vmatpush1.msra.mxu0 %v500
    %1401 = vmatprep.subr.mxu0 %v505
    %1402 = vmatpush1.msra.mxu0 %v504
    %1403 = vmatprep.subr.mxu0 %v509
    %1404 = vmatpush1.msra.mxu0 %v508
    %1405 = vmatprep.subr.mxu0 %v513
    %1406 = vmatpush1.msra.mxu0 %v512
    %1407 = vmatprep.subr.mxu0 %v517
    %1408 = vmatpush1.msra.mxu0 %v516
    %1409 = vmatprep.subr.mxu0 %v521
    %1410 = vmatpush1.msra.mxu0 %v520
    %1411 = vmatprep.subr.mxu0 0.0
    %1412 = vmatpush1.msra.mxu0 0.0
    %1413 = vmatprep.subr.mxu0 0.0
    %1414 = vmatpush1.msra.mxu0 0.0
    %1415 = vmatprep.subr.mxu0 0.0
    %1416 = vmatpush1.msra.mxu0 0.0
    %1417 = vmatprep.subr.mxu0 0.0
    %1418 = vmatpush1.msra.mxu0 0.0
    %1419 = vmatprep.subr.mxu0 0.0
    %1420 = vmatpush1.msra.mxu0 0.0
    %1421 = vmatprep.subr.mxu0 0.0
    %1422 = vmatpush1.msra.mxu0 0.0
    %1423 = vmatprep.subr.mxu0 0.0
    %1424 = vmatpush1.msra.mxu0 0.0
    %1425 = vmatprep.subr.mxu0 0.0
    %1426 = vmatpush1.msra.mxu0 0.0
    %1427 = vmatprep.subr.mxu0 0.0
    %1428 = vmatpush1.msra.mxu0 0.0
    %1429 = vmatprep.subr.mxu0 0.0
    %1430 = vmatpush1.msra.mxu0 0.0
    %1431 = vmatprep.subr.mxu0 0.0
    %1432 = vmatpush1.msra.mxu0 0.0
    %1433 = vmatprep.subr.mxu0 0.0
    %1434 = vmatpush1.msra.mxu0 0.0
    %1435 = vmatprep.subr.mxu0 0.0
    %1436 = vmatpush1.msra.mxu0 0.0
    %1437 = vmatprep.subr.mxu0 0.0
    %1438 = vmatpush1.msra.mxu0 0.0
    %1439 = vmatprep.subr.mxu0 0.0
    %1440 = vmatpush1.msra.mxu0 0.0
    %1441 = vmatprep.subr.mxu0 0.0
    %1442 = vmatpush1.msra.mxu0 0.0
    %1443 = vmatprep.mubr.f32.mxu0 0.0
    %1444 = vmatmul.mubr.f32.gmra.mrb[0].mxu0 %v1377
    %v1445 = vpop.f32.mrb[0].mxu0
    %v1446 = vadd.f32 0.0, %v1445
    %v1447 = vpop.f32.mrb[0].mxu0
    %v1448 = vadd.f32 0.0, %v1447
    %1449 = vdwg.mxu0
    %1450 = vmatprep.subr.mxu0 %v463
    %1451 = vmatpush1.msra.mxu0 %v462
    %1452 = vmatprep.subr.mxu0 %v467
    %1453 = vmatpush1.msra.mxu0 %v466
    %1454 = vmatprep.subr.mxu0 %v471
    %1455 = vmatpush1.msra.mxu0 %v470
    %1456 = vmatprep.subr.mxu0 %v475
    %1457 = vmatpush1.msra.mxu0 %v474
    %1458 = vmatprep.subr.mxu0 %v479
    %1459 = vmatpush1.msra.mxu0 %v478
    %1460 = vmatprep.subr.mxu0 %v483
    %1461 = vmatpush1.msra.mxu0 %v482
    %1462 = vmatprep.subr.mxu0 %v487
    %1463 = vmatpush1.msra.mxu0 %v486
    %1464 = vmatprep.subr.mxu0 %v491
    %1465 = vmatpush1.msra.mxu0 %v490
    %1466 = vmatprep.subr.mxu0 %v495
    %1467 = vmatpush1.msra.mxu0 %v494
    %1468 = vmatprep.subr.mxu0 %v499
    %1469 = vmatpush1.msra.mxu0 %v498
    %1470 = vmatprep.subr.mxu0 %v503
    %1471 = vmatpush1.msra.mxu0 %v502
    %1472 = vmatprep.subr.mxu0 %v507
    %1473 = vmatpush1.msra.mxu0 %v506
    %1474 = vmatprep.subr.mxu0 %v511
    %1475 = vmatpush1.msra.mxu0 %v510
    %1476 = vmatprep.subr.mxu0 %v515
    %1477 = vmatpush1.msra.mxu0 %v514
    %1478 = vmatprep.subr.mxu0 %v519
    %1479 = vmatpush1.msra.mxu0 %v518
    %1480 = vmatprep.subr.mxu0 %v523
    %1481 = vmatpush1.msra.mxu0 %v522
    %1482 = vmatprep.subr.mxu0 0.0
    %1483 = vmatpush1.msra.mxu0 0.0
    %1484 = vmatprep.subr.mxu0 0.0
    %1485 = vmatpush1.msra.mxu0 0.0
    %1486 = vmatprep.subr.mxu0 0.0
    %1487 = vmatpush1.msra.mxu0 0.0
    %1488 = vmatprep.subr.mxu0 0.0
    %1489 = vmatpush1.msra.mxu0 0.0
    %1490 = vmatprep.subr.mxu0 0.0
    %1491 = vmatpush1.msra.mxu0 0.0
    %1492 = vmatprep.subr.mxu0 0.0
    %1493 = vmatpush1.msra.mxu0 0.0
    %1494 = vmatprep.subr.mxu0 0.0
    %1495 = vmatpush1.msra.mxu0 0.0
    %1496 = vmatprep.subr.mxu0 0.0
    %1497 = vmatpush1.msra.mxu0 0.0
    %1498 = vmatprep.subr.mxu0 0.0
    %1499 = vmatpush1.msra.mxu0 0.0
    %1500 = vmatprep.subr.mxu0 0.0
    %1501 = vmatpush1.msra.mxu0 0.0
    %1502 = vmatprep.subr.mxu0 0.0
    %1503 = vmatpush1.msra.mxu0 0.0
    %1504 = vmatprep.subr.mxu0 0.0
    %1505 = vmatpush1.msra.mxu0 0.0
    %1506 = vmatprep.subr.mxu0 0.0
    %1507 = vmatpush1.msra.mxu0 0.0
    %1508 = vmatprep.subr.mxu0 0.0
    %1509 = vmatpush1.msra.mxu0 0.0
    %1510 = vmatprep.subr.mxu0 0.0
    %1511 = vmatpush1.msra.mxu0 0.0
    %1512 = vmatprep.subr.mxu0 0.0
    %1513 = vmatpush1.msra.mxu0 0.0
    %1514 = vmatprep.mubr.f32.mxu0 0.0
    %1515 = vmatmul.mubr.f32.gmra.mrb[0].mxu0 %v1377
    %v1516 = vpop.f32.mrb[0].mxu0
    %v1517 = vadd.f32 0.0, %v1516
    %v1518 = vpop.f32.mrb[0].mxu0
    %v1519 = vadd.f32 0.0, %v1518
    %1520 = vdwg.mxu0
    %v1521 = vadd.f32 %v206, %v1446
    %v1522 = vadd.f32 %v208, %v1448
    %v1523 = vadd.f32 %v283, %v1517
    %v1524 = vadd.f32 %v285, %v1519
    %v1525 = vxor.u32 %v1521, 2147483648
    %v1526 = vxor.u32 %v1522, 2147483648
    %v1527 = vxor.u32 %v1523, 2147483648
    %v1528 = vmul.f32 %v1525, 1.442695
    %v1529 = vpow.pop %v1528
    %v1530 = vmul.f32 %v1526, 1.442695
    %v1531 = vpow.pop %v1530
    %v1532 = vmul.f32 %v1527, 1.442695
    %v1533 = vpow.pop %v1532
    %v1534 = vadd.f32 %v1529, 1.0
    %v1535 = vadd.f32 %v1531, 1.0
    %v1536 = vadd.f32 %v1533, 1.0
    %v1537 = vrcp.pop %v1534
    %v1538 = vmul.f32 1.0, %v1537
    %v1539 = vrcp.pop %v1535
    %v1540 = vmul.f32 1.0, %v1539
    %v1541 = vrcp.pop %v1536
    %v1542 = vmul.f32 1.0, %v1541
    %v1543 = vtanh.pop %v1524
    %v1545 = vrot.slane %v1342, 6
    %v1547 = vmul.f32 %v1540, %v1545
    %v1548 = vmul.f32 %v1538, %v1543
    %v1549 = vadd.f32 %v1547, %v1548
    %v1550 = vtanh.pop %v1549
    %v1551 = vmul.f32 %v1542, %v1550
    %v1554 = vunpack.c.l.s4 1966171168
    %v1555 = vunpack.c.0.s8 %v1554
    %v1556 = vlaneseq
    %v1557 = vshrl.u32 %v1556, 7
    %v1558 = vsub.s32 %v1555, %v1557
    %v1559 = vrot.slane %v1551, %v1558
    %v1560 = vcombine.high %v1559, %v1559
    %v1562 = vunpack.c.l.s4 1966171168
    %v1563 = vunpack.c.0.s8 %v1562
    %v1564 = vlaneseq
    %v1565 = vshrl.u32 %v1564, 7
    %v1566 = vsub.s32 %v1563, %v1565
    %v1567 = vrot.slane %v1559, %v1566
    %v1569 = vunpack.c.l.s4 1966171168
    %v1570 = vunpack.c.0.s8 %v1569
    %v1571 = vlaneseq
    %v1572 = vshrl.u32 %v1571, 7
    %v1573 = vsub.s32 %v1570, %v1572
    %v1574 = vrot.slane %v1560, %v1573
    %1577 = vst.msk [vmem:[#allocation2 + $0x4] sm:$0x1] %vm719, %v1567
    %1578 = vst.msk [vmem:[#allocation2 + $0xc] sm:$0x1] %vm719, %v1574
    %1579 = vst.msk [vmem:[#allocation2 + $0x3] sm:$0x1] %vm722, %v1567
    %1580 = vst.msk [vmem:[#allocation2 + $0xb] sm:$0x1] %vm722, %v1574
    %1581 = vmatprep.subr.mxu0 %v461
    %1582 = vmatpush1.msra.mxu0 %v460
    %1583 = vmatprep.subr.mxu0 %v465
    %1584 = vmatpush1.msra.mxu0 %v464
    %1585 = vmatprep.subr.mxu0 %v469
    %1586 = vmatpush1.msra.mxu0 %v468
    %1587 = vmatprep.subr.mxu0 %v473
    %1588 = vmatpush1.msra.mxu0 %v472
    %1589 = vmatprep.subr.mxu0 %v477
    %1590 = vmatpush1.msra.mxu0 %v476
    %1591 = vmatprep.subr.mxu0 %v481
    %1592 = vmatpush1.msra.mxu0 %v480
    %1593 = vmatprep.subr.mxu0 %v485
    %1594 = vmatpush1.msra.mxu0 %v484
    %1595 = vmatprep.subr.mxu0 %v489
    %1596 = vmatpush1.msra.mxu0 %v488
    %1597 = vmatprep.subr.mxu0 %v493
    %1598 = vmatpush1.msra.mxu0 %v492
    %1599 = vmatprep.subr.mxu0 %v497
    %1600 = vmatpush1.msra.mxu0 %v496
    %1601 = vmatprep.subr.mxu0 %v501
    %1602 = vmatpush1.msra.mxu0 %v500
    %1603 = vmatprep.subr.mxu0 %v505
    %1604 = vmatpush1.msra.mxu0 %v504
    %1605 = vmatprep.subr.mxu0 %v509
    %1606 = vmatpush1.msra.mxu0 %v508
    %1607 = vmatprep.subr.mxu0 %v513
    %1608 = vmatpush1.msra.mxu0 %v512
    %1609 = vmatprep.subr.mxu0 %v517
    %1610 = vmatpush1.msra.mxu0 %v516
    %1611 = vmatprep.subr.mxu0 %v521
    %1612 = vmatpush1.msra.mxu0 %v520
    %1613 = vmatprep.subr.mxu0 0.0
    %1614 = vmatpush1.msra.mxu0 0.0
    %1615 = vmatprep.subr.mxu0 0.0
    %1616 = vmatpush1.msra.mxu0 0.0
    %1617 = vmatprep.subr.mxu0 0.0
    %1618 = vmatpush1.msra.mxu0 0.0
    %1619 = vmatprep.subr.mxu0 0.0
    %1620 = vmatpush1.msra.mxu0 0.0
    %1621 = vmatprep.subr.mxu0 0.0
    %1622 = vmatpush1.msra.mxu0 0.0
    %1623 = vmatprep.subr.mxu0 0.0
    %1624 = vmatpush1.msra.mxu0 0.0
    %1625 = vmatprep.subr.mxu0 0.0
    %1626 = vmatpush1.msra.mxu0 0.0
    %1627 = vmatprep.subr.mxu0 0.0
    %1628 = vmatpush1.msra.mxu0 0.0
    %1629 = vmatprep.subr.mxu0 0.0
    %1630 = vmatpush1.msra.mxu0 0.0
    %1631 = vmatprep.subr.mxu0 0.0
    %1632 = vmatpush1.msra.mxu0 0.0
    %1633 = vmatprep.subr.mxu0 0.0
    %1634 = vmatpush1.msra.mxu0 0.0
    %1635 = vmatprep.subr.mxu0 0.0
    %1636 = vmatpush1.msra.mxu0 0.0
    %1637 = vmatprep.subr.mxu0 0.0
    %1638 = vmatpush1.msra.mxu0 0.0
    %1639 = vmatprep.subr.mxu0 0.0
    %1640 = vmatpush1.msra.mxu0 0.0
    %1641 = vmatprep.subr.mxu0 0.0
    %1642 = vmatpush1.msra.mxu0 0.0
    %1643 = vmatprep.subr.mxu0 0.0
    %1644 = vmatpush1.msra.mxu0 0.0
    %1645 = vmatprep.mubr.f32.mxu0 0.0
    %1646 = vmatmul.mubr.f32.gmra.mrb[0].mxu0 %v1551
    %v1647 = vpop.f32.mrb[0].mxu0
    %v1648 = vadd.f32 0.0, %v1647
    %v1649 = vpop.f32.mrb[0].mxu0
    %v1650 = vadd.f32 0.0, %v1649
    %1651 = vdwg.mxu0
    %1652 = vmatprep.subr.mxu0 %v463
    %1653 = vmatpush1.msra.mxu0 %v462
    %1654 = vmatprep.subr.mxu0 %v467
    %1655 = vmatpush1.msra.mxu0 %v466
    %1656 = vmatprep.subr.mxu0 %v471
    %1657 = vmatpush1.msra.mxu0 %v470
    %1658 = vmatprep.subr.mxu0 %v475
    %1659 = vmatpush1.msra.mxu0 %v474
    %1660 = vmatprep.subr.mxu0 %v479
    %1661 = vmatpush1.msra.mxu0 %v478
    %1662 = vmatprep.subr.mxu0 %v483
    %1663 = vmatpush1.msra.mxu0 %v482
    %1664 = vmatprep.subr.mxu0 %v487
    %1665 = vmatpush1.msra.mxu0 %v486
    %1666 = vmatprep.subr.mxu0 %v491
    %1667 = vmatpush1.msra.mxu0 %v490
    %1668 = vmatprep.subr.mxu0 %v495
    %1669 = vmatpush1.msra.mxu0 %v494
    %1670 = vmatprep.subr.mxu0 %v499
    %1671 = vmatpush1.msra.mxu0 %v498
    %1672 = vmatprep.subr.mxu0 %v503
    %1673 = vmatpush1.msra.mxu0 %v502
    %1674 = vmatprep.subr.mxu0 %v507
    %1675 = vmatpush1.msra.mxu0 %v506
    %1676 = vmatprep.subr.mxu0 %v511
    %1677 = vmatpush1.msra.mxu0 %v510
    %1678 = vmatprep.subr.mxu0 %v515
    %1679 = vmatpush1.msra.mxu0 %v514
    %1680 = vmatprep.subr.mxu0 %v519
    %1681 = vmatpush1.msra.mxu0 %v518
    %1682 = vmatprep.subr.mxu0 %v523
    %1683 = vmatpush1.msra.mxu0 %v522
    %1684 = vmatprep.subr.mxu0 0.0
    %1685 = vmatpush1.msra.mxu0 0.0
    %1686 = vmatprep.subr.mxu0 0.0
    %1687 = vmatpush1.msra.mxu0 0.0
    %1688 = vmatprep.subr.mxu0 0.0
    %1689 = vmatpush1.msra.mxu0 0.0
    %1690 = vmatprep.subr.mxu0 0.0
    %1691 = vmatpush1.msra.mxu0 0.0
    %1692 = vmatprep.subr.mxu0 0.0
    %1693 = vmatpush1.msra.mxu0 0.0
    %1694 = vmatprep.subr.mxu0 0.0
    %1695 = vmatpush1.msra.mxu0 0.0
    %1696 = vmatprep.subr.mxu0 0.0
    %1697 = vmatpush1.msra.mxu0 0.0
    %1698 = vmatprep.subr.mxu0 0.0
    %1699 = vmatpush1.msra.mxu0 0.0
    %1700 = vmatprep.subr.mxu0 0.0
    %1701 = vmatpush1.msra.mxu0 0.0
    %1702 = vmatprep.subr.mxu0 0.0
    %1703 = vmatpush1.msra.mxu0 0.0
    %1704 = vmatprep.subr.mxu0 0.0
    %1705 = vmatpush1.msra.mxu0 0.0
    %1706 = vmatprep.subr.mxu0 0.0
    %1707 = vmatpush1.msra.mxu0 0.0
    %1708 = vmatprep.subr.mxu0 0.0
    %1709 = vmatpush1.msra.mxu0 0.0
    %1710 = vmatprep.subr.mxu0 0.0
    %1711 = vmatpush1.msra.mxu0 0.0
    %1712 = vmatprep.subr.mxu0 0.0
    %1713 = vmatpush1.msra.mxu0 0.0
    %1714 = vmatprep.subr.mxu0 0.0
    %1715 = vmatpush1.msra.mxu0 0.0
    %1716 = vmatprep.mubr.f32.mxu0 0.0
    %1717 = vmatmul.mubr.f32.gmra.mrb[0].mxu0 %v1551
    %v1718 = vpop.f32.mrb[0].mxu0
    %v1719 = vadd.f32 0.0, %v1718
    %v1720 = vpop.f32.mrb[0].mxu0
    %v1721 = vadd.f32 0.0, %v1720
    %1722 = vdwg.mxu0
    %v1727 = vrot.slane %v1648, 6
    %v1728 = vrot.slane %v1650, 6
    %v1729 = vrot.slane %v1719, 6
    %v1730 = vrot.slane %v1721, 6
    %v1735 = vadd.f32 %v206, %v1727
    %v1736 = vadd.f32 %v208, %v1728
    %v1737 = vadd.f32 %v283, %v1729
    %v1738 = vadd.f32 %v285, %v1730
    %v1739 = vxor.u32 %v1735, 2147483648
    %v1740 = vxor.u32 %v1736, 2147483648
    %v1741 = vxor.u32 %v1737, 2147483648
    %v1742 = vmul.f32 %v1739, 1.442695
    %v1743 = vpow.pop %v1742
    %v1744 = vmul.f32 %v1740, 1.442695
    %v1745 = vpow.pop %v1744
    %v1746 = vmul.f32 %v1741, 1.442695
    %v1747 = vpow.pop %v1746
    %v1748 = vadd.f32 %v1743, 1.0
    %v1749 = vadd.f32 %v1745, 1.0
    %v1750 = vadd.f32 %v1747, 1.0
    %v1751 = vrcp.pop %v1748
    %v1752 = vmul.f32 1.0, %v1751
    %v1753 = vrcp.pop %v1749
    %v1754 = vmul.f32 1.0, %v1753
    %v1755 = vrcp.pop %v1750
    %v1756 = vmul.f32 1.0, %v1755
    %v1757 = vtanh.pop %v1738
    %v1759 = vrot.slane %v1549, 6
    %v1761 = vmul.f32 %v1754, %v1759
    %v1762 = vmul.f32 %v1752, %v1757
    %v1763 = vadd.f32 %v1761, %v1762
    %v1764 = vtanh.pop %v1763
    %v1765 = vmul.f32 %v1756, %v1764
    %v1768 = vunpack.c.l.s4 1966171168
    %v1769 = vunpack.c.0.s8 %v1768
    %v1770 = vlaneseq
    %v1771 = vshrl.u32 %v1770, 7
    %v1772 = vsub.s32 %v1769, %v1771
    %v1773 = vrot.slane %v1765, %v1772
    %v1774 = vcombine.high %v1773, %v1773
    %v1776 = vunpack.c.l.s4 1966171168
    %v1777 = vunpack.c.0.s8 %v1776
    %v1778 = vlaneseq
    %v1779 = vshrl.u32 %v1778, 7
    %v1780 = vsub.s32 %v1777, %v1779
    %v1781 = vrot.slane %v1773, %v1780
    %v1783 = vunpack.c.l.s4 1966171168
    %v1784 = vunpack.c.0.s8 %v1783
    %v1785 = vlaneseq
    %v1786 = vshrl.u32 %v1785, 7
    %v1787 = vsub.s32 %v1784, %v1786
    %v1788 = vrot.slane %v1774, %v1787
    %v1789 = vcombine.high %v1781, %v1781
    %v1790 = vcombine.high %v1788, %v1788
    %1793 = vst.msk [vmem:[#allocation2 + $0x5] sm:$0x1] %vm719, %v1789
    %1794 = vst.msk [vmem:[#allocation2 + $0xd] sm:$0x1] %vm719, %v1790
    %1795 = vst.msk [vmem:[#allocation2 + $0x2] sm:$0x1] %vm722, %v1789
    %1796 = vst.msk [vmem:[#allocation2 + $0xa] sm:$0x1] %vm722, %v1790
    %v1797 = vrot.slane %v1765, 2
    %1799 = vmatprep.subr.mxu0 %v461
    %1800 = vmatpush1.msra.mxu0 %v460
    %1801 = vmatprep.subr.mxu0 %v465
    %1802 = vmatpush1.msra.mxu0 %v464
    %1803 = vmatprep.subr.mxu0 %v469
    %1804 = vmatpush1.msra.mxu0 %v468
    %1805 = vmatprep.subr.mxu0 %v473
    %1806 = vmatpush1.msra.mxu0 %v472
    %1807 = vmatprep.subr.mxu0 %v477
    %1808 = vmatpush1.msra.mxu0 %v476
    %1809 = vmatprep.subr.mxu0 %v481
    %1810 = vmatpush1.msra.mxu0 %v480
    %1811 = vmatprep.subr.mxu0 %v485
    %1812 = vmatpush1.msra.mxu0 %v484
    %1813 = vmatprep.subr.mxu0 %v489
    %1814 = vmatpush1.msra.mxu0 %v488
    %1815 = vmatprep.subr.mxu0 %v493
    %1816 = vmatpush1.msra.mxu0 %v492
    %1817 = vmatprep.subr.mxu0 %v497
    %1818 = vmatpush1.msra.mxu0 %v496
    %1819 = vmatprep.subr.mxu0 %v501
    %1820 = vmatpush1.msra.mxu0 %v500
    %1821 = vmatprep.subr.mxu0 %v505
    %1822 = vmatpush1.msra.mxu0 %v504
    %1823 = vmatprep.subr.mxu0 %v509
    %1824 = vmatpush1.msra.mxu0 %v508
    %1825 = vmatprep.subr.mxu0 %v513
    %1826 = vmatpush1.msra.mxu0 %v512
    %1827 = vmatprep.subr.mxu0 %v517
    %1828 = vmatpush1.msra.mxu0 %v516
    %1829 = vmatprep.subr.mxu0 %v521
    %1830 = vmatpush1.msra.mxu0 %v520
    %1831 = vmatprep.subr.mxu0 0.0
    %1832 = vmatpush1.msra.mxu0 0.0
    %1833 = vmatprep.subr.mxu0 0.0
    %1834 = vmatpush1.msra.mxu0 0.0
    %1835 = vmatprep.subr.mxu0 0.0
    %1836 = vmatpush1.msra.mxu0 0.0
    %1837 = vmatprep.subr.mxu0 0.0
    %1838 = vmatpush1.msra.mxu0 0.0
    %1839 = vmatprep.subr.mxu0 0.0
    %1840 = vmatpush1.msra.mxu0 0.0
    %1841 = vmatprep.subr.mxu0 0.0
    %1842 = vmatpush1.msra.mxu0 0.0
    %1843 = vmatprep.subr.mxu0 0.0
    %1844 = vmatpush1.msra.mxu0 0.0
    %1845 = vmatprep.subr.mxu0 0.0
    %1846 = vmatpush1.msra.mxu0 0.0
    %1847 = vmatprep.subr.mxu0 0.0
    %1848 = vmatpush1.msra.mxu0 0.0
    %1849 = vmatprep.subr.mxu0 0.0
    %1850 = vmatpush1.msra.mxu0 0.0
    %1851 = vmatprep.subr.mxu0 0.0
    %1852 = vmatpush1.msra.mxu0 0.0
    %1853 = vmatprep.subr.mxu0 0.0
    %1854 = vmatpush1.msra.mxu0 0.0
    %1855 = vmatprep.subr.mxu0 0.0
    %1856 = vmatpush1.msra.mxu0 0.0
    %1857 = vmatprep.subr.mxu0 0.0
    %1858 = vmatpush1.msra.mxu0 0.0
    %1859 = vmatprep.subr.mxu0 0.0
    %1860 = vmatpush1.msra.mxu0 0.0
    %1861 = vmatprep.subr.mxu0 0.0
    %1862 = vmatpush1.msra.mxu0 0.0
    %1863 = vmatprep.mubr.f32.mxu0 0.0
    %1864 = vmatmul.mubr.f32.gmra.mrb[0].mxu0 %v1797
    %v1865 = vpop.f32.mrb[0].mxu0
    %v1866 = vadd.f32 0.0, %v1865
    %v1867 = vpop.f32.mrb[0].mxu0
    %v1868 = vadd.f32 0.0, %v1867
    %1869 = vdwg.mxu0
    %1870 = vmatprep.subr.mxu0 %v463
    %1871 = vmatpush1.msra.mxu0 %v462
    %1872 = vmatprep.subr.mxu0 %v467
    %1873 = vmatpush1.msra.mxu0 %v466
    %1874 = vmatprep.subr.mxu0 %v471
    %1875 = vmatpush1.msra.mxu0 %v470
    %1876 = vmatprep.subr.mxu0 %v475
    %1877 = vmatpush1.msra.mxu0 %v474
    %1878 = vmatprep.subr.mxu0 %v479
    %1879 = vmatpush1.msra.mxu0 %v478
    %1880 = vmatprep.subr.mxu0 %v483
    %1881 = vmatpush1.msra.mxu0 %v482
    %1882 = vmatprep.subr.mxu0 %v487
    %1883 = vmatpush1.msra.mxu0 %v486
    %1884 = vmatprep.subr.mxu0 %v491
    %1885 = vmatpush1.msra.mxu0 %v490
    %1886 = vmatprep.subr.mxu0 %v495
    %1887 = vmatpush1.msra.mxu0 %v494
    %1888 = vmatprep.subr.mxu0 %v499
    %1889 = vmatpush1.msra.mxu0 %v498
    %1890 = vmatprep.subr.mxu0 %v503
    %1891 = vmatpush1.msra.mxu0 %v502
    %1892 = vmatprep.subr.mxu0 %v507
    %1893 = vmatpush1.msra.mxu0 %v506
    %1894 = vmatprep.subr.mxu0 %v511
    %1895 = vmatpush1.msra.mxu0 %v510
    %1896 = vmatprep.subr.mxu0 %v515
    %1897 = vmatpush1.msra.mxu0 %v514
    %1898 = vmatprep.subr.mxu0 %v519
    %1899 = vmatpush1.msra.mxu0 %v518
    %1900 = vmatprep.subr.mxu0 %v523
    %1901 = vmatpush1.msra.mxu0 %v522
    %1902 = vmatprep.subr.mxu0 0.0
    %1903 = vmatpush1.msra.mxu0 0.0
    %1904 = vmatprep.subr.mxu0 0.0
    %1905 = vmatpush1.msra.mxu0 0.0
    %1906 = vmatprep.subr.mxu0 0.0
    %1907 = vmatpush1.msra.mxu0 0.0
    %1908 = vmatprep.subr.mxu0 0.0
    %1909 = vmatpush1.msra.mxu0 0.0
    %1910 = vmatprep.subr.mxu0 0.0
    %1911 = vmatpush1.msra.mxu0 0.0
    %1912 = vmatprep.subr.mxu0 0.0
    %1913 = vmatpush1.msra.mxu0 0.0
    %1914 = vmatprep.subr.mxu0 0.0
    %1915 = vmatpush1.msra.mxu0 0.0
    %1916 = vmatprep.subr.mxu0 0.0
    %1917 = vmatpush1.msra.mxu0 0.0
    %1918 = vmatprep.subr.mxu0 0.0
    %1919 = vmatpush1.msra.mxu0 0.0
    %1920 = vmatprep.subr.mxu0 0.0
    %1921 = vmatpush1.msra.mxu0 0.0
    %1922 = vmatprep.subr.mxu0 0.0
    %1923 = vmatpush1.msra.mxu0 0.0
    %1924 = vmatprep.subr.mxu0 0.0
    %1925 = vmatpush1.msra.mxu0 0.0
    %1926 = vmatprep.subr.mxu0 0.0
    %1927 = vmatpush1.msra.mxu0 0.0
    %1928 = vmatprep.subr.mxu0 0.0
    %1929 = vmatpush1.msra.mxu0 0.0
    %1930 = vmatprep.subr.mxu0 0.0
    %1931 = vmatpush1.msra.mxu0 0.0
    %1932 = vmatprep.subr.mxu0 0.0
    %1933 = vmatpush1.msra.mxu0 0.0
    %1934 = vmatprep.mubr.f32.mxu0 0.0
    %1935 = vmatmul.mubr.f32.gmra.mrb[0].mxu0 %v1797
    %v1936 = vpop.f32.mrb[0].mxu0
    %v1937 = vadd.f32 0.0, %v1936
    %v1938 = vpop.f32.mrb[0].mxu0
    %v1939 = vadd.f32 0.0, %v1938
    %1940 = vdwg.mxu0
    %v1945 = vrot.slane %v1866, 4
    %v1946 = vrot.slane %v1868, 4
    %v1947 = vrot.slane %v1937, 4
    %v1948 = vrot.slane %v1939, 4
    %v1953 = vadd.f32 %v206, %v1945
    %v1954 = vadd.f32 %v208, %v1946
    %v1955 = vadd.f32 %v283, %v1947
    %v1956 = vadd.f32 %v285, %v1948
    %v1957 = vxor.u32 %v1953, 2147483648
    %v1958 = vxor.u32 %v1954, 2147483648
    %v1959 = vxor.u32 %v1955, 2147483648
    %v1960 = vmul.f32 %v1957, 1.442695
    %v1961 = vpow.pop %v1960
    %v1962 = vmul.f32 %v1958, 1.442695
    %v1963 = vpow.pop %v1962
    %v1964 = vmul.f32 %v1959, 1.442695
    %v1965 = vpow.pop %v1964
    %v1966 = vadd.f32 %v1961, 1.0
    %v1967 = vadd.f32 %v1963, 1.0
    %v1968 = vadd.f32 %v1965, 1.0
    %v1969 = vrcp.pop %v1966
    %v1970 = vmul.f32 1.0, %v1969
    %v1971 = vrcp.pop %v1967
    %v1972 = vmul.f32 1.0, %v1971
    %v1973 = vrcp.pop %v1968
    %v1974 = vmul.f32 1.0, %v1973
    %v1975 = vtanh.pop %v1956
    %v1977 = vrot.slane %v1763, 6
    %v1979 = vmul.f32 %v1972, %v1977
    %v1980 = vmul.f32 %v1970, %v1975
    %v1981 = vadd.f32 %v1979, %v1980
    %v1982 = vtanh.pop %v1981
    %v1983 = vmul.f32 %v1974, %v1982
    %v1985 = vcombine.high %v1983, %v1983
    %v1987 = vunpack.c.l.s4 1966171168
    %v1988 = vunpack.c.0.s8 %v1987
    %v1989 = vlaneseq
    %v1990 = vshrl.u32 %v1989, 7
    %v1991 = vsub.s32 %v1988, %v1990
    %v1992 = vrot.slane %v1985, %v1991
    %v1993 = vcombine.high %v1992, %v1992
    %v1995 = vunpack.c.l.s4 1966171168
    %v1996 = vunpack.c.0.s8 %v1995
    %v1997 = vlaneseq
    %v1998 = vshrl.u32 %v1997, 7
    %v1999 = vsub.s32 %v1996, %v1998
    %v2000 = vrot.slane %v1992, %v1999
    %v2002 = vunpack.c.l.s4 1966171168
    %v2003 = vunpack.c.0.s8 %v2002
    %v2004 = vlaneseq
    %v2005 = vshrl.u32 %v2004, 7
    %v2006 = vsub.s32 %v2003, %v2005
    %v2007 = vrot.slane %v1993, %v2006
    %2010 = vst.msk [vmem:[#allocation2 + $0x6] sm:$0x1] %vm719, %v2000
    %2011 = vst.msk [vmem:[#allocation2 + $0xe] sm:$0x1] %vm719, %v2007
    %2012 = vst.msk [vmem:[#allocation2 + $0x1] sm:$0x1] %vm722, %v2000
    %2013 = vst.msk [vmem:[#allocation2 + $0x9] sm:$0x1] %vm722, %v2007
    %v2014 = vrot.slane %v1983, 4
    %2016 = vmatprep.subr.mxu0 %v461
    %2017 = vmatpush1.msra.mxu0 %v460
    %2018 = vmatprep.subr.mxu0 %v465
    %2019 = vmatpush1.msra.mxu0 %v464
    %2020 = vmatprep.subr.mxu0 %v469
    %2021 = vmatpush1.msra.mxu0 %v468
    %2022 = vmatprep.subr.mxu0 %v473
    %2023 = vmatpush1.msra.mxu0 %v472
    %2024 = vmatprep.subr.mxu0 %v477
    %2025 = vmatpush1.msra.mxu0 %v476
    %2026 = vmatprep.subr.mxu0 %v481
    %2027 = vmatpush1.msra.mxu0 %v480
    %2028 = vmatprep.subr.mxu0 %v485
    %2029 = vmatpush1.msra.mxu0 %v484
    %2030 = vmatprep.subr.mxu0 %v489
    %2031 = vmatpush1.msra.mxu0 %v488
    %2032 = vmatprep.subr.mxu0 %v493
    %2033 = vmatpush1.msra.mxu0 %v492
    %2034 = vmatprep.subr.mxu0 %v497
    %2035 = vmatpush1.msra.mxu0 %v496
    %2036 = vmatprep.subr.mxu0 %v501
    %2037 = vmatpush1.msra.mxu0 %v500
    %2038 = vmatprep.subr.mxu0 %v505
    %2039 = vmatpush1.msra.mxu0 %v504
    %2040 = vmatprep.subr.mxu0 %v509
    %2041 = vmatpush1.msra.mxu0 %v508
    %2042 = vmatprep.subr.mxu0 %v513
    %2043 = vmatpush1.msra.mxu0 %v512
    %2044 = vmatprep.subr.mxu0 %v517
    %2045 = vmatpush1.msra.mxu0 %v516
    %2046 = vmatprep.subr.mxu0 %v521
    %2047 = vmatpush1.msra.mxu0 %v520
    %2048 = vmatprep.subr.mxu0 0.0
    %2049 = vmatpush1.msra.mxu0 0.0
    %2050 = vmatprep.subr.mxu0 0.0
    %2051 = vmatpush1.msra.mxu0 0.0
    %2052 = vmatprep.subr.mxu0 0.0
    %2053 = vmatpush1.msra.mxu0 0.0
    %2054 = vmatprep.subr.mxu0 0.0
    %2055 = vmatpush1.msra.mxu0 0.0
    %2056 = vmatprep.subr.mxu0 0.0
    %2057 = vmatpush1.msra.mxu0 0.0
    %2058 = vmatprep.subr.mxu0 0.0
    %2059 = vmatpush1.msra.mxu0 0.0
    %2060 = vmatprep.subr.mxu0 0.0
    %2061 = vmatpush1.msra.mxu0 0.0
    %2062 = vmatprep.subr.mxu0 0.0
    %2063 = vmatpush1.msra.mxu0 0.0
    %2064 = vmatprep.subr.mxu0 0.0
    %2065 = vmatpush1.msra.mxu0 0.0
    %2066 = vmatprep.subr.mxu0 0.0
    %2067 = vmatpush1.msra.mxu0 0.0
    %2068 = vmatprep.subr.mxu0 0.0
    %2069 = vmatpush1.msra.mxu0 0.0
    %2070 = vmatprep.subr.mxu0 0.0
    %2071 = vmatpush1.msra.mxu0 0.0
    %2072 = vmatprep.subr.mxu0 0.0
    %2073 = vmatpush1.msra.mxu0 0.0
    %2074 = vmatprep.subr.mxu0 0.0
    %2075 = vmatpush1.msra.mxu0 0.0
    %2076 = vmatprep.subr.mxu0 0.0
    %2077 = vmatpush1.msra.mxu0 0.0
    %2078 = vmatprep.subr.mxu0 0.0
    %2079 = vmatpush1.msra.mxu0 0.0
    %2080 = vmatprep.mubr.f32.mxu0 0.0
    %2081 = vmatmul.mubr.f32.gmra.mrb[0].mxu0 %v2014
    %v2082 = vpop.f32.mrb[0].mxu0
    %v2083 = vadd.f32 0.0, %v2082
    %v2084 = vpop.f32.mrb[0].mxu0
    %v2085 = vadd.f32 0.0, %v2084
    %2086 = vdwg.mxu0
    %2087 = vmatprep.subr.mxu0 %v463
    %2088 = vmatpush1.msra.mxu0 %v462
    %2089 = vmatprep.subr.mxu0 %v467
    %2090 = vmatpush1.msra.mxu0 %v466
    %2091 = vmatprep.subr.mxu0 %v471
    %2092 = vmatpush1.msra.mxu0 %v470
    %2093 = vmatprep.subr.mxu0 %v475
    %2094 = vmatpush1.msra.mxu0 %v474
    %2095 = vmatprep.subr.mxu0 %v479
    %2096 = vmatpush1.msra.mxu0 %v478
    %2097 = vmatprep.subr.mxu0 %v483
    %2098 = vmatpush1.msra.mxu0 %v482
    %2099 = vmatprep.subr.mxu0 %v487
    %2100 = vmatpush1.msra.mxu0 %v486
    %2101 = vmatprep.subr.mxu0 %v491
    %2102 = vmatpush1.msra.mxu0 %v490
    %2103 = vmatprep.subr.mxu0 %v495
    %2104 = vmatpush1.msra.mxu0 %v494
    %2105 = vmatprep.subr.mxu0 %v499
    %2106 = vmatpush1.msra.mxu0 %v498
    %2107 = vmatprep.subr.mxu0 %v503
    %2108 = vmatpush1.msra.mxu0 %v502
    %2109 = vmatprep.subr.mxu0 %v507
    %2110 = vmatpush1.msra.mxu0 %v506
    %2111 = vmatprep.subr.mxu0 %v511
    %2112 = vmatpush1.msra.mxu0 %v510
    %2113 = vmatprep.subr.mxu0 %v515
    %2114 = vmatpush1.msra.mxu0 %v514
    %2115 = vmatprep.subr.mxu0 %v519
    %2116 = vmatpush1.msra.mxu0 %v518
    %2117 = vmatprep.subr.mxu0 %v523
    %2118 = vmatpush1.msra.mxu0 %v522
    %2119 = vmatprep.subr.mxu0 0.0
    %2120 = vmatpush1.msra.mxu0 0.0
    %2121 = vmatprep.subr.mxu0 0.0
    %2122 = vmatpush1.msra.mxu0 0.0
    %2123 = vmatprep.subr.mxu0 0.0
    %2124 = vmatpush1.msra.mxu0 0.0
    %2125 = vmatprep.subr.mxu0 0.0
    %2126 = vmatpush1.msra.mxu0 0.0
    %2127 = vmatprep.subr.mxu0 0.0
    %2128 = vmatpush1.msra.mxu0 0.0
    %2129 = vmatprep.subr.mxu0 0.0
    %2130 = vmatpush1.msra.mxu0 0.0
    %2131 = vmatprep.subr.mxu0 0.0
    %2132 = vmatpush1.msra.mxu0 0.0
    %2133 = vmatprep.subr.mxu0 0.0
    %2134 = vmatpush1.msra.mxu0 0.0
    %2135 = vmatprep.subr.mxu0 0.0
    %2136 = vmatpush1.msra.mxu0 0.0
    %2137 = vmatprep.subr.mxu0 0.0
    %2138 = vmatpush1.msra.mxu0 0.0
    %2139 = vmatprep.subr.mxu0 0.0
    %2140 = vmatpush1.msra.mxu0 0.0
    %2141 = vmatprep.subr.mxu0 0.0
    %2142 = vmatpush1.msra.mxu0 0.0
    %2143 = vmatprep.subr.mxu0 0.0
    %2144 = vmatpush1.msra.mxu0 0.0
    %2145 = vmatprep.subr.mxu0 0.0
    %2146 = vmatpush1.msra.mxu0 0.0
    %2147 = vmatprep.subr.mxu0 0.0
    %2148 = vmatpush1.msra.mxu0 0.0
    %2149 = vmatprep.subr.mxu0 0.0
    %2150 = vmatpush1.msra.mxu0 0.0
    %2151 = vmatprep.mubr.f32.mxu0 0.0
    %2152 = vmatmul.mubr.f32.gmra.mrb[0].mxu0 %v2014
    %v2153 = vpop.f32.mrb[0].mxu0
    %v2154 = vadd.f32 0.0, %v2153
    %v2155 = vpop.f32.mrb[0].mxu0
    %v2156 = vadd.f32 0.0, %v2155
    %2157 = vdwg.mxu0
    %v2162 = vrot.slane %v2083, 2
    %v2163 = vrot.slane %v2085, 2
    %v2164 = vrot.slane %v2154, 2
    %v2165 = vrot.slane %v2156, 2
    %v2170 = vadd.f32 %v206, %v2162
    %v2171 = vadd.f32 %v208, %v2163
    %v2172 = vadd.f32 %v283, %v2164
    %v2173 = vadd.f32 %v285, %v2165
    %v2174 = vxor.u32 %v2170, 2147483648
    %v2175 = vxor.u32 %v2171, 2147483648
    %v2176 = vxor.u32 %v2172, 2147483648
    %v2177 = vmul.f32 %v2174, 1.442695
    %v2178 = vpow.pop %v2177
    %v2179 = vmul.f32 %v2175, 1.442695
    %v2180 = vpow.pop %v2179
    %v2181 = vmul.f32 %v2176, 1.442695
    %v2182 = vpow.pop %v2181
    %v2183 = vadd.f32 %v2178, 1.0
    %v2184 = vadd.f32 %v2180, 1.0
    %v2185 = vadd.f32 %v2182, 1.0
    %v2186 = vrcp.pop %v2183
    %v2187 = vmul.f32 1.0, %v2186
    %v2188 = vrcp.pop %v2184
    %v2189 = vmul.f32 1.0, %v2188
    %v2190 = vrcp.pop %v2185
    %v2191 = vmul.f32 1.0, %v2190
    %v2192 = vtanh.pop %v2173
    %v2194 = vrot.slane %v1981, 6
    %v2196 = vmul.f32 %v2189, %v2194
    %v2197 = vmul.f32 %v2187, %v2192
    %v2198 = vadd.f32 %v2196, %v2197
    %v2199 = vtanh.pop %v2198
    %v2200 = vmul.f32 %v2191, %v2199
    %v2202 = vcombine.high %v2200, %v2200
    %v2204 = vunpack.c.l.s4 1966171168
    %v2205 = vunpack.c.0.s8 %v2204
    %v2206 = vlaneseq
    %v2207 = vshrl.u32 %v2206, 7
    %v2208 = vsub.s32 %v2205, %v2207
    %v2209 = vrot.slane %v2202, %v2208
    %v2210 = vcombine.high %v2209, %v2209
    %v2212 = vunpack.c.l.s4 1966171168
    %v2213 = vunpack.c.0.s8 %v2212
    %v2214 = vlaneseq
    %v2215 = vshrl.u32 %v2214, 7
    %v2216 = vsub.s32 %v2213, %v2215
    %v2217 = vrot.slane %v2209, %v2216
    %v2219 = vunpack.c.l.s4 1966171168
    %v2220 = vunpack.c.0.s8 %v2219
    %v2221 = vlaneseq
    %v2222 = vshrl.u32 %v2221, 7
    %v2223 = vsub.s32 %v2220, %v2222
    %v2224 = vrot.slane %v2210, %v2223
    %v2225 = vcombine.high %v2217, %v2217
    %v2226 = vcombine.high %v2224, %v2224
    %2229 = vst.msk [vmem:[#allocation2 + $0x7] sm:$0x1] %vm719, %v2225
    %2230 = vst.msk [vmem:[#allocation2 + $0xf] sm:$0x1] %vm719, %v2226
    %2231 = vst.msk [vmem:[#allocation2] sm:$0x1] %vm722, %v2225
    %2232 = vst.msk [vmem:[#allocation2 + $0x8] sm:$0x1] %vm722, %v2226
    %s2233 = smul.u32 8, 16
    %s2234 = smul.u32 %s2233, 4
    %s2235 = sshll.u32 %s2234, 4
    %2236 = dma.done [#allocation7], %s2235
    %v2237 = vld [vmem:[#allocation4] sm:$0xff]
    %v2238 = vld [vmem:[#allocation4 + $0x8] sm:$0xff]
    %v2239 = vld [vmem:[#allocation4 + $0x10] sm:$0xff]
    %v2240 = vld [vmem:[#allocation4 + $0x18] sm:$0xff]
    %v2241 = vld [vmem:[#allocation4 + $0x20] sm:$0xff]
    %v2242 = vld [vmem:[#allocation4 + $0x28] sm:$0xff]
    %v2243 = vld [vmem:[#allocation4 + $0x30] sm:$0xff]
    %v2244 = vld [vmem:[#allocation4 + $0x38] sm:$0xff]
    %v2245 = vld [vmem:[#allocation4 + $0x40] sm:$0xff]
    %v2246 = vld [vmem:[#allocation4 + $0x48] sm:$0xff]
    %v2247 = vld [vmem:[#allocation4 + $0x50] sm:$0xff]
    %v2248 = vld [vmem:[#allocation4 + $0x58] sm:$0xff]
    %v2249 = vld [vmem:[#allocation4 + $0x60] sm:$0xff]
    %v2250 = vld [vmem:[#allocation4 + $0x68] sm:$0xff]
    %v2251 = vld [vmem:[#allocation4 + $0x70] sm:$0xff]
    %v2252 = vld [vmem:[#allocation4 + $0x78] sm:$0xff]
    %v2253 = vld [vmem:[#allocation4 + $0x80] sm:$0xff]
    %v2254 = vld [vmem:[#allocation4 + $0x88] sm:$0xff]
    %v2255 = vld [vmem:[#allocation4 + $0x90] sm:$0xff]
    %v2256 = vld [vmem:[#allocation4 + $0x98] sm:$0xff]
    %v2257 = vld [vmem:[#allocation4 + $0xa0] sm:$0xff]
    %v2258 = vld [vmem:[#allocation4 + $0xa8] sm:$0xff]
    %v2259 = vld [vmem:[#allocation4 + $0xb0] sm:$0xff]
    %v2260 = vld [vmem:[#allocation4 + $0xb8] sm:$0xff]
    %v2261 = vld [vmem:[#allocation4 + $0xc0] sm:$0xff]
    %v2262 = vld [vmem:[#allocation4 + $0xc8] sm:$0xff]
    %v2263 = vld [vmem:[#allocation4 + $0xd0] sm:$0xff]
    %v2264 = vld [vmem:[#allocation4 + $0xd8] sm:$0xff]
    %v2265 = vld [vmem:[#allocation4 + $0xe0] sm:$0xff]
    %v2266 = vld [vmem:[#allocation4 + $0xe8] sm:$0xff]
    %v2267 = vld [vmem:[#allocation4 + $0xf0] sm:$0xff]
    %v2268 = vld [vmem:[#allocation4 + $0xf8] sm:$0xff]
    %v2269 = vld [vmem:[#allocation4 + $0x100] sm:$0xff]
    %v2270 = vld [vmem:[#allocation4 + $0x108] sm:$0xff]
    %v2271 = vld [vmem:[#allocation4 + $0x110] sm:$0xff]
    %v2272 = vld [vmem:[#allocation4 + $0x118] sm:$0xff]
    %v2273 = vld [vmem:[#allocation4 + $0x120] sm:$0xff]
    %v2274 = vld [vmem:[#allocation4 + $0x128] sm:$0xff]
    %v2275 = vld [vmem:[#allocation4 + $0x130] sm:$0xff]
    %v2276 = vld [vmem:[#allocation4 + $0x138] sm:$0xff]
    %v2277 = vld [vmem:[#allocation4 + $0x140] sm:$0xff]
    %v2278 = vld [vmem:[#allocation4 + $0x148] sm:$0xff]
    %v2279 = vld [vmem:[#allocation4 + $0x150] sm:$0xff]
    %v2280 = vld [vmem:[#allocation4 + $0x158] sm:$0xff]
    %v2281 = vld [vmem:[#allocation4 + $0x160] sm:$0xff]
    %v2282 = vld [vmem:[#allocation4 + $0x168] sm:$0xff]
    %v2283 = vld [vmem:[#allocation4 + $0x170] sm:$0xff]
    %v2284 = vld [vmem:[#allocation4 + $0x178] sm:$0xff]
    %v2285 = vld [vmem:[#allocation4 + $0x180] sm:$0xff]
    %v2286 = vld [vmem:[#allocation4 + $0x188] sm:$0xff]
    %v2287 = vld [vmem:[#allocation4 + $0x190] sm:$0xff]
    %v2288 = vld [vmem:[#allocation4 + $0x198] sm:$0xff]
    %v2289 = vld [vmem:[#allocation4 + $0x1a0] sm:$0xff]
    %v2290 = vld [vmem:[#allocation4 + $0x1a8] sm:$0xff]
    %v2291 = vld [vmem:[#allocation4 + $0x1b0] sm:$0xff]
    %v2292 = vld [vmem:[#allocation4 + $0x1b8] sm:$0xff]
    %v2293 = vld [vmem:[#allocation4 + $0x1c0] sm:$0xff]
    %v2294 = vld [vmem:[#allocation4 + $0x1c8] sm:$0xff]
    %v2295 = vld [vmem:[#allocation4 + $0x1d0] sm:$0xff]
    %v2296 = vld [vmem:[#allocation4 + $0x1d8] sm:$0xff]
    %v2297 = vld [vmem:[#allocation4 + $0x1e0] sm:$0xff]
    %v2298 = vld [vmem:[#allocation4 + $0x1e8] sm:$0xff]
    %v2299 = vld [vmem:[#allocation4 + $0x1f0] sm:$0xff]
    %v2300 = vld [vmem:[#allocation4 + $0x1f8] sm:$0xff]
    %v2301 = vrot.slane %v2200, 6
    %2303 = vmatprep.subr.mxu0 %v2238
    %2304 = vmatpush1.msra.mxu0 %v2237
    %2305 = vmatprep.subr.mxu0 %v2242
    %2306 = vmatpush1.msra.mxu0 %v2241
    %2307 = vmatprep.subr.mxu0 %v2246
    %2308 = vmatpush1.msra.mxu0 %v2245
    %2309 = vmatprep.subr.mxu0 %v2250
    %2310 = vmatpush1.msra.mxu0 %v2249
    %2311 = vmatprep.subr.mxu0 %v2254
    %2312 = vmatpush1.msra.mxu0 %v2253
    %2313 = vmatprep.subr.mxu0 %v2258
    %2314 = vmatpush1.msra.mxu0 %v2257
    %2315 = vmatprep.subr.mxu0 %v2262
    %2316 = vmatpush1.msra.mxu0 %v2261
    %2317 = vmatprep.subr.mxu0 %v2266
    %2318 = vmatpush1.msra.mxu0 %v2265
    %2319 = vmatprep.subr.mxu0 %v2270
    %2320 = vmatpush1.msra.mxu0 %v2269
    %2321 = vmatprep.subr.mxu0 %v2274
    %2322 = vmatpush1.msra.mxu0 %v2273
    %2323 = vmatprep.subr.mxu0 %v2278
    %2324 = vmatpush1.msra.mxu0 %v2277
    %2325 = vmatprep.subr.mxu0 %v2282
    %2326 = vmatpush1.msra.mxu0 %v2281
    %2327 = vmatprep.subr.mxu0 %v2286
    %2328 = vmatpush1.msra.mxu0 %v2285
    %2329 = vmatprep.subr.mxu0 %v2290
    %2330 = vmatpush1.msra.mxu0 %v2289
    %2331 = vmatprep.subr.mxu0 %v2294
    %2332 = vmatpush1.msra.mxu0 %v2293
    %2333 = vmatprep.subr.mxu0 %v2298
    %2334 = vmatpush1.msra.mxu0 %v2297
    %2335 = vmatprep.subr.mxu0 0.0
    %2336 = vmatpush1.msra.mxu0 0.0
    %2337 = vmatprep.subr.mxu0 0.0
    %2338 = vmatpush1.msra.mxu0 0.0
    %2339 = vmatprep.subr.mxu0 0.0
    %2340 = vmatpush1.msra.mxu0 0.0
    %2341 = vmatprep.subr.mxu0 0.0
    %2342 = vmatpush1.msra.mxu0 0.0
    %2343 = vmatprep.subr.mxu0 0.0
    %2344 = vmatpush1.msra.mxu0 0.0
    %2345 = vmatprep.subr.mxu0 0.0
    %2346 = vmatpush1.msra.mxu0 0.0
    %2347 = vmatprep.subr.mxu0 0.0
    %2348 = vmatpush1.msra.mxu0 0.0
    %2349 = vmatprep.subr.mxu0 0.0
    %2350 = vmatpush1.msra.mxu0 0.0
    %2351 = vmatprep.subr.mxu0 0.0
    %2352 = vmatpush1.msra.mxu0 0.0
    %2353 = vmatprep.subr.mxu0 0.0
    %2354 = vmatpush1.msra.mxu0 0.0
    %2355 = vmatprep.subr.mxu0 0.0
    %2356 = vmatpush1.msra.mxu0 0.0
    %2357 = vmatprep.subr.mxu0 0.0
    %2358 = vmatpush1.msra.mxu0 0.0
    %2359 = vmatprep.subr.mxu0 0.0
    %2360 = vmatpush1.msra.mxu0 0.0
    %2361 = vmatprep.subr.mxu0 0.0
    %2362 = vmatpush1.msra.mxu0 0.0
    %2363 = vmatprep.subr.mxu0 0.0
    %2364 = vmatpush1.msra.mxu0 0.0
    %2365 = vmatprep.subr.mxu0 0.0
    %2366 = vmatpush1.msra.mxu0 0.0
    %2367 = vmatprep.mubr.f32.mxu0 0.0
    %2368 = vmatmul.mubr.f32.gmra.mrb[0].mxu0 %v2301
    %v2369 = vpop.f32.mrb[0].mxu0
    %v2370 = vadd.f32 0.0, %v2369
    %v2371 = vpop.f32.mrb[0].mxu0
    %v2372 = vadd.f32 0.0, %v2371
    %2373 = vdwg.mxu0
    %2374 = vmatprep.subr.mxu0 %v2240
    %2375 = vmatpush1.msra.mxu0 %v2239
    %2376 = vmatprep.subr.mxu0 %v2244
    %2377 = vmatpush1.msra.mxu0 %v2243
    %2378 = vmatprep.subr.mxu0 %v2248
    %2379 = vmatpush1.msra.mxu0 %v2247
    %2380 = vmatprep.subr.mxu0 %v2252
    %2381 = vmatpush1.msra.mxu0 %v2251
    %2382 = vmatprep.subr.mxu0 %v2256
    %2383 = vmatpush1.msra.mxu0 %v2255
    %2384 = vmatprep.subr.mxu0 %v2260
    %2385 = vmatpush1.msra.mxu0 %v2259
    %2386 = vmatprep.subr.mxu0 %v2264
    %2387 = vmatpush1.msra.mxu0 %v2263
    %2388 = vmatprep.subr.mxu0 %v2268
    %2389 = vmatpush1.msra.mxu0 %v2267
    %2390 = vmatprep.subr.mxu0 %v2272
    %2391 = vmatpush1.msra.mxu0 %v2271
    %2392 = vmatprep.subr.mxu0 %v2276
    %2393 = vmatpush1.msra.mxu0 %v2275
    %2394 = vmatprep.subr.mxu0 %v2280
    %2395 = vmatpush1.msra.mxu0 %v2279
    %2396 = vmatprep.subr.mxu0 %v2284
    %2397 = vmatpush1.msra.mxu0 %v2283
    %2398 = vmatprep.subr.mxu0 %v2288
    %2399 = vmatpush1.msra.mxu0 %v2287
    %2400 = vmatprep.subr.mxu0 %v2292
    %2401 = vmatpush1.msra.mxu0 %v2291
    %2402 = vmatprep.subr.mxu0 %v2296
    %2403 = vmatpush1.msra.mxu0 %v2295
    %2404 = vmatprep.subr.mxu0 %v2300
    %2405 = vmatpush1.msra.mxu0 %v2299
    %2406 = vmatprep.subr.mxu0 0.0
    %2407 = vmatpush1.msra.mxu0 0.0
    %2408 = vmatprep.subr.mxu0 0.0
    %2409 = vmatpush1.msra.mxu0 0.0
    %2410 = vmatprep.subr.mxu0 0.0
    %2411 = vmatpush1.msra.mxu0 0.0
    %2412 = vmatprep.subr.mxu0 0.0
    %2413 = vmatpush1.msra.mxu0 0.0
    %2414 = vmatprep.subr.mxu0 0.0
    %2415 = vmatpush1.msra.mxu0 0.0
    %2416 = vmatprep.subr.mxu0 0.0
    %2417 = vmatpush1.msra.mxu0 0.0
    %2418 = vmatprep.subr.mxu0 0.0
    %2419 = vmatpush1.msra.mxu0 0.0
    %2420 = vmatprep.subr.mxu0 0.0
    %2421 = vmatpush1.msra.mxu0 0.0
    %2422 = vmatprep.subr.mxu0 0.0
    %2423 = vmatpush1.msra.mxu0 0.0
    %2424 = vmatprep.subr.mxu0 0.0
    %2425 = vmatpush1.msra.mxu0 0.0
    %2426 = vmatprep.subr.mxu0 0.0
    %2427 = vmatpush1.msra.mxu0 0.0
    %2428 = vmatprep.subr.mxu0 0.0
    %2429 = vmatpush1.msra.mxu0 0.0
    %2430 = vmatprep.subr.mxu0 0.0
    %2431 = vmatpush1.msra.mxu0 0.0
    %2432 = vmatprep.subr.mxu0 0.0
    %2433 = vmatpush1.msra.mxu0 0.0
    %2434 = vmatprep.subr.mxu0 0.0
    %2435 = vmatpush1.msra.mxu0 0.0
    %2436 = vmatprep.subr.mxu0 0.0
    %2437 = vmatpush1.msra.mxu0 0.0
    %2438 = vmatprep.mubr.f32.mxu0 0.0
    %2439 = vmatmul.mubr.f32.gmra.mrb[0].mxu0 %v2301
    %v2440 = vpop.f32.mrb[0].mxu0
    %v2441 = vadd.f32 0.0, %v2440
    %v2442 = vpop.f32.mrb[0].mxu0
    %v2443 = vadd.f32 0.0, %v2442
    %2444 = vdwg.mxu0
    %v2445 = vadd.f32 %v385, %v2370
    %v2446 = vadd.f32 %v387, %v2372
    %v2447 = vadd.f32 %v456, %v2441
    %v2448 = vadd.f32 %v458, %v2443
    %v2449 = vxor.u32 %v2445, 2147483648
    %v2450 = vxor.u32 %v2446, 2147483648
    %v2451 = vxor.u32 %v2447, 2147483648
    %v2452 = vmul.f32 %v2449, 1.442695
    %v2453 = vpow.pop %v2452
    %v2454 = vmul.f32 %v2450, 1.442695
    %v2455 = vpow.pop %v2454
    %v2456 = vmul.f32 %v2451, 1.442695
    %v2457 = vpow.pop %v2456
    %v2458 = vadd.f32 %v2453, 1.0
    %v2459 = vadd.f32 %v2455, 1.0
    %v2460 = vadd.f32 %v2457, 1.0
    %v2461 = vrcp.pop %v2458
    %v2462 = vmul.f32 1.0, %v2461
    %v2463 = vrcp.pop %v2459
    %v2464 = vmul.f32 1.0, %v2463
    %v2465 = vrcp.pop %v2460
    %v2466 = vmul.f32 1.0, %v2465
    %v2467 = vtanh.pop %v2448
    %v2469 = vrot.slane %v2198, 6
    %v2471 = vmul.f32 %v2464, %v2469
    %v2472 = vmul.f32 %v2462, %v2467
    %v2473 = vadd.f32 %v2471, %v2472
    %v2474 = vtanh.pop %v2473
    %v2475 = vmul.f32 %v2466, %v2474
    %v2478 = vunpack.c.l.s4 1966171168
    %v2479 = vunpack.c.0.s8 %v2478
    %v2480 = vlaneseq
    %v2481 = vshrl.u32 %v2480, 7
    %v2482 = vsub.s32 %v2479, %v2481
    %v2483 = vrot.slane %v2475, %v2482
    %v2484 = vcombine.high %v2483, %v2483
    %v2486 = vunpack.c.l.s4 1966171168
    %v2487 = vunpack.c.0.s8 %v2486
    %v2488 = vlaneseq
    %v2489 = vshrl.u32 %v2488, 7
    %v2490 = vsub.s32 %v2487, %v2489
    %v2491 = vrot.slane %v2483, %v2490
    %v2493 = vunpack.c.l.s4 1966171168
    %v2494 = vunpack.c.0.s8 %v2493
    %v2495 = vlaneseq
    %v2496 = vshrl.u32 %v2495, 7
    %v2497 = vsub.s32 %v2494, %v2496
    %v2498 = vrot.slane %v2484, %v2497
    %2501 = vst [vmem:[#allocation3] sm:$0x1] %v2491
    %2502 = vst [vmem:[#allocation3 + $0x4] sm:$0x1] %v2498
    %2503 = vmatprep.subr.mxu0 %v2238
    %2504 = vmatpush1.msra.mxu0 %v2237
    %2505 = vmatprep.subr.mxu0 %v2242
    %2506 = vmatpush1.msra.mxu0 %v2241
    %2507 = vmatprep.subr.mxu0 %v2246
    %2508 = vmatpush1.msra.mxu0 %v2245
    %2509 = vmatprep.subr.mxu0 %v2250
    %2510 = vmatpush1.msra.mxu0 %v2249
    %2511 = vmatprep.subr.mxu0 %v2254
    %2512 = vmatpush1.msra.mxu0 %v2253
    %2513 = vmatprep.subr.mxu0 %v2258
    %2514 = vmatpush1.msra.mxu0 %v2257
    %2515 = vmatprep.subr.mxu0 %v2262
    %2516 = vmatpush1.msra.mxu0 %v2261
    %2517 = vmatprep.subr.mxu0 %v2266
    %2518 = vmatpush1.msra.mxu0 %v2265
    %2519 = vmatprep.subr.mxu0 %v2270
    %2520 = vmatpush1.msra.mxu0 %v2269
    %2521 = vmatprep.subr.mxu0 %v2274
    %2522 = vmatpush1.msra.mxu0 %v2273
    %2523 = vmatprep.subr.mxu0 %v2278
    %2524 = vmatpush1.msra.mxu0 %v2277
    %2525 = vmatprep.subr.mxu0 %v2282
    %2526 = vmatpush1.msra.mxu0 %v2281
    %2527 = vmatprep.subr.mxu0 %v2286
    %2528 = vmatpush1.msra.mxu0 %v2285
    %2529 = vmatprep.subr.mxu0 %v2290
    %2530 = vmatpush1.msra.mxu0 %v2289
    %2531 = vmatprep.subr.mxu0 %v2294
    %2532 = vmatpush1.msra.mxu0 %v2293
    %2533 = vmatprep.subr.mxu0 %v2298
    %2534 = vmatpush1.msra.mxu0 %v2297
    %2535 = vmatprep.subr.mxu0 0.0
    %2536 = vmatpush1.msra.mxu0 0.0
    %2537 = vmatprep.subr.mxu0 0.0
    %2538 = vmatpush1.msra.mxu0 0.0
    %2539 = vmatprep.subr.mxu0 0.0
    %2540 = vmatpush1.msra.mxu0 0.0
    %2541 = vmatprep.subr.mxu0 0.0
    %2542 = vmatpush1.msra.mxu0 0.0
    %2543 = vmatprep.subr.mxu0 0.0
    %2544 = vmatpush1.msra.mxu0 0.0
    %2545 = vmatprep.subr.mxu0 0.0
    %2546 = vmatpush1.msra.mxu0 0.0
    %2547 = vmatprep.subr.mxu0 0.0
    %2548 = vmatpush1.msra.mxu0 0.0
    %2549 = vmatprep.subr.mxu0 0.0
    %2550 = vmatpush1.msra.mxu0 0.0
    %2551 = vmatprep.subr.mxu0 0.0
    %2552 = vmatpush1.msra.mxu0 0.0
    %2553 = vmatprep.subr.mxu0 0.0
    %2554 = vmatpush1.msra.mxu0 0.0
    %2555 = vmatprep.subr.mxu0 0.0
    %2556 = vmatpush1.msra.mxu0 0.0
    %2557 = vmatprep.subr.mxu0 0.0
    %2558 = vmatpush1.msra.mxu0 0.0
    %2559 = vmatprep.subr.mxu0 0.0
    %2560 = vmatpush1.msra.mxu0 0.0
    %2561 = vmatprep.subr.mxu0 0.0
    %2562 = vmatpush1.msra.mxu0 0.0
    %2563 = vmatprep.subr.mxu0 0.0
    %2564 = vmatpush1.msra.mxu0 0.0
    %2565 = vmatprep.subr.mxu0 0.0
    %2566 = vmatpush1.msra.mxu0 0.0
    %2567 = vmatprep.mubr.f32.mxu0 0.0
    %2568 = vmatmul.mubr.f32.gmra.mrb[0].mxu0 %v2475
    %v2569 = vpop.f32.mrb[0].mxu0
    %v2570 = vadd.f32 0.0, %v2569
    %v2571 = vpop.f32.mrb[0].mxu0
    %v2572 = vadd.f32 0.0, %v2571
    %2573 = vdwg.mxu0
    %2574 = vmatprep.subr.mxu0 %v2240
    %2575 = vmatpush1.msra.mxu0 %v2239
    %2576 = vmatprep.subr.mxu0 %v2244
    %2577 = vmatpush1.msra.mxu0 %v2243
    %2578 = vmatprep.subr.mxu0 %v2248
    %2579 = vmatpush1.msra.mxu0 %v2247
    %2580 = vmatprep.subr.mxu0 %v2252
    %2581 = vmatpush1.msra.mxu0 %v2251
    %2582 = vmatprep.subr.mxu0 %v2256
    %2583 = vmatpush1.msra.mxu0 %v2255
    %2584 = vmatprep.subr.mxu0 %v2260
    %2585 = vmatpush1.msra.mxu0 %v2259
    %2586 = vmatprep.subr.mxu0 %v2264
    %2587 = vmatpush1.msra.mxu0 %v2263
    %2588 = vmatprep.subr.mxu0 %v2268
    %2589 = vmatpush1.msra.mxu0 %v2267
    %2590 = vmatprep.subr.mxu0 %v2272
    %2591 = vmatpush1.msra.mxu0 %v2271
    %2592 = vmatprep.subr.mxu0 %v2276
    %2593 = vmatpush1.msra.mxu0 %v2275
    %2594 = vmatprep.subr.mxu0 %v2280
    %2595 = vmatpush1.msra.mxu0 %v2279
    %2596 = vmatprep.subr.mxu0 %v2284
    %2597 = vmatpush1.msra.mxu0 %v2283
    %2598 = vmatprep.subr.mxu0 %v2288
    %2599 = vmatpush1.msra.mxu0 %v2287
    %2600 = vmatprep.subr.mxu0 %v2292
    %2601 = vmatpush1.msra.mxu0 %v2291
    %2602 = vmatprep.subr.mxu0 %v2296
    %2603 = vmatpush1.msra.mxu0 %v2295
    %2604 = vmatprep.subr.mxu0 %v2300
    %2605 = vmatpush1.msra.mxu0 %v2299
    %2606 = vmatprep.subr.mxu0 0.0
    %2607 = vmatpush1.msra.mxu0 0.0
    %2608 = vmatprep.subr.mxu0 0.0
    %2609 = vmatpush1.msra.mxu0 0.0
    %2610 = vmatprep.subr.mxu0 0.0
    %2611 = vmatpush1.msra.mxu0 0.0
    %2612 = vmatprep.subr.mxu0 0.0
    %2613 = vmatpush1.msra.mxu0 0.0
    %2614 = vmatprep.subr.mxu0 0.0
    %2615 = vmatpush1.msra.mxu0 0.0
    %2616 = vmatprep.subr.mxu0 0.0
    %2617 = vmatpush1.msra.mxu0 0.0
    %2618 = vmatprep.subr.mxu0 0.0
    %2619 = vmatpush1.msra.mxu0 0.0
    %2620 = vmatprep.subr.mxu0 0.0
    %2621 = vmatpush1.msra.mxu0 0.0
    %2622 = vmatprep.subr.mxu0 0.0
    %2623 = vmatpush1.msra.mxu0 0.0
    %2624 = vmatprep.subr.mxu0 0.0
    %2625 = vmatpush1.msra.mxu0 0.0
    %2626 = vmatprep.subr.mxu0 0.0
    %2627 = vmatpush1.msra.mxu0 0.0
    %2628 = vmatprep.subr.mxu0 0.0
    %2629 = vmatpush1.msra.mxu0 0.0
    %2630 = vmatprep.subr.mxu0 0.0
    %2631 = vmatpush1.msra.mxu0 0.0
    %2632 = vmatprep.subr.mxu0 0.0
    %2633 = vmatpush1.msra.mxu0 0.0
    %2634 = vmatprep.subr.mxu0 0.0
    %2635 = vmatpush1.msra.mxu0 0.0
    %2636 = vmatprep.subr.mxu0 0.0
    %2637 = vmatpush1.msra.mxu0 0.0
    %2638 = vmatprep.mubr.f32.mxu0 0.0
    %2639 = vmatmul.mubr.f32.gmra.mrb[0].mxu0 %v2475
    %v2640 = vpop.f32.mrb[0].mxu0
    %v2641 = vadd.f32 0.0, %v2640
    %v2642 = vpop.f32.mrb[0].mxu0
    %v2643 = vadd.f32 0.0, %v2642
    %2644 = vdwg.mxu0
    %v2649 = vrot.slane %v2570, 6
    %v2650 = vrot.slane %v2572, 6
    %v2651 = vrot.slane %v2641, 6
    %v2652 = vrot.slane %v2643, 6
    %v2657 = vadd.f32 %v385, %v2649
    %v2658 = vadd.f32 %v387, %v2650
    %v2659 = vadd.f32 %v456, %v2651
    %v2660 = vadd.f32 %v458, %v2652
    %v2661 = vxor.u32 %v2657, 2147483648
    %v2662 = vxor.u32 %v2658, 2147483648
    %v2663 = vxor.u32 %v2659, 2147483648
    %v2664 = vmul.f32 %v2661, 1.442695
    %v2665 = vpow.pop %v2664
    %v2666 = vmul.f32 %v2662, 1.442695
    %v2667 = vpow.pop %v2666
    %v2668 = vmul.f32 %v2663, 1.442695
    %v2669 = vpow.pop %v2668
    %v2670 = vadd.f32 %v2665, 1.0
    %v2671 = vadd.f32 %v2667, 1.0
    %v2672 = vadd.f32 %v2669, 1.0
    %v2673 = vrcp.pop %v2670
    %v2674 = vmul.f32 1.0, %v2673
    %v2675 = vrcp.pop %v2671
    %v2676 = vmul.f32 1.0, %v2675
    %v2677 = vrcp.pop %v2672
    %v2678 = vmul.f32 1.0, %v2677
    %v2679 = vtanh.pop %v2660
    %v2681 = vrot.slane %v2473, 6
    %v2683 = vmul.f32 %v2676, %v2681
    %v2684 = vmul.f32 %v2674, %v2679
    %v2685 = vadd.f32 %v2683, %v2684
    %v2686 = vtanh.pop %v2685
    %v2687 = vmul.f32 %v2678, %v2686
    %v2690 = vunpack.c.l.s4 1966171168
    %v2691 = vunpack.c.0.s8 %v2690
    %v2692 = vlaneseq
    %v2693 = vshrl.u32 %v2692, 7
    %v2694 = vsub.s32 %v2691, %v2693
    %v2695 = vrot.slane %v2687, %v2694
    %v2696 = vcombine.high %v2695, %v2695
    %v2698 = vunpack.c.l.s4 1966171168
    %v2699 = vunpack.c.0.s8 %v2698
    %v2700 = vlaneseq
    %v2701 = vshrl.u32 %v2700, 7
    %v2702 = vsub.s32 %v2699, %v2701
    %v2703 = vrot.slane %v2695, %v2702
    %v2705 = vunpack.c.l.s4 1966171168
    %v2706 = vunpack.c.0.s8 %v2705
    %v2707 = vlaneseq
    %v2708 = vshrl.u32 %v2707, 7
    %v2709 = vsub.s32 %v2706, %v2708
    %v2710 = vrot.slane %v2696, %v2709
    %v2711 = vcombine.high %v2703, %v2703
    %v2712 = vcombine.high %v2710, %v2710
    %2715 = vst [vmem:[#allocation3 + $0x1] sm:$0x1] %v2711
    %2716 = vst [vmem:[#allocation3 + $0x5] sm:$0x1] %v2712
    %v2717 = vrot.slane %v2687, 2
    %2719 = vmatprep.subr.mxu0 %v2238
    %2720 = vmatpush1.msra.mxu0 %v2237
    %2721 = vmatprep.subr.mxu0 %v2242
    %2722 = vmatpush1.msra.mxu0 %v2241
    %2723 = vmatprep.subr.mxu0 %v2246
    %2724 = vmatpush1.msra.mxu0 %v2245
    %2725 = vmatprep.subr.mxu0 %v2250
    %2726 = vmatpush1.msra.mxu0 %v2249
    %2727 = vmatprep.subr.mxu0 %v2254
    %2728 = vmatpush1.msra.mxu0 %v2253
    %2729 = vmatprep.subr.mxu0 %v2258
    %2730 = vmatpush1.msra.mxu0 %v2257
    %2731 = vmatprep.subr.mxu0 %v2262
    %2732 = vmatpush1.msra.mxu0 %v2261
    %2733 = vmatprep.subr.mxu0 %v2266
    %2734 = vmatpush1.msra.mxu0 %v2265
    %2735 = vmatprep.subr.mxu0 %v2270
    %2736 = vmatpush1.msra.mxu0 %v2269
    %2737 = vmatprep.subr.mxu0 %v2274
    %2738 = vmatpush1.msra.mxu0 %v2273
    %2739 = vmatprep.subr.mxu0 %v2278
    %2740 = vmatpush1.msra.mxu0 %v2277
    %2741 = vmatprep.subr.mxu0 %v2282
    %2742 = vmatpush1.msra.mxu0 %v2281
    %2743 = vmatprep.subr.mxu0 %v2286
    %2744 = vmatpush1.msra.mxu0 %v2285
    %2745 = vmatprep.subr.mxu0 %v2290
    %2746 = vmatpush1.msra.mxu0 %v2289
    %2747 = vmatprep.subr.mxu0 %v2294
    %2748 = vmatpush1.msra.mxu0 %v2293
    %2749 = vmatprep.subr.mxu0 %v2298
    %2750 = vmatpush1.msra.mxu0 %v2297
    %2751 = vmatprep.subr.mxu0 0.0
    %2752 = vmatpush1.msra.mxu0 0.0
    %2753 = vmatprep.subr.mxu0 0.0
    %2754 = vmatpush1.msra.mxu0 0.0
    %2755 = vmatprep.subr.mxu0 0.0
    %2756 = vmatpush1.msra.mxu0 0.0
    %2757 = vmatprep.subr.mxu0 0.0
    %2758 = vmatpush1.msra.mxu0 0.0
    %2759 = vmatprep.subr.mxu0 0.0
    %2760 = vmatpush1.msra.mxu0 0.0
    %2761 = vmatprep.subr.mxu0 0.0
    %2762 = vmatpush1.msra.mxu0 0.0
    %2763 = vmatprep.subr.mxu0 0.0
    %2764 = vmatpush1.msra.mxu0 0.0
    %2765 = vmatprep.subr.mxu0 0.0
    %2766 = vmatpush1.msra.mxu0 0.0
    %2767 = vmatprep.subr.mxu0 0.0
    %2768 = vmatpush1.msra.mxu0 0.0
    %2769 = vmatprep.subr.mxu0 0.0
    %2770 = vmatpush1.msra.mxu0 0.0
    %2771 = vmatprep.subr.mxu0 0.0
    %2772 = vmatpush1.msra.mxu0 0.0
    %2773 = vmatprep.subr.mxu0 0.0
    %2774 = vmatpush1.msra.mxu0 0.0
    %2775 = vmatprep.subr.mxu0 0.0
    %2776 = vmatpush1.msra.mxu0 0.0
    %2777 = vmatprep.subr.mxu0 0.0
    %2778 = vmatpush1.msra.mxu0 0.0
    %2779 = vmatprep.subr.mxu0 0.0
    %2780 = vmatpush1.msra.mxu0 0.0
    %2781 = vmatprep.subr.mxu0 0.0
    %2782 = vmatpush1.msra.mxu0 0.0
    %2783 = vmatprep.mubr.f32.mxu0 0.0
    %2784 = vmatmul.mubr.f32.gmra.mrb[0].mxu0 %v2717
    %v2785 = vpop.f32.mrb[0].mxu0
    %v2786 = vadd.f32 0.0, %v2785
    %v2787 = vpop.f32.mrb[0].mxu0
    %v2788 = vadd.f32 0.0, %v2787
    %2789 = vdwg.mxu0
    %2790 = vmatprep.subr.mxu0 %v2240
    %2791 = vmatpush1.msra.mxu0 %v2239
    %2792 = vmatprep.subr.mxu0 %v2244
    %2793 = vmatpush1.msra.mxu0 %v2243
    %2794 = vmatprep.subr.mxu0 %v2248
    %2795 = vmatpush1.msra.mxu0 %v2247
    %2796 = vmatprep.subr.mxu0 %v2252
    %2797 = vmatpush1.msra.mxu0 %v2251
    %2798 = vmatprep.subr.mxu0 %v2256
    %2799 = vmatpush1.msra.mxu0 %v2255
    %2800 = vmatprep.subr.mxu0 %v2260
    %2801 = vmatpush1.msra.mxu0 %v2259
    %2802 = vmatprep.subr.mxu0 %v2264
    %2803 = vmatpush1.msra.mxu0 %v2263
    %2804 = vmatprep.subr.mxu0 %v2268
    %2805 = vmatpush1.msra.mxu0 %v2267
    %2806 = vmatprep.subr.mxu0 %v2272
    %2807 = vmatpush1.msra.mxu0 %v2271
    %2808 = vmatprep.subr.mxu0 %v2276
    %2809 = vmatpush1.msra.mxu0 %v2275
    %2810 = vmatprep.subr.mxu0 %v2280
    %2811 = vmatpush1.msra.mxu0 %v2279
    %2812 = vmatprep.subr.mxu0 %v2284
    %2813 = vmatpush1.msra.mxu0 %v2283
    %2814 = vmatprep.subr.mxu0 %v2288
    %2815 = vmatpush1.msra.mxu0 %v2287
    %2816 = vmatprep.subr.mxu0 %v2292
    %2817 = vmatpush1.msra.mxu0 %v2291
    %2818 = vmatprep.subr.mxu0 %v2296
    %2819 = vmatpush1.msra.mxu0 %v2295
    %2820 = vmatprep.subr.mxu0 %v2300
    %2821 = vmatpush1.msra.mxu0 %v2299
    %2822 = vmatprep.subr.mxu0 0.0
    %2823 = vmatpush1.msra.mxu0 0.0
    %2824 = vmatprep.subr.mxu0 0.0
    %2825 = vmatpush1.msra.mxu0 0.0
    %2826 = vmatprep.subr.mxu0 0.0
    %2827 = vmatpush1.msra.mxu0 0.0
    %2828 = vmatprep.subr.mxu0 0.0
    %2829 = vmatpush1.msra.mxu0 0.0
    %2830 = vmatprep.subr.mxu0 0.0
    %2831 = vmatpush1.msra.mxu0 0.0
    %2832 = vmatprep.subr.mxu0 0.0
    %2833 = vmatpush1.msra.mxu0 0.0
    %2834 = vmatprep.subr.mxu0 0.0
    %2835 = vmatpush1.msra.mxu0 0.0
    %2836 = vmatprep.subr.mxu0 0.0
    %2837 = vmatpush1.msra.mxu0 0.0
    %2838 = vmatprep.subr.mxu0 0.0
    %2839 = vmatpush1.msra.mxu0 0.0
    %2840 = vmatprep.subr.mxu0 0.0
    %2841 = vmatpush1.msra.mxu0 0.0
    %2842 = vmatprep.subr.mxu0 0.0
    %2843 = vmatpush1.msra.mxu0 0.0
    %2844 = vmatprep.subr.mxu0 0.0
    %2845 = vmatpush1.msra.mxu0 0.0
    %2846 = vmatprep.subr.mxu0 0.0
    %2847 = vmatpush1.msra.mxu0 0.0
    %2848 = vmatprep.subr.mxu0 0.0
    %2849 = vmatpush1.msra.mxu0 0.0
    %2850 = vmatprep.subr.mxu0 0.0
    %2851 = vmatpush1.msra.mxu0 0.0
    %2852 = vmatprep.subr.mxu0 0.0
    %2853 = vmatpush1.msra.mxu0 0.0
    %2854 = vmatprep.mubr.f32.mxu0 0.0
    %2855 = vmatmul.mubr.f32.gmra.mrb[0].mxu0 %v2717
    %v2856 = vpop.f32.mrb[0].mxu0
    %v2857 = vadd.f32 0.0, %v2856
    %v2858 = vpop.f32.mrb[0].mxu0
    %v2859 = vadd.f32 0.0, %v2858
    %2860 = vdwg.mxu0
    %v2865 = vrot.slane %v2786, 4
    %v2866 = vrot.slane %v2788, 4
    %v2867 = vrot.slane %v2857, 4
    %v2868 = vrot.slane %v2859, 4
    %v2873 = vadd.f32 %v385, %v2865
    %v2874 = vadd.f32 %v387, %v2866
    %v2875 = vadd.f32 %v456, %v2867
    %v2876 = vadd.f32 %v458, %v2868
    %v2877 = vxor.u32 %v2873, 2147483648
    %v2878 = vxor.u32 %v2874, 2147483648
    %v2879 = vxor.u32 %v2875, 2147483648
    %v2880 = vmul.f32 %v2877, 1.442695
    %v2881 = vpow.pop %v2880
    %v2882 = vmul.f32 %v2878, 1.442695
    %v2883 = vpow.pop %v2882
    %v2884 = vmul.f32 %v2879, 1.442695
    %v2885 = vpow.pop %v2884
    %v2886 = vadd.f32 %v2881, 1.0
    %v2887 = vadd.f32 %v2883, 1.0
    %v2888 = vadd.f32 %v2885, 1.0
    %v2889 = vrcp.pop %v2886
    %v2890 = vmul.f32 1.0, %v2889
    %v2891 = vrcp.pop %v2887
    %v2892 = vmul.f32 1.0, %v2891
    %v2893 = vrcp.pop %v2888
    %v2894 = vmul.f32 1.0, %v2893
    %v2895 = vtanh.pop %v2876
    %v2897 = vrot.slane %v2685, 6
    %v2899 = vmul.f32 %v2892, %v2897
    %v2900 = vmul.f32 %v2890, %v2895
    %v2901 = vadd.f32 %v2899, %v2900
    %v2902 = vtanh.pop %v2901
    %v2903 = vmul.f32 %v2894, %v2902
    %v2905 = vcombine.high %v2903, %v2903
    %v2907 = vunpack.c.l.s4 1966171168
    %v2908 = vunpack.c.0.s8 %v2907
    %v2909 = vlaneseq
    %v2910 = vshrl.u32 %v2909, 7
    %v2911 = vsub.s32 %v2908, %v2910
    %v2912 = vrot.slane %v2905, %v2911
    %v2913 = vcombine.high %v2912, %v2912
    %v2915 = vunpack.c.l.s4 1966171168
    %v2916 = vunpack.c.0.s8 %v2915
    %v2917 = vlaneseq
    %v2918 = vshrl.u32 %v2917, 7
    %v2919 = vsub.s32 %v2916, %v2918
    %v2920 = vrot.slane %v2912, %v2919
    %v2922 = vunpack.c.l.s4 1966171168
    %v2923 = vunpack.c.0.s8 %v2922
    %v2924 = vlaneseq
    %v2925 = vshrl.u32 %v2924, 7
    %v2926 = vsub.s32 %v2923, %v2925
    %v2927 = vrot.slane %v2913, %v2926
    %2930 = vst [vmem:[#allocation3 + $0x2] sm:$0x1] %v2920
    %2931 = vst [vmem:[#allocation3 + $0x6] sm:$0x1] %v2927
    %v2932 = vrot.slane %v2903, 4
    %2934 = vmatprep.subr.mxu0 %v2238
    %2935 = vmatpush1.msra.mxu0 %v2237
    %2936 = vmatprep.subr.mxu0 %v2242
    %2937 = vmatpush1.msra.mxu0 %v2241
    %2938 = vmatprep.subr.mxu0 %v2246
    %2939 = vmatpush1.msra.mxu0 %v2245
    %2940 = vmatprep.subr.mxu0 %v2250
    %2941 = vmatpush1.msra.mxu0 %v2249
    %2942 = vmatprep.subr.mxu0 %v2254
    %2943 = vmatpush1.msra.mxu0 %v2253
    %2944 = vmatprep.subr.mxu0 %v2258
    %2945 = vmatpush1.msra.mxu0 %v2257
    %2946 = vmatprep.subr.mxu0 %v2262
    %2947 = vmatpush1.msra.mxu0 %v2261
    %2948 = vmatprep.subr.mxu0 %v2266
    %2949 = vmatpush1.msra.mxu0 %v2265
    %2950 = vmatprep.subr.mxu0 %v2270
    %2951 = vmatpush1.msra.mxu0 %v2269
    %2952 = vmatprep.subr.mxu0 %v2274
    %2953 = vmatpush1.msra.mxu0 %v2273
    %2954 = vmatprep.subr.mxu0 %v2278
    %2955 = vmatpush1.msra.mxu0 %v2277
    %2956 = vmatprep.subr.mxu0 %v2282
    %2957 = vmatpush1.msra.mxu0 %v2281
    %2958 = vmatprep.subr.mxu0 %v2286
    %2959 = vmatpush1.msra.mxu0 %v2285
    %2960 = vmatprep.subr.mxu0 %v2290
    %2961 = vmatpush1.msra.mxu0 %v2289
    %2962 = vmatprep.subr.mxu0 %v2294
    %2963 = vmatpush1.msra.mxu0 %v2293
    %2964 = vmatprep.subr.mxu0 %v2298
    %2965 = vmatpush1.msra.mxu0 %v2297
    %2966 = vmatprep.subr.mxu0 0.0
    %2967 = vmatpush1.msra.mxu0 0.0
    %2968 = vmatprep.subr.mxu0 0.0
    %2969 = vmatpush1.msra.mxu0 0.0
    %2970 = vmatprep.subr.mxu0 0.0
    %2971 = vmatpush1.msra.mxu0 0.0
    %2972 = vmatprep.subr.mxu0 0.0
    %2973 = vmatpush1.msra.mxu0 0.0
    %2974 = vmatprep.subr.mxu0 0.0
    %2975 = vmatpush1.msra.mxu0 0.0
    %2976 = vmatprep.subr.mxu0 0.0
    %2977 = vmatpush1.msra.mxu0 0.0
    %2978 = vmatprep.subr.mxu0 0.0
    %2979 = vmatpush1.msra.mxu0 0.0
    %2980 = vmatprep.subr.mxu0 0.0
    %2981 = vmatpush1.msra.mxu0 0.0
    %2982 = vmatprep.subr.mxu0 0.0
    %2983 = vmatpush1.msra.mxu0 0.0
    %2984 = vmatprep.subr.mxu0 0.0
    %2985 = vmatpush1.msra.mxu0 0.0
    %2986 = vmatprep.subr.mxu0 0.0
    %2987 = vmatpush1.msra.mxu0 0.0
    %2988 = vmatprep.subr.mxu0 0.0
    %2989 = vmatpush1.msra.mxu0 0.0
    %2990 = vmatprep.subr.mxu0 0.0
    %2991 = vmatpush1.msra.mxu0 0.0
    %2992 = vmatprep.subr.mxu0 0.0
    %2993 = vmatpush1.msra.mxu0 0.0
    %2994 = vmatprep.subr.mxu0 0.0
    %2995 = vmatpush1.msra.mxu0 0.0
    %2996 = vmatprep.subr.mxu0 0.0
    %2997 = vmatpush1.msra.mxu0 0.0
    %2998 = vmatprep.mubr.f32.mxu0 0.0
    %2999 = vmatmul.mubr.f32.gmra.mrb[0].mxu0 %v2932
    %v3000 = vpop.f32.mrb[0].mxu0
    %v3001 = vadd.f32 0.0, %v3000
    %v3002 = vpop.f32.mrb[0].mxu0
    %v3003 = vadd.f32 0.0, %v3002
    %3004 = vdwg.mxu0
    %3005 = vmatprep.subr.mxu0 %v2240
    %3006 = vmatpush1.msra.mxu0 %v2239
    %3007 = vmatprep.subr.mxu0 %v2244
    %3008 = vmatpush1.msra.mxu0 %v2243
    %3009 = vmatprep.subr.mxu0 %v2248
    %3010 = vmatpush1.msra.mxu0 %v2247
    %3011 = vmatprep.subr.mxu0 %v2252
    %3012 = vmatpush1.msra.mxu0 %v2251
    %3013 = vmatprep.subr.mxu0 %v2256
    %3014 = vmatpush1.msra.mxu0 %v2255
    %3015 = vmatprep.subr.mxu0 %v2260
    %3016 = vmatpush1.msra.mxu0 %v2259
    %3017 = vmatprep.subr.mxu0 %v2264
    %3018 = vmatpush1.msra.mxu0 %v2263
    %3019 = vmatprep.subr.mxu0 %v2268
    %3020 = vmatpush1.msra.mxu0 %v2267
    %3021 = vmatprep.subr.mxu0 %v2272
    %3022 = vmatpush1.msra.mxu0 %v2271
    %3023 = vmatprep.subr.mxu0 %v2276
    %3024 = vmatpush1.msra.mxu0 %v2275
    %3025 = vmatprep.subr.mxu0 %v2280
    %3026 = vmatpush1.msra.mxu0 %v2279
    %3027 = vmatprep.subr.mxu0 %v2284
    %3028 = vmatpush1.msra.mxu0 %v2283
    %3029 = vmatprep.subr.mxu0 %v2288
    %3030 = vmatpush1.msra.mxu0 %v2287
    %3031 = vmatprep.subr.mxu0 %v2292
    %3032 = vmatpush1.msra.mxu0 %v2291
    %3033 = vmatprep.subr.mxu0 %v2296
    %3034 = vmatpush1.msra.mxu0 %v2295
    %3035 = vmatprep.subr.mxu0 %v2300
    %3036 = vmatpush1.msra.mxu0 %v2299
    %3037 = vmatprep.subr.mxu0 0.0
    %3038 = vmatpush1.msra.mxu0 0.0
    %3039 = vmatprep.subr.mxu0 0.0
    %3040 = vmatpush1.msra.mxu0 0.0
    %3041 = vmatprep.subr.mxu0 0.0
    %3042 = vmatpush1.msra.mxu0 0.0
    %3043 = vmatprep.subr.mxu0 0.0
    %3044 = vmatpush1.msra.mxu0 0.0
    %3045 = vmatprep.subr.mxu0 0.0
    %3046 = vmatpush1.msra.mxu0 0.0
    %3047 = vmatprep.subr.mxu0 0.0
    %3048 = vmatpush1.msra.mxu0 0.0
    %3049 = vmatprep.subr.mxu0 0.0
    %3050 = vmatpush1.msra.mxu0 0.0
    %3051 = vmatprep.subr.mxu0 0.0
    %3052 = vmatpush1.msra.mxu0 0.0
    %3053 = vmatprep.subr.mxu0 0.0
    %3054 = vmatpush1.msra.mxu0 0.0
    %3055 = vmatprep.subr.mxu0 0.0
    %3056 = vmatpush1.msra.mxu0 0.0
    %3057 = vmatprep.subr.mxu0 0.0
    %3058 = vmatpush1.msra.mxu0 0.0
    %3059 = vmatprep.subr.mxu0 0.0
    %3060 = vmatpush1.msra.mxu0 0.0
    %3061 = vmatprep.subr.mxu0 0.0
    %3062 = vmatpush1.msra.mxu0 0.0
    %3063 = vmatprep.subr.mxu0 0.0
    %3064 = vmatpush1.msra.mxu0 0.0
    %3065 = vmatprep.subr.mxu0 0.0
    %3066 = vmatpush1.msra.mxu0 0.0
    %3067 = vmatprep.subr.mxu0 0.0
    %3068 = vmatpush1.msra.mxu0 0.0
    %3069 = vmatprep.mubr.f32.mxu0 0.0
    %3070 = vmatmul.mubr.f32.gmra.mrb[0].mxu0 %v2932
    %v3071 = vpop.f32.mrb[0].mxu0
    %v3072 = vadd.f32 0.0, %v3071
    %v3073 = vpop.f32.mrb[0].mxu0
    %v3074 = vadd.f32 0.0, %v3073
    %3075 = vdwg.mxu0
    %v3080 = vrot.slane %v3001, 2
    %v3081 = vrot.slane %v3003, 2
    %v3082 = vrot.slane %v3072, 2
    %v3083 = vrot.slane %v3074, 2
    %v3088 = vadd.f32 %v385, %v3080
    %v3089 = vadd.f32 %v387, %v3081
    %v3090 = vadd.f32 %v456, %v3082
    %v3091 = vadd.f32 %v458, %v3083
    %v3092 = vxor.u32 %v3088, 2147483648
    %v3093 = vxor.u32 %v3089, 2147483648
    %v3094 = vxor.u32 %v3090, 2147483648
    %v3095 = vmul.f32 %v3092, 1.442695
    %v3096 = vpow.pop %v3095
    %v3097 = vmul.f32 %v3093, 1.442695
    %v3098 = vpow.pop %v3097
    %v3099 = vmul.f32 %v3094, 1.442695
    %v3100 = vpow.pop %v3099
    %v3101 = vadd.f32 %v3096, 1.0
    %v3102 = vadd.f32 %v3098, 1.0
    %v3103 = vadd.f32 %v3100, 1.0
    %v3104 = vrcp.pop %v3101
    %v3105 = vmul.f32 1.0, %v3104
    %v3106 = vrcp.pop %v3102
    %v3107 = vmul.f32 1.0, %v3106
    %v3108 = vrcp.pop %v3103
    %v3109 = vmul.f32 1.0, %v3108
    %v3110 = vtanh.pop %v3091
    %v3112 = vrot.slane %v2901, 6
    %v3114 = vmul.f32 %v3107, %v3112
    %v3115 = vmul.f32 %v3105, %v3110
    %v3116 = vadd.f32 %v3114, %v3115
    %v3117 = vtanh.pop %v3116
    %v3118 = vmul.f32 %v3109, %v3117
    %v3120 = vcombine.high %v3118, %v3118
    %v3122 = vunpack.c.l.s4 1966171168
    %v3123 = vunpack.c.0.s8 %v3122
    %v3124 = vlaneseq
    %v3125 = vshrl.u32 %v3124, 7
    %v3126 = vsub.s32 %v3123, %v3125
    %v3127 = vrot.slane %v3120, %v3126
    %v3128 = vcombine.high %v3127, %v3127
    %v3130 = vunpack.c.l.s4 1966171168
    %v3131 = vunpack.c.0.s8 %v3130
    %v3132 = vlaneseq
    %v3133 = vshrl.u32 %v3132, 7
    %v3134 = vsub.s32 %v3131, %v3133
    %v3135 = vrot.slane %v3127, %v3134
    %v3137 = vunpack.c.l.s4 1966171168
    %v3138 = vunpack.c.0.s8 %v3137
    %v3139 = vlaneseq
    %v3140 = vshrl.u32 %v3139, 7
    %v3141 = vsub.s32 %v3138, %v3140
    %v3142 = vrot.slane %v3128, %v3141
    %v3143 = vcombine.high %v3135, %v3135
    %v3144 = vcombine.high %v3142, %v3142
    %3147 = vst [vmem:[#allocation3 + $0x3] sm:$0x1] %v3143
    %3148 = vst [vmem:[#allocation3 + $0x7] sm:$0x1] %v3144
    %s3149 = smul.u32 128, 1
    %s3150 = sshll.u32 %s3149, 4
    %3151 = dma.done %s70, %s3150
    %s3152 = smul.u32 256, 1
    %s3153 = sshll.u32 %s3152, 4
    %3154 = dma.done %s82, %s3153
    %v3155 = vld [vmem:[#allocation3] sm:$0xf]
    %v3156 = vld [vmem:[#allocation3 + $0x4] sm:$0xf]
    %v3157 = vld [vmem:[#allocation2] sm:$0xff]
    %v3158 = vld [vmem:[#allocation2 + $0x8] sm:$0xff]
    %v3159 = vld [vmem:[#allocation5] sm:$0xff]
    %v3160 = vld [vmem:[#allocation5 + $0x8] sm:$0xff]
    %v3161 = vld [vmem:[#allocation5 + $0x10] sm:$0xff]
    %v3162 = vld [vmem:[#allocation5 + $0x18] sm:$0xff]
    %v3163 = vld [vmem:[#allocation5 + $0x20] sm:$0xff]
    %v3164 = vld [vmem:[#allocation5 + $0x28] sm:$0xff]
    %v3165 = vld [vmem:[#allocation5 + $0x30] sm:$0xff]
    %v3166 = vld [vmem:[#allocation5 + $0x38] sm:$0xff]
    %v3167 = vld [vmem:[#allocation5 + $0x40] sm:$0xff]
    %v3168 = vld [vmem:[#allocation5 + $0x48] sm:$0xff]
    %v3169 = vld [vmem:[#allocation5 + $0x50] sm:$0xff]
    %v3170 = vld [vmem:[#allocation5 + $0x58] sm:$0xff]
    %v3171 = vld [vmem:[#allocation5 + $0x60] sm:$0xff]
    %v3172 = vld [vmem:[#allocation5 + $0x68] sm:$0xff]
    %v3173 = vld [vmem:[#allocation5 + $0x70] sm:$0xff]
    %v3174 = vld [vmem:[#allocation5 + $0x78] sm:$0xff]
    %v3177 = vcombine.low %v3155, %v3156
    %3179 = vmatprep.subr.mxu0 0.0
    %3180 = vmatpush1.msra.mxu0 %v3159
    %3181 = vmatprep.subr.mxu0 0.0
    %3182 = vmatpush1.msra.mxu0 %v3160
    %3183 = vmatprep.subr.mxu0 0.0
    %3184 = vmatpush1.msra.mxu0 %v3161
    %3185 = vmatprep.subr.mxu0 0.0
    %3186 = vmatpush1.msra.mxu0 %v3162
    %3187 = vmatprep.subr.mxu0 0.0
    %3188 = vmatpush1.msra.mxu0 %v3163
    %3189 = vmatprep.subr.mxu0 0.0
    %3190 = vmatpush1.msra.mxu0 %v3164
    %3191 = vmatprep.subr.mxu0 0.0
    %3192 = vmatpush1.msra.mxu0 %v3165
    %3193 = vmatprep.subr.mxu0 0.0
    %3194 = vmatpush1.msra.mxu0 %v3166
    %3195 = vmatprep.subr.mxu0 0.0
    %3196 = vmatpush1.msra.mxu0 %v3167
    %3197 = vmatprep.subr.mxu0 0.0
    %3198 = vmatpush1.msra.mxu0 %v3168
    %3199 = vmatprep.subr.mxu0 0.0
    %3200 = vmatpush1.msra.mxu0 %v3169
    %3201 = vmatprep.subr.mxu0 0.0
    %3202 = vmatpush1.msra.mxu0 %v3170
    %3203 = vmatprep.subr.mxu0 0.0
    %3204 = vmatpush1.msra.mxu0 %v3171
    %3205 = vmatprep.subr.mxu0 0.0
    %3206 = vmatpush1.msra.mxu0 %v3172
    %3207 = vmatprep.subr.mxu0 0.0
    %3208 = vmatpush1.msra.mxu0 %v3173
    %3209 = vmatprep.subr.mxu0 0.0
    %3210 = vmatpush1.msra.mxu0 %v3174
    %3211 = vmatprep.subr.mxu0 0.0
    %3212 = vmatpush1.msra.mxu0 0.0
    %3213 = vmatprep.subr.mxu0 0.0
    %3214 = vmatpush1.msra.mxu0 0.0
    %3215 = vmatprep.subr.mxu0 0.0
    %3216 = vmatpush1.msra.mxu0 0.0
    %3217 = vmatprep.subr.mxu0 0.0
    %3218 = vmatpush1.msra.mxu0 0.0
    %3219 = vmatprep.subr.mxu0 0.0
    %3220 = vmatpush1.msra.mxu0 0.0
    %3221 = vmatprep.subr.mxu0 0.0
    %3222 = vmatpush1.msra.mxu0 0.0
    %3223 = vmatprep.subr.mxu0 0.0
    %3224 = vmatpush1.msra.mxu0 0.0
    %3225 = vmatprep.subr.mxu0 0.0
    %3226 = vmatpush1.msra.mxu0 0.0
    %3227 = vmatprep.subr.mxu0 0.0
    %3228 = vmatpush1.msra.mxu0 0.0
    %3229 = vmatprep.subr.mxu0 0.0
    %3230 = vmatpush1.msra.mxu0 0.0
    %3231 = vmatprep.subr.mxu0 0.0
    %3232 = vmatpush1.msra.mxu0 0.0
    %3233 = vmatprep.subr.mxu0 0.0
    %3234 = vmatpush1.msra.mxu0 0.0
    %3235 = vmatprep.subr.mxu0 0.0
    %3236 = vmatpush1.msra.mxu0 0.0
    %3237 = vmatprep.subr.mxu0 0.0
    %3238 = vmatpush1.msra.mxu0 0.0
    %3239 = vmatprep.subr.mxu0 0.0
    %3240 = vmatpush1.msra.mxu0 0.0
    %3241 = vmatprep.subr.mxu0 0.0
    %3242 = vmatpush1.msra.mxu0 0.0
    %3243 = vmatprep.mubr.f32.mxu0 0.0
    %3244 = vmatmul.mubr.f32.gmra.mrb[0].mxu0 %v3177
    %v3245 = vpop.f32.mrb[0].mxu0
    %v3246 = vadd.f32 0.0, %v3245
    %v3247 = vpop.f32.mrb[0].mxu0
    %3248 = vdwg.mxu0
    %v3250 = vcombine.high %v3246, %v3246
    %3252 = vmatprep.subr.mxu0 0.0
    %3253 = vmatpush1.xpose.msra.mxu0 %v3157
    %3254 = vmatprep.subr.mxu0 0.0
    %3255 = vmatpush1.xpose.msra.mxu0 0.0
    %3256 = vmatprep.subr.mxu0 0.0
    %3257 = vmatpush1.xpose.msra.mxu0 0.0
    %3258 = vmatprep.subr.mxu0 0.0
    %3259 = vmatpush1.xpose.msra.mxu0 0.0
    %3260 = vmatprep.subr.mxu0 0.0
    %3261 = vmatpush1.xpose.msra.mxu0 0.0
    %3262 = vmatprep.subr.mxu0 0.0
    %3263 = vmatpush1.xpose.msra.mxu0 0.0
    %3264 = vmatprep.subr.mxu0 0.0
    %3265 = vmatpush1.xpose.msra.mxu0 0.0
    %3266 = vmatprep.subr.mxu0 0.0
    %3267 = vmatpush1.xpose.msra.mxu0 0.0
    %3268 = vmatprep.subr.mxu0 0.0
    %3269 = vmatpush1.xpose.msra.mxu0 0.0
    %3270 = vmatprep.subr.mxu0 0.0
    %3271 = vmatpush1.xpose.msra.mxu0 0.0
    %3272 = vmatprep.subr.mxu0 0.0
    %3273 = vmatpush1.xpose.msra.mxu0 0.0
    %3274 = vmatprep.subr.mxu0 0.0
    %3275 = vmatpush1.xpose.msra.mxu0 0.0
    %3276 = vmatprep.subr.mxu0 0.0
    %3277 = vmatpush1.xpose.msra.mxu0 0.0
    %3278 = vmatprep.subr.mxu0 0.0
    %3279 = vmatpush1.xpose.msra.mxu0 0.0
    %3280 = vmatprep.subr.mxu0 0.0
    %3281 = vmatpush1.xpose.msra.mxu0 0.0
    %3282 = vmatprep.subr.mxu0 0.0
    %3283 = vmatpush1.xpose.msra.mxu0 0.0
    %3284 = vmatprep.subr.mxu0 0.0
    %3285 = vmatpush1.xpose.msra.mxu0 0.0
    %3286 = vmatprep.subr.mxu0 0.0
    %3287 = vmatpush1.xpose.msra.mxu0 0.0
    %3288 = vmatprep.subr.mxu0 0.0
    %3289 = vmatpush1.xpose.msra.mxu0 0.0
    %3290 = vmatprep.subr.mxu0 0.0
    %3291 = vmatpush1.xpose.msra.mxu0 0.0
    %3292 = vmatprep.subr.mxu0 0.0
    %3293 = vmatpush1.xpose.msra.mxu0 0.0
    %3294 = vmatprep.subr.mxu0 0.0
    %3295 = vmatpush1.xpose.msra.mxu0 0.0
    %3296 = vmatprep.subr.mxu0 0.0
    %3297 = vmatpush1.xpose.msra.mxu0 0.0
    %3298 = vmatprep.subr.mxu0 0.0
    %3299 = vmatpush1.xpose.msra.mxu0 0.0
    %3300 = vmatprep.subr.mxu0 0.0
    %3301 = vmatpush1.xpose.msra.mxu0 0.0
    %3302 = vmatprep.subr.mxu0 0.0
    %3303 = vmatpush1.xpose.msra.mxu0 0.0
    %3304 = vmatprep.subr.mxu0 0.0
    %3305 = vmatpush1.xpose.msra.mxu0 0.0
    %3306 = vmatprep.subr.mxu0 0.0
    %3307 = vmatpush1.xpose.msra.mxu0 0.0
    %3308 = vmatprep.subr.mxu0 0.0
    %3309 = vmatpush1.xpose.msra.mxu0 0.0
    %3310 = vmatprep.subr.mxu0 0.0
    %3311 = vmatpush1.xpose.msra.mxu0 0.0
    %3312 = vmatprep.subr.mxu0 0.0
    %3313 = vmatpush1.xpose.msra.mxu0 0.0
    %3314 = vmatprep.subr.mxu0 0.0
    %3315 = vmatpush1.xpose.msra.mxu0 0.0
    %3316 = vmatprep.mubr.f32.mxu0 0.0
    %3317 = vmatmul.mubr.f32.gmra.mrb[0].mxu0 %v3246
    %v3318 = vpop.f32.mrb[0].mxu0
    %v3319 = vadd.f32 0.0, %v3318
    %v3320 = vpop.f32.mrb[0].mxu0
    %3321 = vdwg.mxu0
    %3322 = vmatprep.subr.mxu0 0.0
    %3323 = vmatpush1.xpose.msra.mxu0 %v3158
    %3324 = vmatprep.subr.mxu0 0.0
    %3325 = vmatpush1.xpose.msra.mxu0 0.0
    %3326 = vmatprep.subr.mxu0 0.0
    %3327 = vmatpush1.xpose.msra.mxu0 0.0
    %3328 = vmatprep.subr.mxu0 0.0
    %3329 = vmatpush1.xpose.msra.mxu0 0.0
    %3330 = vmatprep.subr.mxu0 0.0
    %3331 = vmatpush1.xpose.msra.mxu0 0.0
    %3332 = vmatprep.subr.mxu0 0.0
    %3333 = vmatpush1.xpose.msra.mxu0 0.0
    %3334 = vmatprep.subr.mxu0 0.0
    %3335 = vmatpush1.xpose.msra.mxu0 0.0
    %3336 = vmatprep.subr.mxu0 0.0
    %3337 = vmatpush1.xpose.msra.mxu0 0.0
    %3338 = vmatprep.subr.mxu0 0.0
    %3339 = vmatpush1.xpose.msra.mxu0 0.0
    %3340 = vmatprep.subr.mxu0 0.0
    %3341 = vmatpush1.xpose.msra.mxu0 0.0
    %3342 = vmatprep.subr.mxu0 0.0
    %3343 = vmatpush1.xpose.msra.mxu0 0.0
    %3344 = vmatprep.subr.mxu0 0.0
    %3345 = vmatpush1.xpose.msra.mxu0 0.0
    %3346 = vmatprep.subr.mxu0 0.0
    %3347 = vmatpush1.xpose.msra.mxu0 0.0
    %3348 = vmatprep.subr.mxu0 0.0
    %3349 = vmatpush1.xpose.msra.mxu0 0.0
    %3350 = vmatprep.subr.mxu0 0.0
    %3351 = vmatpush1.xpose.msra.mxu0 0.0
    %3352 = vmatprep.subr.mxu0 0.0
    %3353 = vmatpush1.xpose.msra.mxu0 0.0
    %3354 = vmatprep.subr.mxu0 0.0
    %3355 = vmatpush1.xpose.msra.mxu0 0.0
    %3356 = vmatprep.subr.mxu0 0.0
    %3357 = vmatpush1.xpose.msra.mxu0 0.0
    %3358 = vmatprep.subr.mxu0 0.0
    %3359 = vmatpush1.xpose.msra.mxu0 0.0
    %3360 = vmatprep.subr.mxu0 0.0
    %3361 = vmatpush1.xpose.msra.mxu0 0.0
    %3362 = vmatprep.subr.mxu0 0.0
    %3363 = vmatpush1.xpose.msra.mxu0 0.0
    %3364 = vmatprep.subr.mxu0 0.0
    %3365 = vmatpush1.xpose.msra.mxu0 0.0
    %3366 = vmatprep.subr.mxu0 0.0
    %3367 = vmatpush1.xpose.msra.mxu0 0.0
    %3368 = vmatprep.subr.mxu0 0.0
    %3369 = vmatpush1.xpose.msra.mxu0 0.0
    %3370 = vmatprep.subr.mxu0 0.0
    %3371 = vmatpush1.xpose.msra.mxu0 0.0
    %3372 = vmatprep.subr.mxu0 0.0
    %3373 = vmatpush1.xpose.msra.mxu0 0.0
    %3374 = vmatprep.subr.mxu0 0.0
    %3375 = vmatpush1.xpose.msra.mxu0 0.0
    %3376 = vmatprep.subr.mxu0 0.0
    %3377 = vmatpush1.xpose.msra.mxu0 0.0
    %3378 = vmatprep.subr.mxu0 0.0
    %3379 = vmatpush1.xpose.msra.mxu0 0.0
    %3380 = vmatprep.subr.mxu0 0.0
    %3381 = vmatpush1.xpose.msra.mxu0 0.0
    %3382 = vmatprep.subr.mxu0 0.0
    %3383 = vmatpush1.xpose.msra.mxu0 0.0
    %3384 = vmatprep.subr.mxu0 0.0
    %3385 = vmatpush1.xpose.msra.mxu0 0.0
    %3386 = vmatprep.mubr.f32.mxu0 0.0
    %3387 = vmatmul.mubr.f32.gmra.mrb[0].mxu0 %v3250
    %v3388 = vpop.f32.mrb[0].mxu0
    %v3389 = vadd.f32 0.0, %v3388
    %v3390 = vpop.f32.mrb[0].mxu0
    %3391 = vdwg.mxu0
    %vm3392 = vcmask 60416
    %v3393 = vsel %vm3392, %v3319, -inf
    %3394 = vmax.xlane.f32.xlu0 %v3393
    %v3395 = vpop.xlane.xlu0 %3394
    %v3396 = vsel %vm3392, %v3389, -inf
    %3397 = vmax.xlane.f32.xlu0 %v3396
    %v3398 = vpop.xlane.xlu0 %3397
    %v3399 = vsub.f32 %v3319, %v3395
    %v3400 = vsub.f32 %v3389, %v3398
    %v3401 = vmul.f32 %v3399, 1.442695
    %v3402 = vpow.pop %v3401
    %v3403 = vmul.f32 %v3400, 1.442695
    %v3404 = vpow.pop %v3403
    %v3405 = vsel %vm3392, %v3402, 0.0
    %3406 = vadd.xlane.f32.xlu0 %v3405
    %v3407 = vpop.xlane.xlu0 %3406
    %v3408 = vsel %vm3392, %v3404, 0.0
    %3409 = vadd.xlane.f32.xlu0 %v3408
    %v3410 = vpop.xlane.xlu0 %3409
    %v3411 = vrcp.pop %v3407
    %v3412 = vmul.f32 %v3402, %v3411
    %v3413 = vrcp.pop %v3410
    %v3414 = vmul.f32 %v3404, %v3413
    %v3416 = vsel %vm314, %v3412, 0
    %3418 = vmatprep.subr.mxu0 0.0
    %3419 = vmatpush1.msra.mxu0 %v3157
    %3420 = vmatprep.subr.mxu0 0.0
    %3421 = vmatpush1.msra.mxu0 0.0
    %3422 = vmatprep.subr.mxu0 0.0
    %3423 = vmatpush1.msra.mxu0 0.0
    %3424 = vmatprep.subr.mxu0 0.0
    %3425 = vmatpush1.msra.mxu0 0.0
    %3426 = vmatprep.subr.mxu0 0.0
    %3427 = vmatpush1.msra.mxu0 0.0
    %3428 = vmatprep.subr.mxu0 0.0
    %3429 = vmatpush1.msra.mxu0 0.0
    %3430 = vmatprep.subr.mxu0 0.0
    %3431 = vmatpush1.msra.mxu0 0.0
    %3432 = vmatprep.subr.mxu0 0.0
    %3433 = vmatpush1.msra.mxu0 0.0
    %3434 = vmatprep.subr.mxu0 0.0
    %3435 = vmatpush1.msra.mxu0 0.0
    %3436 = vmatprep.subr.mxu0 0.0
    %3437 = vmatpush1.msra.mxu0 0.0
    %3438 = vmatprep.subr.mxu0 0.0
    %3439 = vmatpush1.msra.mxu0 0.0
    %3440 = vmatprep.subr.mxu0 0.0
    %3441 = vmatpush1.msra.mxu0 0.0
    %3442 = vmatprep.subr.mxu0 0.0
    %3443 = vmatpush1.msra.mxu0 0.0
    %3444 = vmatprep.subr.mxu0 0.0
    %3445 = vmatpush1.msra.mxu0 0.0
    %3446 = vmatprep.subr.mxu0 0.0
    %3447 = vmatpush1.msra.mxu0 0.0
    %3448 = vmatprep.subr.mxu0 0.0
    %3449 = vmatpush1.msra.mxu0 0.0
    %3450 = vmatprep.subr.mxu0 0.0
    %3451 = vmatpush1.msra.mxu0 0.0
    %3452 = vmatprep.subr.mxu0 0.0
    %3453 = vmatpush1.msra.mxu0 0.0
    %3454 = vmatprep.subr.mxu0 0.0
    %3455 = vmatpush1.msra.mxu0 0.0
    %3456 = vmatprep.subr.mxu0 0.0
    %3457 = vmatpush1.msra.mxu0 0.0
    %3458 = vmatprep.subr.mxu0 0.0
    %3459 = vmatpush1.msra.mxu0 0.0
    %3460 = vmatprep.subr.mxu0 0.0
    %3461 = vmatpush1.msra.mxu0 0.0
    %3462 = vmatprep.subr.mxu0 0.0
    %3463 = vmatpush1.msra.mxu0 0.0
    %3464 = vmatprep.subr.mxu0 0.0
    %3465 = vmatpush1.msra.mxu0 0.0
    %3466 = vmatprep.subr.mxu0 0.0
    %3467 = vmatpush1.msra.mxu0 0.0
    %3468 = vmatprep.subr.mxu0 0.0
    %3469 = vmatpush1.msra.mxu0 0.0
    %3470 = vmatprep.subr.mxu0 0.0
    %3471 = vmatpush1.msra.mxu0 0.0
    %3472 = vmatprep.subr.mxu0 0.0
    %3473 = vmatpush1.msra.mxu0 0.0
    %3474 = vmatprep.subr.mxu0 0.0
    %3475 = vmatpush1.msra.mxu0 0.0
    %3476 = vmatprep.subr.mxu0 0.0
    %3477 = vmatpush1.msra.mxu0 0.0
    %3478 = vmatprep.subr.mxu0 0.0
    %3479 = vmatpush1.msra.mxu0 0.0
    %3480 = vmatprep.subr.mxu0 0.0
    %3481 = vmatpush1.msra.mxu0 0.0
    %3482 = vmatprep.mubr.f32.mxu0 0.0
    %3483 = vmatmul.mubr.f32.gmra.mrb[0].mxu0 %v3416
    %v3484 = vpop.f32.mrb[0].mxu0
    %v3485 = vadd.f32 0.0, %v3484
    %v3486 = vpop.f32.mrb[0].mxu0
    %3487 = vdwg.mxu0
    %v3489 = vsel %vm314, %v3414, 0
    %3491 = vmatprep.subr.mxu0 0.0
    %3492 = vmatpush1.msra.mxu0 %v3158
    %3493 = vmatprep.subr.mxu0 0.0
    %3494 = vmatpush1.msra.mxu0 0.0
    %3495 = vmatprep.subr.mxu0 0.0
    %3496 = vmatpush1.msra.mxu0 0.0
    %3497 = vmatprep.subr.mxu0 0.0
    %3498 = vmatpush1.msra.mxu0 0.0
    %3499 = vmatprep.subr.mxu0 0.0
    %3500 = vmatpush1.msra.mxu0 0.0
    %3501 = vmatprep.subr.mxu0 0.0
    %3502 = vmatpush1.msra.mxu0 0.0
    %3503 = vmatprep.subr.mxu0 0.0
    %3504 = vmatpush1.msra.mxu0 0.0
    %3505 = vmatprep.subr.mxu0 0.0
    %3506 = vmatpush1.msra.mxu0 0.0
    %3507 = vmatprep.subr.mxu0 0.0
    %3508 = vmatpush1.msra.mxu0 0.0
    %3509 = vmatprep.subr.mxu0 0.0
    %3510 = vmatpush1.msra.mxu0 0.0
    %3511 = vmatprep.subr.mxu0 0.0
    %3512 = vmatpush1.msra.mxu0 0.0
    %3513 = vmatprep.subr.mxu0 0.0
    %3514 = vmatpush1.msra.mxu0 0.0
    %3515 = vmatprep.subr.mxu0 0.0
    %3516 = vmatpush1.msra.mxu0 0.0
    %3517 = vmatprep.subr.mxu0 0.0
    %3518 = vmatpush1.msra.mxu0 0.0
    %3519 = vmatprep.subr.mxu0 0.0
    %3520 = vmatpush1.msra.mxu0 0.0
    %3521 = vmatprep.subr.mxu0 0.0
    %3522 = vmatpush1.msra.mxu0 0.0
    %3523 = vmatprep.subr.mxu0 0.0
    %3524 = vmatpush1.msra.mxu0 0.0
    %3525 = vmatprep.subr.mxu0 0.0
    %3526 = vmatpush1.msra.mxu0 0.0
    %3527 = vmatprep.subr.mxu0 0.0
    %3528 = vmatpush1.msra.mxu0 0.0
    %3529 = vmatprep.subr.mxu0 0.0
    %3530 = vmatpush1.msra.mxu0 0.0
    %3531 = vmatprep.subr.mxu0 0.0
    %3532 = vmatpush1.msra.mxu0 0.0
    %3533 = vmatprep.subr.mxu0 0.0
    %3534 = vmatpush1.msra.mxu0 0.0
    %3535 = vmatprep.subr.mxu0 0.0
    %3536 = vmatpush1.msra.mxu0 0.0
    %3537 = vmatprep.subr.mxu0 0.0
    %3538 = vmatpush1.msra.mxu0 0.0
    %3539 = vmatprep.subr.mxu0 0.0
    %3540 = vmatpush1.msra.mxu0 0.0
    %3541 = vmatprep.subr.mxu0 0.0
    %3542 = vmatpush1.msra.mxu0 0.0
    %3543 = vmatprep.subr.mxu0 0.0
    %3544 = vmatpush1.msra.mxu0 0.0
    %3545 = vmatprep.subr.mxu0 0.0
    %3546 = vmatpush1.msra.mxu0 0.0
    %3547 = vmatprep.subr.mxu0 0.0
    %3548 = vmatpush1.msra.mxu0 0.0
    %3549 = vmatprep.subr.mxu0 0.0
    %3550 = vmatpush1.msra.mxu0 0.0
    %3551 = vmatprep.subr.mxu0 0.0
    %3552 = vmatpush1.msra.mxu0 0.0
    %3553 = vmatprep.subr.mxu0 0.0
    %3554 = vmatpush1.msra.mxu0 0.0
    %3555 = vmatprep.mubr.f32.mxu0 0.0
    %3556 = vmatmul.mubr.f32.gmra.mrb[0].mxu0 %v3489
    %v3557 = vpop.f32.mrb[0].mxu0
    %v3558 = vadd.f32 0.0, %v3557
    %v3559 = vpop.f32.mrb[0].mxu0
    %3560 = vdwg.mxu0
    %v3563 = vcombine.low %v3155, %v3485
    %v3564 = vcombine.low %v3156, %v3558
    %v3565 = vld [vmem:[#allocation6] sm:$0xff]
    %v3566 = vld [vmem:[#allocation6 + $0x8] sm:$0xff]
    %v3567 = vld [vmem:[#allocation6 + $0x10] sm:$0xff]
    %v3568 = vld [vmem:[#allocation6 + $0x18] sm:$0xff]
    %v3569 = vld [vmem:[#allocation6 + $0x20] sm:$0xff]
    %v3570 = vld [vmem:[#allocation6 + $0x28] sm:$0xff]
    %v3571 = vld [vmem:[#allocation6 + $0x30] sm:$0xff]
    %v3572 = vld [vmem:[#allocation6 + $0x38] sm:$0xff]
    %v3573 = vld [vmem:[#allocation6 + $0x40] sm:$0xff]
    %v3574 = vld [vmem:[#allocation6 + $0x48] sm:$0xff]
    %v3575 = vld [vmem:[#allocation6 + $0x50] sm:$0xff]
    %v3576 = vld [vmem:[#allocation6 + $0x58] sm:$0xff]
    %v3577 = vld [vmem:[#allocation6 + $0x60] sm:$0xff]
    %v3578 = vld [vmem:[#allocation6 + $0x68] sm:$0xff]
    %v3579 = vld [vmem:[#allocation6 + $0x70] sm:$0xff]
    %v3580 = vld [vmem:[#allocation6 + $0x78] sm:$0xff]
    %v3581 = vld [vmem:[#allocation6 + $0x80] sm:$0xff]
    %v3582 = vld [vmem:[#allocation6 + $0x88] sm:$0xff]
    %v3583 = vld [vmem:[#allocation6 + $0x90] sm:$0xff]
    %v3584 = vld [vmem:[#allocation6 + $0x98] sm:$0xff]
    %v3585 = vld [vmem:[#allocation6 + $0xa0] sm:$0xff]
    %v3586 = vld [vmem:[#allocation6 + $0xa8] sm:$0xff]
    %v3587 = vld [vmem:[#allocation6 + $0xb0] sm:$0xff]
    %v3588 = vld [vmem:[#allocation6 + $0xb8] sm:$0xff]
    %v3589 = vld [vmem:[#allocation6 + $0xc0] sm:$0xff]
    %v3590 = vld [vmem:[#allocation6 + $0xc8] sm:$0xff]
    %v3591 = vld [vmem:[#allocation6 + $0xd0] sm:$0xff]
    %v3592 = vld [vmem:[#allocation6 + $0xd8] sm:$0xff]
    %v3593 = vld [vmem:[#allocation6 + $0xe0] sm:$0xff]
    %v3594 = vld [vmem:[#allocation6 + $0xe8] sm:$0xff]
    %v3595 = vld [vmem:[#allocation6 + $0xf0] sm:$0xff]
    %v3596 = vld [vmem:[#allocation6 + $0xf8] sm:$0xff]
    %v3597 = vld [vmem:[%s7] sm:$0x1]
    %v3599 = vlaneseq
    %v3600 = vshrl.u32 %v3599, 7
    %v3601 = vsub.s32 0, %v3600
    %v3602 = vrot.slane %v3597, %v3601
    %v3604 = vcombine.low %v3563, %v3564
    %v3605 = vcombine.high %v3563, %v3564
    %3608 = vmatprep.subr.mxu0 0.0
    %3609 = vmatpush1.msra.mxu0 %v3565
    %3610 = vmatprep.subr.mxu0 0.0
    %3611 = vmatpush1.msra.mxu0 %v3566
    %3612 = vmatprep.subr.mxu0 0.0
    %3613 = vmatpush1.msra.mxu0 %v3567
    %3614 = vmatprep.subr.mxu0 0.0
    %3615 = vmatpush1.msra.mxu0 %v3568
    %3616 = vmatprep.subr.mxu0 0.0
    %3617 = vmatpush1.msra.mxu0 %v3569
    %3618 = vmatprep.subr.mxu0 0.0
    %3619 = vmatpush1.msra.mxu0 %v3570
    %3620 = vmatprep.subr.mxu0 0.0
    %3621 = vmatpush1.msra.mxu0 %v3571
    %3622 = vmatprep.subr.mxu0 0.0
    %3623 = vmatpush1.msra.mxu0 %v3572
    %3624 = vmatprep.subr.mxu0 0.0
    %3625 = vmatpush1.msra.mxu0 %v3573
    %3626 = vmatprep.subr.mxu0 0.0
    %3627 = vmatpush1.msra.mxu0 %v3574
    %3628 = vmatprep.subr.mxu0 0.0
    %3629 = vmatpush1.msra.mxu0 %v3575
    %3630 = vmatprep.subr.mxu0 0.0
    %3631 = vmatpush1.msra.mxu0 %v3576
    %3632 = vmatprep.subr.mxu0 0.0
    %3633 = vmatpush1.msra.mxu0 %v3577
    %3634 = vmatprep.subr.mxu0 0.0
    %3635 = vmatpush1.msra.mxu0 %v3578
    %3636 = vmatprep.subr.mxu0 0.0
    %3637 = vmatpush1.msra.mxu0 %v3579
    %3638 = vmatprep.subr.mxu0 0.0
    %3639 = vmatpush1.msra.mxu0 %v3580
    %3640 = vmatprep.subr.mxu0 0.0
    %3641 = vmatpush1.msra.mxu0 %v3581
    %3642 = vmatprep.subr.mxu0 0.0
    %3643 = vmatpush1.msra.mxu0 %v3582
    %3644 = vmatprep.subr.mxu0 0.0
    %3645 = vmatpush1.msra.mxu0 %v3583
    %3646 = vmatprep.subr.mxu0 0.0
    %3647 = vmatpush1.msra.mxu0 %v3584
    %3648 = vmatprep.subr.mxu0 0.0
    %3649 = vmatpush1.msra.mxu0 %v3585
    %3650 = vmatprep.subr.mxu0 0.0
    %3651 = vmatpush1.msra.mxu0 %v3586
    %3652 = vmatprep.subr.mxu0 0.0
    %3653 = vmatpush1.msra.mxu0 %v3587
    %3654 = vmatprep.subr.mxu0 0.0
    %3655 = vmatpush1.msra.mxu0 %v3588
    %3656 = vmatprep.subr.mxu0 0.0
    %3657 = vmatpush1.msra.mxu0 %v3589
    %3658 = vmatprep.subr.mxu0 0.0
    %3659 = vmatpush1.msra.mxu0 %v3590
    %3660 = vmatprep.subr.mxu0 0.0
    %3661 = vmatpush1.msra.mxu0 %v3591
    %3662 = vmatprep.subr.mxu0 0.0
    %3663 = vmatpush1.msra.mxu0 %v3592
    %3664 = vmatprep.subr.mxu0 0.0
    %3665 = vmatpush1.msra.mxu0 %v3593
    %3666 = vmatprep.subr.mxu0 0.0
    %3667 = vmatpush1.msra.mxu0 %v3594
    %3668 = vmatprep.subr.mxu0 0.0
    %3669 = vmatpush1.msra.mxu0 %v3595
    %3670 = vmatprep.subr.mxu0 0.0
    %3671 = vmatpush1.msra.mxu0 %v3596
    %3672 = vmatprep.mubr.f32.mxu0 %v3605
    %3673 = vmatmul.mubr.f32.gmra.mrb[0].mxu0 %v3604
    %v3674 = vpop.f32.mrb[0].mxu0
    %v3675 = vadd.f32 %v3602, %v3674
    %v3676 = vpop.f32.mrb[0].mxu0
    %3677 = vdwg.mxu0
    %3678 = vst [vmem:[#allocation13] sm:$0xff] %v3675
    // Predicated region
    $region54: #{seq2seq_forward.1} parent=1 // pred_check
      _
    $region55: #{seq2seq_forward.1} parent=1 // pred_check_branch
      %3680 = sbr.rel (0) target = $region57
    $region56: #{seq2seq_forward.1} parent=1 // pred_region
      %s3682 = ssub.s32 128, 128
      %3683 = vsyncadd [#allocation10], %s3682
      %s3685 = sshll.u32 [#allocation13], 4
      %s3686 = int_to_ptr.vmem [resolvable:$true] %s3685
      %3688 = dma.vmem_to_hbm [thread:$0]  %s3686, 128, %s11, [#allocation10]
    $region57: #{seq2seq_forward.1} parent=1 // pred_fallthru
      _
    // Predicated region
    $region58: #{seq2seq_forward.1} parent=1 // pred_check
      _
    $region59: #{seq2seq_forward.1} parent=1 // pred_check_branch
      %3690 = sbr.rel (0) target = $region61
    $region60: #{seq2seq_forward.1} parent=1 // pred_region
      %3691 = dma.done [#allocation10], 128
    $region61: #{seq2seq_forward.1} parent=1 // pred_fallthru
      _
    %3692 = vsyncpa [#allocation9], 1
    %3693 = vsyncpa [#allocation12], 1
    %3694 = vsyncpa [#allocation10], 1
  %3695 = vsyncmov [#allocation7]
  %s3696 = vpop.sfrf %3695
  %p3697 = scmp.eq.s32.totalorder %s3696, 0
  %p3698 = pneg %p3697
  %3700 = shalt.err (%p3698)
  %s3701 = scalar_lea.sflag [#allocation7], 1
  %3702 = vsyncmov %s3701
  %s3703 = vpop.sfrf %3702
  %p3704 = scmp.eq.s32.totalorder %s3703, 0
  %p3705 = pneg %p3704
  %3707 = shalt.err (%p3705)
  %s3708 = scalar_lea.sflag [#allocation7], 2
  %3709 = vsyncmov %s3708
  %s3710 = vpop.sfrf %3709
  %p3711 = scmp.eq.s32.totalorder %s3710, 0
  %p3712 = pneg %p3711
  %3714 = shalt.err (%p3712)

</llo_original>
